<compile_context>
chip_gen: v7x
topology: tpu7x:2x2x1
jax: 0.10.0
libtpu: 0.0.40
codegen_flags: <defaults>
</compile_context>

<pallas_src>
import jax
import jax.numpy as jnp
from jax.experimental import pallas as pl
from jax.experimental.pallas import tpu as pltpu

FILTER_SIZES = (3, 4, 5)
NUM_FILTERS = (150, 150, 150)
NUM_CLASSES = 3

FS_MAX = max(FILTER_SIZES)                 # 5
TOTAL_FILTERS = sum(NUM_FILTERS)           # 450
NF_PAD = 512                               # 450 filters padded to lane-aligned width
NCLS_PAD = 128                             # 3 classes padded to one full lane group
HALO = 16                                  # halo rows (>= FS_MAX - 1, bf16-tile aligned)
_NEG_BIG = -1e30                           # pad-class logit bias: exp underflows to 0


def _round_up(x, m):
    return ((x + m - 1) // m) * m


# ----------------------------------------------------------------------------
# Kernel
# ----------------------------------------------------------------------------
def _make_kernel(s_chunk):
    """Kernel closure over the static in-kernel time-chunk length."""

    def kernel(emb_ref, wc_ref, bc_ref, tmask_ref, wh_ref, bh_ref, wf_ref, bf_ref,
               out_ref):
        TB = emb_ref.shape[0]
        E = emb_ref.shape[2]
        n_chunks = tmask_ref.shape[0] // s_chunk   # static

        def chunk_body(c, pooled):
            base = pl.multiple_of(c * s_chunk, 8)
            # (TB, s_chunk + HALO, E) bf16 window; zero-padded tail rows only
            # feed time positions that tmask zeroes out.
            halo = emb_ref[:, pl.ds(base, s_chunk + HALO), :]

            # Per-tap accumulated conv matmuls (no im2col materialization).
            conv = jnp.zeros((TB * s_chunk, NF_PAD), jnp.float32)
            for k in range(FS_MAX):
                tap = halo[:, k:k + s_chunk, :].reshape(TB * s_chunk, E)
                conv = conv + jnp.dot(tap, wc_ref[k],
                                      preferred_element_type=jnp.float32)

            conv = conv.reshape(TB, s_chunk, NF_PAD)
            conv = jnp.maximum(conv + bc_ref[...][None], 0.0)          # bias + ReLU
            conv = conv * tmask_ref[pl.ds(base, s_chunk), :][None]     # invalid tail -> 0
            return jnp.maximum(pooled, jnp.max(conv, axis=1))          # running max-pool

        pooled = jax.lax.fori_loop(0, n_chunks, chunk_body,
                                   jnp.zeros((TB, NF_PAD), jnp.float32))

        # Highway layer (padded lanes remain exactly zero by construction).
        hw = jnp.dot(pooled.astype(jnp.bfloat16), wh_ref[...],
                     preferred_element_type=jnp.float32) + bh_ref[...]
        sig = pl.reciprocal(1.0 + jnp.exp(-hw), approx=True)           # EUP, not VPU divide
        pred = sig * jnp.maximum(hw, 0.0) + (1.0 - sig) * pooled

        # TODO(synk): dropout treated as inference-mode identity (no in-kernel RNG mask).
        logits = jnp.dot(pred.astype(jnp.bfloat16), wf_ref[...],
                         preferred_element_type=jnp.float32) + bf_ref[...]

        # log_softmax over the padded class axis; pad logits are ~-1e30 -> exp == 0.
        m = jnp.max(logits, axis=1, keepdims=True)
        z = logits - m
        lse = jnp.log(jnp.sum(jnp.exp(z), axis=1, keepdims=True))
        out_ref[...] = z - lse

    return kernel


# ----------------------------------------------------------------------------
# Parameter packing / tiling heuristics
# ----------------------------------------------------------------------------
def _prepare_packed_params(params, seq_len, s_conv):
    """Pack the three conv filters per-tap (bf16) and pad dense layers lane-aligned."""
    emb_dim = params['emb'].shape[1]
    wc = jnp.zeros((FS_MAX, emb_dim, NF_PAD), jnp.float32)
    bc = jnp.zeros((1, NF_PAD), jnp.float32)
    valid = jnp.zeros((NF_PAD,), jnp.int32)
    col = 0
    for fs, nf in zip(FILTER_SIZES, NUM_FILTERS):
        w = params[f'w{fs}'].astype(jnp.float32)               # (fs, E, nf)
        wc = wc.at[:fs, :, col:col + nf].set(w)
        bc = bc.at[:, col:col + nf].set(params[f'b{fs}'].astype(jnp.float32))
        valid = valid.at[col:col + nf].set(seq_len - fs + 1)
        col += nf
    tmask = (jnp.arange(s_conv, dtype=jnp.int32)[:, None]
             < valid[None, :]).astype(jnp.float32)             # (s_conv, NF_PAD)

    wh = jnp.zeros((NF_PAD, NF_PAD), jnp.float32)
    wh = wh.at[:TOTAL_FILTERS, :TOTAL_FILTERS].set(params['wh'].astype(jnp.float32))
    bh = jnp.zeros((1, NF_PAD), jnp.float32).at[:, :TOTAL_FILTERS].set(
        params['bh'].astype(jnp.float32))
    wf = jnp.zeros((NF_PAD, NCLS_PAD), jnp.float32)
    wf = wf.at[:TOTAL_FILTERS, :NUM_CLASSES].set(params['wf'].astype(jnp.float32))
    bf = jnp.full((1, NCLS_PAD), _NEG_BIG, jnp.float32).at[:, :NUM_CLASSES].set(
        params['bf'].astype(jnp.float32))
    return (wc.astype(jnp.bfloat16), bc, tmask,
            wh.astype(jnp.bfloat16), bh, wf.astype(jnp.bfloat16), bf)


def _vmem_limit_bytes():
    """Generation-aware scoped-VMEM limit with headroom (v7x 64 MiB vs v5e/v6e 128 MiB)."""
    cap = None
    try:
        cap = getattr(pltpu.get_tpu_info(), "vmem_capacity_bytes", None)
    except Exception:
        cap = None
    if not cap:
        cap = 64 * 1024 * 1024                      # conservative fallback: v7x per-TC VMEM
    return int(max(16 * 1024 * 1024,
                   min(cap - 16 * 1024 * 1024, 100 * 1024 * 1024)))


def _choose_tiles(B, S, E, vmem_limit, batch_tile, seq_chunk):
    """Pick (s_chunk, s_conv, s_emb, TB) so the per-step working set fits the budget."""
    # Resident (single-buffered) packed weights — rough upper bound in bytes.
    weight_bytes = ((FS_MAX * E * NF_PAD + NF_PAD * NF_PAD + NF_PAD * NCLS_PAD) * 2
                    + _round_up(S, 16) * NF_PAD * 4
                    + (2 * NF_PAD + NCLS_PAD) * 4)

    s_chunk = max(16, min(_round_up(S, 16), (max(seq_chunk, 16) // 16) * 16))
    while True:
        n_chunks = -(-S // s_chunk)
        s_conv = n_chunks * s_chunk
        s_emb = s_conv + HALO
        row_bytes = (2 * s_emb * E * 2               # double-buffered emb block (bf16)
                     + (s_chunk + HALO) * E * 2      # halo window
                     + 2 * s_chunk * E * 2           # tap-shift temporaries
                     + 2 * s_chunk * NF_PAD * 4      # conv chunk accumulator (+ temp)
                     + 8 * NF_PAD * 4                # pooled / highway / fc temporaries
                     + 2 * NCLS_PAD * 4)             # double-buffered output block
        budget = vmem_limit - weight_bytes - (4 << 20)
        tb_cap = max(1, budget // row_bytes)
        if tb_cap >= 8 or s_chunk <= 16:
            break
        # Shrink the in-kernel time chunk instead of blowing the VMEM budget.
        s_chunk = max(16, ((s_chunk // 2) // 16) * 16)

    TB = min(B, batch_tile, tb_cap)
    if B >= 16:
        # Keep >= 2 grid steps so v7x's two TensorCores both get work.
        TB = min(TB, max(8, ((-(-B // 2)) // 8) * 8))
    if TB < B:
        # Output block needs TB % 8 == 0 whenever it does not span the full batch.
        # (This only exceeds tb_cap when tb_cap < 8, after s_chunk is already minimal.)
        TB = min(max(8, (TB // 8) * 8), B)
    return s_chunk, s_conv, s_emb, TB


# ----------------------------------------------------------------------------
# Forward wrapper
# ----------------------------------------------------------------------------
def discriminator_forward(inp, params, *, batch_tile=256, seq_chunk=128):
    """inp: (B, S, 2) int32 — [:, :, 0] tokens, [:, :, 1] mask. Returns (log_probs, None, None)."""
    tokens = inp[:, :, 0]
    mask = inp[:, :, 1]
    # Fuse the mask multiply into the gather (XLA glue); keep emb bf16 for the MXU.
    emb = (jnp.take(params['emb'].astype(jnp.bfloat16), tokens, axis=0)
           * mask.astype(jnp.bfloat16)[:, :, None])             # (B, S, E) bf16
    B, S, E = emb.shape

    vmem_limit = _vmem_limit_bytes()
    s_chunk, s_conv, s_emb, TB = _choose_tiles(B, S, E, vmem_limit, batch_tile, seq_chunk)

    emb = jnp.pad(emb, ((0, 0), (0, s_emb - S), (0, 0)))        # zero halo/tail rows
    weights = _prepare_packed_params(params, S, s_conv)         # wc, bc, tmask, wh, bh, wf, bf

    grid = (pl.cdiv(B, TB),)
    kernel = _make_kernel(s_chunk)

    def _resident_spec(arr, single_buffer):
        nd = arr.ndim
        idx = lambda i, _nd=nd: (0,) * _nd
        if single_buffer:
            # Constant block index -> second pipeline buffer is pure VMEM waste.
            return pl.BlockSpec(arr.shape, idx, pipeline_mode=pl.Buffered(1))
        return pl.BlockSpec(arr.shape, idx)

    def _run(single_buffer):
        in_specs = ([pl.BlockSpec((TB, s_emb, E), lambda i: (i, 0, 0))]
                    + [_resident_spec(a, single_buffer) for a in weights])
        return pl.pallas_call(
            kernel,
            out_shape=jax.ShapeDtypeStruct((B, NCLS_PAD), jnp.float32),
            grid=grid,
            in_specs=in_specs,
            out_specs=pl.BlockSpec((TB, NCLS_PAD), lambda i: (i, 0)),
            compiler_params=pltpu.CompilerParams(
                dimension_semantics=("parallel",),
                vmem_limit_bytes=vmem_limit),
        )(emb, *weights)

    try:
        out = _run(True)          # single-buffered resident weights
    except Exception:             # fallback for jax versions without Buffered(1) support
        out = _run(False)

    return out[:, :NUM_CLASSES], None, None


# ----------------------------------------------------------------------------
# Pure-JAX reference & init (for the self-test)
# ----------------------------------------------------------------------------
def _reference_forward(inp, params):
    """Pure-JAX f32 reference mirroring the PyTorch forward (eval-mode dropout)."""
    x = inp[:, :, 0]
    mask = inp[:, :, 1].astype(jnp.float32)
    emb = jnp.take(params['emb'], x, axis=0) * mask[:, :, None]
    B, S, E = emb.shape
    pools = []
    for fs in FILTER_SIZES:
        w, b = params[f'w{fs}'], params[f'b{fs}']
        valid = S - fs + 1
        acc = jnp.zeros((B, valid, w.shape[-1]), jnp.float32)
        for k in range(fs):
            acc = acc + jnp.einsum('bte,ef->btf', emb[:, k:k + valid, :], w[k])
        acc = jax.nn.relu(acc + b[None, :, :])
        pools.append(jnp.max(acc, axis=1))
    pred = jnp.concatenate(pools, axis=1)
    hw = pred @ params['wh'] + params['bh']
    sig = jax.nn.sigmoid(hw)
    pred = sig * jax.nn.relu(hw) + (1.0 - sig) * pred
    logits = pred @ params['wf'] + params['bf']
    return jax.nn.log_softmax(logits, axis=1)


def init_params(key, vocab_size, emb_dim):
    keys = jax.random.split(key, 12)
    params = {
        'emb': jax.random.normal(keys[0], (vocab_size, emb_dim), jnp.float32) * 0.1,
        'wh': jax.random.normal(keys[7], (TOTAL_FILTERS, TOTAL_FILTERS), jnp.float32) * 0.05,
        'bh': jax.random.normal(keys[8], (1, TOTAL_FILTERS), jnp.float32) * 0.05,
        'wf': jax.random.normal(keys[9], (TOTAL_FILTERS, NUM_CLASSES), jnp.float32) * 0.05,
        'bf': jax.random.normal(keys[10], (1, NUM_CLASSES), jnp.float32) * 0.05,
    }
    for i, (fs, nf) in enumerate(zip(FILTER_SIZES, NUM_FILTERS)):
        # PyTorch Conv2d weight (nf, 1, fs, E) -> kernel layout (fs, E, nf).
        params[f'w{fs}'] = jax.random.normal(keys[1 + 2 * i], (fs, emb_dim, nf),
                                             jnp.float32) * 0.1
        params[f'b{fs}'] = jax.random.normal(keys[2 + 2 * i], (1, nf),
                                             jnp.float32) * 0.1
    return params


if __name__ == "__main__":
    B, S, VOCAB, EMB = 2, 16, 50, 32

    key = jax.random.PRNGKey(0)
    k_tok, k_mask, k_par = jax.random.split(key, 3)

    tokens = jax.random.randint(k_tok, (B, S), 0, VOCAB, dtype=jnp.int32)
    mask = jax.random.randint(k_mask, (B, S), 0, 2, dtype=jnp.int32)
    inp = jnp.stack([tokens, mask], axis=2)                    # (B, S, 2)

    params = init_params(k_par, VOCAB, EMB)

    out, _, _ = discriminator_forward(inp, params)
    out = jax.block_until_ready(out)

    ref = _reference_forward(inp, params)
    assert out.shape == (B, NUM_CLASSES)
    max_err = float(jnp.max(jnp.abs(out - ref)))
    assert max_err < 5e-2, f"max abs err vs f32 reference: {max_err}"

    print("KERNEL_OK")
</pallas_src>

<mosaic_0001>
module attributes {stable_mosaic.version = 11 : i64} {
  func.func @kernel(%arg0: i32, %arg1: memref<2x32x32xbf16, #tpu.memory_space<vmem>>, %arg2: memref<5x32x512xbf16, #tpu.memory_space<vmem>>, %arg3: memref<1x512xf32, #tpu.memory_space<vmem>>, %arg4: memref<16x512xf32, #tpu.memory_space<vmem>>, %arg5: memref<512x512xbf16, #tpu.memory_space<vmem>>, %arg6: memref<1x512xf32, #tpu.memory_space<vmem>>, %arg7: memref<512x128xbf16, #tpu.memory_space<vmem>>, %arg8: memref<1x128xf32, #tpu.memory_space<vmem>>, %arg9: memref<2x128xf32, #tpu.memory_space<vmem>>) attributes {dimension_semantics = [#tpu.dimension_semantics<parallel>], iteration_bounds = array<i64: 1>, scalar_prefetch = 0 : i64, scratch_operands = 0 : i64, tpu.core_type = #tpu.core_type<tc>, window_params = [{transform_indices = @transform_0, window_bounds = array<i64: 2, 32, 32>}, {pipeline_mode = #tpu.pipeline_mode<synchronous>, transform_indices = @transform_1, window_bounds = array<i64: 5, 32, 512>}, {pipeline_mode = #tpu.pipeline_mode<synchronous>, transform_indices = @transform_2, window_bounds = array<i64: 1, 512>}, {pipeline_mode = #tpu.pipeline_mode<synchronous>, transform_indices = @transform_3, window_bounds = array<i64: 16, 512>}, {pipeline_mode = #tpu.pipeline_mode<synchronous>, transform_indices = @transform_4, window_bounds = array<i64: 512, 512>}, {pipeline_mode = #tpu.pipeline_mode<synchronous>, transform_indices = @transform_5, window_bounds = array<i64: 1, 512>}, {pipeline_mode = #tpu.pipeline_mode<synchronous>, transform_indices = @transform_6, window_bounds = array<i64: 512, 128>}, {pipeline_mode = #tpu.pipeline_mode<synchronous>, transform_indices = @transform_7, window_bounds = array<i64: 1, 128>}, {transform_indices = @transform_8, window_bounds = array<i64: 2, 128>}]} {
    %cst = arith.constant 0.000000e+00 : f32
    %0 = vector.broadcast %cst : f32 to vector<2x512xf32>
    %c0_i32 = arith.constant 0 : i32
    %c16_i32 = arith.constant 16 : i32
    %1 = arith.muli %c0_i32, %c16_i32 : i32
    %2 = tpu.assume_multiple %1, 8 : i32
    %c0 = arith.constant 0 : index
    %3 = arith.index_cast %2 : i32 to index
    %c0_0 = arith.constant 0 : index
    %4 = vector.load %arg1[%c0, %3, %c0_0] : memref<2x32x32xbf16, #tpu.memory_space<vmem>>, vector<2x32x32xbf16>
    %cst_1 = arith.constant 0.000000e+00 : f32
    %5 = vector.broadcast %cst_1 : f32 to vector<32x512xf32>
    %6 = vector.extract_strided_slice %4 {offsets = [0, 0, 0], sizes = [2, 16, 32], strides = [1, 1, 1]} : vector<2x32x32xbf16> to vector<2x16x32xbf16>
    %7 = vector.shape_cast %6 : vector<2x16x32xbf16> to vector<32x32xbf16>
    %c0_2 = arith.constant 0 : index
    %c0_3 = arith.constant 0 : index
    %c0_4 = arith.constant 0 : index
    %8 = vector.load %arg2[%c0_2, %c0_3, %c0_4] : memref<5x32x512xbf16, #tpu.memory_space<vmem>>, vector<1x32x512xbf16>
    %9 = vector.shape_cast %8 : vector<1x32x512xbf16> to vector<32x512xbf16>
    %cst_5 = arith.constant dense<0.000000e+00> : vector<32x512xf32>
    %10 = tpu.matmul %7, %9, %cst_5 {dimension_numbers = #tpu.dot_dimension_numbers<[1], [0], [0], [1], [0, 0, 1, 1], [], []>} : vector<32x32xbf16>, vector<32x512xbf16>, vector<32x512xf32> -> vector<32x512xf32>
    %11 = arith.addf %5, %10 : vector<32x512xf32>
    %12 = vector.extract_strided_slice %4 {offsets = [0, 1, 0], sizes = [2, 16, 32], strides = [1, 1, 1]} : vector<2x32x32xbf16> to vector<2x16x32xbf16>
    %13 = vector.shape_cast %12 : vector<2x16x32xbf16> to vector<32x32xbf16>
    %c1 = arith.constant 1 : index
    %c0_6 = arith.constant 0 : index
    %c0_7 = arith.constant 0 : index
    %14 = vector.load %arg2[%c1, %c0_6, %c0_7] : memref<5x32x512xbf16, #tpu.memory_space<vmem>>, vector<1x32x512xbf16>
    %15 = vector.shape_cast %14 : vector<1x32x512xbf16> to vector<32x512xbf16>
    %cst_8 = arith.constant dense<0.000000e+00> : vector<32x512xf32>
    %16 = tpu.matmul %13, %15, %cst_8 {dimension_numbers = #tpu.dot_dimension_numbers<[1], [0], [0], [1], [0, 0, 1, 1], [], []>} : vector<32x32xbf16>, vector<32x512xbf16>, vector<32x512xf32> -> vector<32x512xf32>
    %17 = arith.addf %11, %16 : vector<32x512xf32>
    %18 = vector.extract_strided_slice %4 {offsets = [0, 2, 0], sizes = [2, 16, 32], strides = [1, 1, 1]} : vector<2x32x32xbf16> to vector<2x16x32xbf16>
    %19 = vector.shape_cast %18 : vector<2x16x32xbf16> to vector<32x32xbf16>
    %c2 = arith.constant 2 : index
    %c0_9 = arith.constant 0 : index
    %c0_10 = arith.constant 0 : index
    %20 = vector.load %arg2[%c2, %c0_9, %c0_10] : memref<5x32x512xbf16, #tpu.memory_space<vmem>>, vector<1x32x512xbf16>
    %21 = vector.shape_cast %20 : vector<1x32x512xbf16> to vector<32x512xbf16>
    %cst_11 = arith.constant dense<0.000000e+00> : vector<32x512xf32>
    %22 = tpu.matmul %19, %21, %cst_11 {dimension_numbers = #tpu.dot_dimension_numbers<[1], [0], [0], [1], [0, 0, 1, 1], [], []>} : vector<32x32xbf16>, vector<32x512xbf16>, vector<32x512xf32> -> vector<32x512xf32>
    %23 = arith.addf %17, %22 : vector<32x512xf32>
    %24 = vector.extract_strided_slice %4 {offsets = [0, 3, 0], sizes = [2, 16, 32], strides = [1, 1, 1]} : vector<2x32x32xbf16> to vector<2x16x32xbf16>
    %25 = vector.shape_cast %24 : vector<2x16x32xbf16> to vector<32x32xbf16>
    %c3 = arith.constant 3 : index
    %c0_12 = arith.constant 0 : index
    %c0_13 = arith.constant 0 : index
    %26 = vector.load %arg2[%c3, %c0_12, %c0_13] : memref<5x32x512xbf16, #tpu.memory_space<vmem>>, vector<1x32x512xbf16>
    %27 = vector.shape_cast %26 : vector<1x32x512xbf16> to vector<32x512xbf16>
    %cst_14 = arith.constant dense<0.000000e+00> : vector<32x512xf32>
    %28 = tpu.matmul %25, %27, %cst_14 {dimension_numbers = #tpu.dot_dimension_numbers<[1], [0], [0], [1], [0, 0, 1, 1], [], []>} : vector<32x32xbf16>, vector<32x512xbf16>, vector<32x512xf32> -> vector<32x512xf32>
    %29 = arith.addf %23, %28 : vector<32x512xf32>
    %30 = vector.extract_strided_slice %4 {offsets = [0, 4, 0], sizes = [2, 16, 32], strides = [1, 1, 1]} : vector<2x32x32xbf16> to vector<2x16x32xbf16>
    %31 = vector.shape_cast %30 : vector<2x16x32xbf16> to vector<32x32xbf16>
    %c4 = arith.constant 4 : index
    %c0_15 = arith.constant 0 : index
    %c0_16 = arith.constant 0 : index
    %32 = vector.load %arg2[%c4, %c0_15, %c0_16] : memref<5x32x512xbf16, #tpu.memory_space<vmem>>, vector<1x32x512xbf16>
    %33 = vector.shape_cast %32 : vector<1x32x512xbf16> to vector<32x512xbf16>
    %cst_17 = arith.constant dense<0.000000e+00> : vector<32x512xf32>
    %34 = tpu.matmul %31, %33, %cst_17 {dimension_numbers = #tpu.dot_dimension_numbers<[1], [0], [0], [1], [0, 0, 1, 1], [], []>} : vector<32x32xbf16>, vector<32x512xbf16>, vector<32x512xf32> -> vector<32x512xf32>
    %35 = arith.addf %29, %34 : vector<32x512xf32>
    %36 = vector.shape_cast %35 : vector<32x512xf32> to vector<2x16x512xf32>
    %c0_18 = arith.constant 0 : index
    %c0_19 = arith.constant 0 : index
    %37 = vector.load %arg3[%c0_18, %c0_19] : memref<1x512xf32, #tpu.memory_space<vmem>>, vector<1x512xf32>
    %38 = vector.shape_cast %37 : vector<1x512xf32> to vector<1x1x512xf32>
    %39 = vector.broadcast %38 : vector<1x1x512xf32> to vector<2x16x512xf32>
    %40 = arith.addf %36, %39 : vector<2x16x512xf32>
    %cst_20 = arith.constant 0.000000e+00 : f32
    %41 = vector.broadcast %cst_20 : f32 to vector<2x16x512xf32>
    %42 = arith.maximumf %40, %41 : vector<2x16x512xf32>
    %43 = arith.index_cast %2 : i32 to index
    %c0_21 = arith.constant 0 : index
    %44 = vector.load %arg4[%43, %c0_21] : memref<16x512xf32, #tpu.memory_space<vmem>>, vector<16x512xf32>
    %45 = vector.shape_cast %44 : vector<16x512xf32> to vector<1x16x512xf32>
    %46 = vector.broadcast %45 : vector<1x16x512xf32> to vector<2x16x512xf32>
    %47 = arith.mulf %42, %46 : vector<2x16x512xf32>
    %cst_22 = arith.constant dense<0xFF800000> : vector<2x512xf32>
    %48 = vector.multi_reduction <maximumf>, %47, %cst_22 [1] : vector<2x16x512xf32> to vector<2x512xf32>
    %49 = arith.maximumf %0, %48 : vector<2x512xf32>
    %c1_i32 = arith.constant 1 : i32
    %50 = arith.truncf %49 : vector<2x512xf32> to vector<2x512xbf16>
    %c0_23 = arith.constant 0 : index
    %c0_24 = arith.constant 0 : index
    %51 = vector.load %arg5[%c0_23, %c0_24] : memref<512x512xbf16, #tpu.memory_space<vmem>>, vector<512x512xbf16>
    %cst_25 = arith.constant dense<0.000000e+00> : vector<2x512xf32>
    %52 = tpu.matmul %50, %51, %cst_25 {dimension_numbers = #tpu.dot_dimension_numbers<[1], [0], [0], [1], [0, 0, 1, 1], [], []>} : vector<2x512xbf16>, vector<512x512xbf16>, vector<2x512xf32> -> vector<2x512xf32>
    %c0_26 = arith.constant 0 : index
    %c0_27 = arith.constant 0 : index
    %53 = vector.load %arg6[%c0_26, %c0_27] : memref<1x512xf32, #tpu.memory_space<vmem>>, vector<1x512xf32>
    %54 = vector.broadcast %53 : vector<1x512xf32> to vector<2x512xf32>
    %55 = arith.addf %52, %54 : vector<2x512xf32>
    %cst_28 = arith.constant 0.000000e+00 : f32
    %56 = vector.broadcast %cst_28 : f32 to vector<2x512xf32>
    %57 = arith.subf %56, %55 : vector<2x512xf32>
    %58 = math.exp %57 : vector<2x512xf32>
    %cst_29 = arith.constant 1.000000e+00 : f32
    %59 = vector.broadcast %cst_29 : f32 to vector<2x512xf32>
    %60 = arith.addf %59, %58 : vector<2x512xf32>
    %61 = tpu.reciprocal %60 {approx = true} : vector<2x512xf32> -> vector<2x512xf32>
    %cst_30 = arith.constant 0.000000e+00 : f32
    %62 = vector.broadcast %cst_30 : f32 to vector<2x512xf32>
    %63 = arith.maximumf %55, %62 : vector<2x512xf32>
    %64 = arith.mulf %61, %63 : vector<2x512xf32>
    %cst_31 = arith.constant 1.000000e+00 : f32
    %65 = vector.broadcast %cst_31 : f32 to vector<2x512xf32>
    %66 = arith.subf %65, %61 : vector<2x512xf32>
    %67 = arith.mulf %66, %49 : vector<2x512xf32>
    %68 = arith.addf %64, %67 : vector<2x512xf32>
    %69 = arith.truncf %68 : vector<2x512xf32> to vector<2x512xbf16>
    %c0_32 = arith.constant 0 : index
    %c0_33 = arith.constant 0 : index
    %70 = vector.load %arg7[%c0_32, %c0_33] : memref<512x128xbf16, #tpu.memory_space<vmem>>, vector<512x128xbf16>
    %cst_34 = arith.constant dense<0.000000e+00> : vector<2x128xf32>
    %71 = tpu.matmul %69, %70, %cst_34 {dimension_numbers = #tpu.dot_dimension_numbers<[1], [0], [0], [1], [0, 0, 1, 1], [], []>} : vector<2x512xbf16>, vector<512x128xbf16>, vector<2x128xf32> -> vector<2x128xf32>
    %c0_35 = arith.constant 0 : index
    %c0_36 = arith.constant 0 : index
    %72 = vector.load %arg8[%c0_35, %c0_36] : memref<1x128xf32, #tpu.memory_space<vmem>>, vector<1x128xf32>
    %73 = vector.broadcast %72 : vector<1x128xf32> to vector<2x128xf32>
    %74 = arith.addf %71, %73 : vector<2x128xf32>
    %cst_37 = arith.constant dense<0xFF800000> : vector<2xf32>
    %75 = vector.multi_reduction <maximumf>, %74, %cst_37 [1] : vector<2x128xf32> to vector<2xf32>
    %76 = vector.shape_cast %75 : vector<2xf32> to vector<2x1xf32>
    %77 = vector.broadcast %76 : vector<2x1xf32> to vector<2x128xf32>
    %78 = arith.subf %74, %77 : vector<2x128xf32>
    %79 = math.exp %78 : vector<2x128xf32>
    %cst_38 = arith.constant dense<0.000000e+00> : vector<2xf32>
    %80 = vector.multi_reduction <add>, %79, %cst_38 [1] : vector<2x128xf32> to vector<2xf32>
    %81 = vector.shape_cast %80 : vector<2xf32> to vector<2x1xf32>
    %82 = math.log %81 : vector<2x1xf32>
    %83 = vector.broadcast %82 : vector<2x1xf32> to vector<2x128xf32>
    %84 = arith.subf %78, %83 : vector<2x128xf32>
    %c0_39 = arith.constant 0 : index
    %c0_40 = arith.constant 0 : index
    %85 = vector.load %arg9[%c0_39, %c0_40] : memref<2x128xf32, #tpu.memory_space<vmem>>, vector<2x128xf32>
    tpu.vector_store %arg9[%c0_39, %c0_40], %84 {strides = array<i32>} : memref<2x128xf32, #tpu.memory_space<vmem>>, vector<2x128xf32>,
    return
  }
  func.func @transform_0(%arg0: i32) -> (i32, i32, i32) {
    %c0_i32 = arith.constant 0 : i32
    %c0_i32_0 = arith.constant 0 : i32
    %c0_i32_1 = arith.constant 0 : i32
    return %arg0, %c0_i32, %c0_i32_0 : i32, i32, i32
  }
  func.func @transform_1(%arg0: i32) -> (i32, i32, i32) {
    %c0_i32 = arith.constant 0 : i32
    %c0_i32_0 = arith.constant 0 : i32
    %c0_i32_1 = arith.constant 0 : i32
    %c0_i32_2 = arith.constant 0 : i32
    return %c0_i32, %c0_i32_0, %c0_i32_1 : i32, i32, i32
  }
  func.func @transform_2(%arg0: i32) -> (i32, i32) {
    %c0_i32 = arith.constant 0 : i32
    %c0_i32_0 = arith.constant 0 : i32
    %c0_i32_1 = arith.constant 0 : i32
    return %c0_i32, %c0_i32_0 : i32, i32
  }
  func.func @transform_3(%arg0: i32) -> (i32, i32) {
    %c0_i32 = arith.constant 0 : i32
    %c0_i32_0 = arith.constant 0 : i32
    %c0_i32_1 = arith.constant 0 : i32
    return %c0_i32, %c0_i32_0 : i32, i32
  }
  func.func @transform_4(%arg0: i32) -> (i32, i32) {
    %c0_i32 = arith.constant 0 : i32
    %c0_i32_0 = arith.constant 0 : i32
    %c0_i32_1 = arith.constant 0 : i32
    return %c0_i32, %c0_i32_0 : i32, i32
  }
  func.func @transform_5(%arg0: i32) -> (i32, i32) {
    %c0_i32 = arith.constant 0 : i32
    %c0_i32_0 = arith.constant 0 : i32
    %c0_i32_1 = arith.constant 0 : i32
    return %c0_i32, %c0_i32_0 : i32, i32
  }
  func.func @transform_6(%arg0: i32) -> (i32, i32) {
    %c0_i32 = arith.constant 0 : i32
    %c0_i32_0 = arith.constant 0 : i32
    %c0_i32_1 = arith.constant 0 : i32
    return %c0_i32, %c0_i32_0 : i32, i32
  }
  func.func @transform_7(%arg0: i32) -> (i32, i32) {
    %c0_i32 = arith.constant 0 : i32
    %c0_i32_0 = arith.constant 0 : i32
    %c0_i32_1 = arith.constant 0 : i32
    return %c0_i32, %c0_i32_0 : i32, i32
  }
  func.func @transform_8(%arg0: i32) -> (i32, i32) {
    %c0_i32 = arith.constant 0 : i32
    %c0_i32_0 = arith.constant 0 : i32
    return %arg0, %c0_i32 : i32, i32
  }
}

module attributes {stable_mosaic.version = 11 : i64} {
  func.func @kernel(%arg0: i32, %arg1: memref<2x32x32xbf16, #tpu.memory_space<vmem>>, %arg2: memref<5x32x512xbf16, #tpu.memory_space<vmem>>, %arg3: memref<1x512xf32, #tpu.memory_space<vmem>>, %arg4: memref<16x512xf32, #tpu.memory_space<vmem>>, %arg5: memref<512x512xbf16, #tpu.memory_space<vmem>>, %arg6: memref<1x512xf32, #tpu.memory_space<vmem>>, %arg7: memref<512x128xbf16, #tpu.memory_space<vmem>>, %arg8: memref<1x128xf32, #tpu.memory_space<vmem>>, %arg9: memref<2x128xf32, #tpu.memory_space<vmem>>) attributes {dimension_semantics = [#tpu.dimension_semantics<parallel>], iteration_bounds = array<i64: 1>, scalar_prefetch = 0 : i64, scratch_operands = 0 : i64, tpu.core_type = #tpu.core_type<tc>, window_params = [{transform_indices = @transform_0, window_bounds = array<i64: 2, 32, 32>}, {pipeline_mode = #tpu.pipeline_mode<synchronous>, transform_indices = @transform_1, window_bounds = array<i64: 5, 32, 512>}, {pipeline_mode = #tpu.pipeline_mode<synchronous>, transform_indices = @transform_2, window_bounds = array<i64: 1, 512>}, {pipeline_mode = #tpu.pipeline_mode<synchronous>, transform_indices = @transform_3, window_bounds = array<i64: 16, 512>}, {pipeline_mode = #tpu.pipeline_mode<synchronous>, transform_indices = @transform_4, window_bounds = array<i64: 512, 512>}, {pipeline_mode = #tpu.pipeline_mode<synchronous>, transform_indices = @transform_5, window_bounds = array<i64: 1, 512>}, {pipeline_mode = #tpu.pipeline_mode<synchronous>, transform_indices = @transform_6, window_bounds = array<i64: 512, 128>}, {pipeline_mode = #tpu.pipeline_mode<synchronous>, transform_indices = @transform_7, window_bounds = array<i64: 1, 128>}, {transform_indices = @transform_8, window_bounds = array<i64: 2, 128>}]} {
    %cst = arith.constant 0.000000e+00 : f32
    %0 = vector.broadcast %cst : f32 to vector<2x512xf32>
    %c0_i32 = arith.constant 0 : i32
    %c16_i32 = arith.constant 16 : i32
    %1 = arith.muli %c0_i32, %c16_i32 : i32
    %2 = tpu.assume_multiple %1, 8 : i32
    %c0 = arith.constant 0 : index
    %3 = arith.index_cast %2 : i32 to index
    %c0_0 = arith.constant 0 : index
    %4 = vector.load %arg1[%c0, %3, %c0_0] : memref<2x32x32xbf16, #tpu.memory_space<vmem>>, vector<2x32x32xbf16>
    %cst_1 = arith.constant 0.000000e+00 : f32
    %5 = vector.broadcast %cst_1 : f32 to vector<32x512xf32>
    %6 = vector.extract_strided_slice %4 {offsets = [0, 0, 0], sizes = [2, 16, 32], strides = [1, 1, 1]} : vector<2x32x32xbf16> to vector<2x16x32xbf16>
    %7 = vector.shape_cast %6 : vector<2x16x32xbf16> to vector<32x32xbf16>
    %c0_2 = arith.constant 0 : index
    %c0_3 = arith.constant 0 : index
    %c0_4 = arith.constant 0 : index
    %8 = vector.load %arg2[%c0_2, %c0_3, %c0_4] : memref<5x32x512xbf16, #tpu.memory_space<vmem>>, vector<1x32x512xbf16>
    %9 = vector.shape_cast %8 : vector<1x32x512xbf16> to vector<32x512xbf16>
    %cst_5 = arith.constant dense<0.000000e+00> : vector<32x512xf32>
    %10 = tpu.matmul %7, %9, %cst_5 {dimension_numbers = #tpu.dot_dimension_numbers<[1], [0], [0], [1], [0, 0, 1, 1], [], []>} : vector<32x32xbf16>, vector<32x512xbf16>, vector<32x512xf32> -> vector<32x512xf32>
    %11 = arith.addf %5, %10 : vector<32x512xf32>
    %12 = vector.extract_strided_slice %4 {offsets = [0, 1, 0], sizes = [2, 16, 32], strides = [1, 1, 1]} : vector<2x32x32xbf16> to vector<2x16x32xbf16>
    %13 = vector.shape_cast %12 : vector<2x16x32xbf16> to vector<32x32xbf16>
    %c1 = arith.constant 1 : index
    %c0_6 = arith.constant 0 : index
    %c0_7 = arith.constant 0 : index
    %14 = vector.load %arg2[%c1, %c0_6, %c0_7] : memref<5x32x512xbf16, #tpu.memory_space<vmem>>, vector<1x32x512xbf16>
    %15 = vector.shape_cast %14 : vector<1x32x512xbf16> to vector<32x512xbf16>
    %cst_8 = arith.constant dense<0.000000e+00> : vector<32x512xf32>
    %16 = tpu.matmul %13, %15, %cst_8 {dimension_numbers = #tpu.dot_dimension_numbers<[1], [0], [0], [1], [0, 0, 1, 1], [], []>} : vector<32x32xbf16>, vector<32x512xbf16>, vector<32x512xf32> -> vector<32x512xf32>
    %17 = arith.addf %11, %16 : vector<32x512xf32>
    %18 = vector.extract_strided_slice %4 {offsets = [0, 2, 0], sizes = [2, 16, 32], strides = [1, 1, 1]} : vector<2x32x32xbf16> to vector<2x16x32xbf16>
    %19 = vector.shape_cast %18 : vector<2x16x32xbf16> to vector<32x32xbf16>
    %c2 = arith.constant 2 : index
    %c0_9 = arith.constant 0 : index
    %c0_10 = arith.constant 0 : index
    %20 = vector.load %arg2[%c2, %c0_9, %c0_10] : memref<5x32x512xbf16, #tpu.memory_space<vmem>>, vector<1x32x512xbf16>
    %21 = vector.shape_cast %20 : vector<1x32x512xbf16> to vector<32x512xbf16>
    %cst_11 = arith.constant dense<0.000000e+00> : vector<32x512xf32>
    %22 = tpu.matmul %19, %21, %cst_11 {dimension_numbers = #tpu.dot_dimension_numbers<[1], [0], [0], [1], [0, 0, 1, 1], [], []>} : vector<32x32xbf16>, vector<32x512xbf16>, vector<32x512xf32> -> vector<32x512xf32>
    %23 = arith.addf %17, %22 : vector<32x512xf32>
    %24 = vector.extract_strided_slice %4 {offsets = [0, 3, 0], sizes = [2, 16, 32], strides = [1, 1, 1]} : vector<2x32x32xbf16> to vector<2x16x32xbf16>
    %25 = vector.shape_cast %24 : vector<2x16x32xbf16> to vector<32x32xbf16>
    %c3 = arith.constant 3 : index
    %c0_12 = arith.constant 0 : index
    %c0_13 = arith.constant 0 : index
    %26 = vector.load %arg2[%c3, %c0_12, %c0_13] : memref<5x32x512xbf16, #tpu.memory_space<vmem>>, vector<1x32x512xbf16>
    %27 = vector.shape_cast %26 : vector<1x32x512xbf16> to vector<32x512xbf16>
    %cst_14 = arith.constant dense<0.000000e+00> : vector<32x512xf32>
    %28 = tpu.matmul %25, %27, %cst_14 {dimension_numbers = #tpu.dot_dimension_numbers<[1], [0], [0], [1], [0, 0, 1, 1], [], []>} : vector<32x32xbf16>, vector<32x512xbf16>, vector<32x512xf32> -> vector<32x512xf32>
    %29 = arith.addf %23, %28 : vector<32x512xf32>
    %30 = vector.extract_strided_slice %4 {offsets = [0, 4, 0], sizes = [2, 16, 32], strides = [1, 1, 1]} : vector<2x32x32xbf16> to vector<2x16x32xbf16>
    %31 = vector.shape_cast %30 : vector<2x16x32xbf16> to vector<32x32xbf16>
    %c4 = arith.constant 4 : index
    %c0_15 = arith.constant 0 : index
    %c0_16 = arith.constant 0 : index
    %32 = vector.load %arg2[%c4, %c0_15, %c0_16] : memref<5x32x512xbf16, #tpu.memory_space<vmem>>, vector<1x32x512xbf16>
    %33 = vector.shape_cast %32 : vector<1x32x512xbf16> to vector<32x512xbf16>
    %cst_17 = arith.constant dense<0.000000e+00> : vector<32x512xf32>
    %34 = tpu.matmul %31, %33, %cst_17 {dimension_numbers = #tpu.dot_dimension_numbers<[1], [0], [0], [1], [0, 0, 1, 1], [], []>} : vector<32x32xbf16>, vector<32x512xbf16>, vector<32x512xf32> -> vector<32x512xf32>
    %35 = arith.addf %29, %34 : vector<32x512xf32>
    %36 = vector.shape_cast %35 : vector<32x512xf32> to vector<2x16x512xf32>
    %c0_18 = arith.constant 0 : index
    %c0_19 = arith.constant 0 : index
    %37 = vector.load %arg3[%c0_18, %c0_19] : memref<1x512xf32, #tpu.memory_space<vmem>>, vector<1x512xf32>
    %38 = vector.shape_cast %37 : vector<1x512xf32> to vector<1x1x512xf32>
    %39 = vector.broadcast %38 : vector<1x1x512xf32> to vector<2x16x512xf32>
    %40 = arith.addf %36, %39 : vector<2x16x512xf32>
    %cst_20 = arith.constant 0.000000e+00 : f32
    %41 = vector.broadcast %cst_20 : f32 to vector<2x16x512xf32>
    %42 = arith.maximumf %40, %41 : vector<2x16x512xf32>
    %43 = arith.index_cast %2 : i32 to index
    %c0_21 = arith.constant 0 : index
    %44 = vector.load %arg4[%43, %c0_21] : memref<16x512xf32, #tpu.memory_space<vmem>>, vector<16x512xf32>
    %45 = vector.shape_cast %44 : vector<16x512xf32> to vector<1x16x512xf32>
    %46 = vector.broadcast %45 : vector<1x16x512xf32> to vector<2x16x512xf32>
    %47 = arith.mulf %42, %46 : vector<2x16x512xf32>
    %cst_22 = arith.constant dense<0xFF800000> : vector<2x512xf32>
    %48 = vector.multi_reduction <maximumf>, %47, %cst_22 [1] : vector<2x16x512xf32> to vector<2x512xf32>
    %49 = arith.maximumf %0, %48 : vector<2x512xf32>
    %c1_i32 = arith.constant 1 : i32
    %50 = arith.truncf %49 : vector<2x512xf32> to vector<2x512xbf16>
    %c0_23 = arith.constant 0 : index
    %c0_24 = arith.constant 0 : index
    %51 = vector.load %arg5[%c0_23, %c0_24] : memref<512x512xbf16, #tpu.memory_space<vmem>>, vector<512x512xbf16>
    %cst_25 = arith.constant dense<0.000000e+00> : vector<2x512xf32>
    %52 = tpu.matmul %50, %51, %cst_25 {dimension_numbers = #tpu.dot_dimension_numbers<[1], [0], [0], [1], [0, 0, 1, 1], [], []>} : vector<2x512xbf16>, vector<512x512xbf16>, vector<2x512xf32> -> vector<2x512xf32>
    %c0_26 = arith.constant 0 : index
    %c0_27 = arith.constant 0 : index
    %53 = vector.load %arg6[%c0_26, %c0_27] : memref<1x512xf32, #tpu.memory_space<vmem>>, vector<1x512xf32>
    %54 = vector.broadcast %53 : vector<1x512xf32> to vector<2x512xf32>
    %55 = arith.addf %52, %54 : vector<2x512xf32>
    %cst_28 = arith.constant 0.000000e+00 : f32
    %56 = vector.broadcast %cst_28 : f32 to vector<2x512xf32>
    %57 = arith.subf %56, %55 : vector<2x512xf32>
    %58 = math.exp %57 : vector<2x512xf32>
    %cst_29 = arith.constant 1.000000e+00 : f32
    %59 = vector.broadcast %cst_29 : f32 to vector<2x512xf32>
    %60 = arith.addf %59, %58 : vector<2x512xf32>
    %61 = tpu.reciprocal %60 {approx = true} : vector<2x512xf32> -> vector<2x512xf32>
    %cst_30 = arith.constant 0.000000e+00 : f32
    %62 = vector.broadcast %cst_30 : f32 to vector<2x512xf32>
    %63 = arith.maximumf %55, %62 : vector<2x512xf32>
    %64 = arith.mulf %61, %63 : vector<2x512xf32>
    %cst_31 = arith.constant 1.000000e+00 : f32
    %65 = vector.broadcast %cst_31 : f32 to vector<2x512xf32>
    %66 = arith.subf %65, %61 : vector<2x512xf32>
    %67 = arith.mulf %66, %49 : vector<2x512xf32>
    %68 = arith.addf %64, %67 : vector<2x512xf32>
    %69 = arith.truncf %68 : vector<2x512xf32> to vector<2x512xbf16>
    %c0_32 = arith.constant 0 : index
    %c0_33 = arith.constant 0 : index
    %70 = vector.load %arg7[%c0_32, %c0_33] : memref<512x128xbf16, #tpu.memory_space<vmem>>, vector<512x128xbf16>
    %cst_34 = arith.constant dense<0.000000e+00> : vector<2x128xf32>
    %71 = tpu.matmul %69, %70, %cst_34 {dimension_numbers = #tpu.dot_dimension_numbers<[1], [0], [0], [1], [0, 0, 1, 1], [], []>} : vector<2x512xbf16>, vector<512x128xbf16>, vector<2x128xf32> -> vector<2x128xf32>
    %c0_35 = arith.constant 0 : index
    %c0_36 = arith.constant 0 : index
    %72 = vector.load %arg8[%c0_35, %c0_36] : memref<1x128xf32, #tpu.memory_space<vmem>>, vector<1x128xf32>
    %73 = vector.broadcast %72 : vector<1x128xf32> to vector<2x128xf32>
    %74 = arith.addf %71, %73 : vector<2x128xf32>
    %cst_37 = arith.constant dense<0xFF800000> : vector<2xf32>
    %75 = vector.multi_reduction <maximumf>, %74, %cst_37 [1] : vector<2x128xf32> to vector<2xf32>
    %76 = vector.shape_cast %75 : vector<2xf32> to vector<2x1xf32>
    %77 = vector.broadcast %76 : vector<2x1xf32> to vector<2x128xf32>
    %78 = arith.subf %74, %77 : vector<2x128xf32>
    %79 = math.exp %78 : vector<2x128xf32>
    %cst_38 = arith.constant dense<0.000000e+00> : vector<2xf32>
    %80 = vector.multi_reduction <add>, %79, %cst_38 [1] : vector<2x128xf32> to vector<2xf32>
    %81 = vector.shape_cast %80 : vector<2xf32> to vector<2x1xf32>
    %82 = math.log %81 : vector<2x1xf32>
    %83 = vector.broadcast %82 : vector<2x1xf32> to vector<2x128xf32>
    %84 = arith.subf %78, %83 : vector<2x128xf32>
    %c0_39 = arith.constant 0 : index
    %c0_40 = arith.constant 0 : index
    %85 = vector.load %arg9[%c0_39, %c0_40] : memref<2x128xf32, #tpu.memory_space<vmem>>, vector<2x128xf32>
    tpu.vector_store %arg9[%c0_39, %c0_40], %84 {strides = array<i32>} : memref<2x128xf32, #tpu.memory_space<vmem>>, vector<2x128xf32>,
    return
  }
  func.func @transform_0(%arg0: i32) -> (i32, i32, i32) {
    %c0_i32 = arith.constant 0 : i32
    %c0_i32_0 = arith.constant 0 : i32
    %c0_i32_1 = arith.constant 0 : i32
    return %arg0, %c0_i32, %c0_i32_0 : i32, i32, i32
  }
  func.func @transform_1(%arg0: i32) -> (i32, i32, i32) {
    %c0_i32 = arith.constant 0 : i32
    %c0_i32_0 = arith.constant 0 : i32
    %c0_i32_1 = arith.constant 0 : i32
    %c0_i32_2 = arith.constant 0 : i32
    return %c0_i32, %c0_i32_0, %c0_i32_1 : i32, i32, i32
  }
  func.func @transform_2(%arg0: i32) -> (i32, i32) {
    %c0_i32 = arith.constant 0 : i32
    %c0_i32_0 = arith.constant 0 : i32
    %c0_i32_1 = arith.constant 0 : i32
    return %c0_i32, %c0_i32_0 : i32, i32
  }
  func.func @transform_3(%arg0: i32) -> (i32, i32) {
    %c0_i32 = arith.constant 0 : i32
    %c0_i32_0 = arith.constant 0 : i32
    %c0_i32_1 = arith.constant 0 : i32
    return %c0_i32, %c0_i32_0 : i32, i32
  }
  func.func @transform_4(%arg0: i32) -> (i32, i32) {
    %c0_i32 = arith.constant 0 : i32
    %c0_i32_0 = arith.constant 0 : i32
    %c0_i32_1 = arith.constant 0 : i32
    return %c0_i32, %c0_i32_0 : i32, i32
  }
  func.func @transform_5(%arg0: i32) -> (i32, i32) {
    %c0_i32 = arith.constant 0 : i32
    %c0_i32_0 = arith.constant 0 : i32
    %c0_i32_1 = arith.constant 0 : i32
    return %c0_i32, %c0_i32_0 : i32, i32
  }
  func.func @transform_6(%arg0: i32) -> (i32, i32) {
    %c0_i32 = arith.constant 0 : i32
    %c0_i32_0 = arith.constant 0 : i32
    %c0_i32_1 = arith.constant 0 : i32
    return %c0_i32, %c0_i32_0 : i32, i32
  }
  func.func @transform_7(%arg0: i32) -> (i32, i32) {
    %c0_i32 = arith.constant 0 : i32
    %c0_i32_0 = arith.constant 0 : i32
    %c0_i32_1 = arith.constant 0 : i32
    return %c0_i32, %c0_i32_0 : i32, i32
  }
  func.func @transform_8(%arg0: i32) -> (i32, i32) {
    %c0_i32 = arith.constant 0 : i32
    %c0_i32_0 = arith.constant 0 : i32
    return %arg0, %c0_i32 : i32, i32
  }
}

</mosaic_0001>

<llo_original>
// kernel: tpu_custom_call.1
$region0: #{tpu_custom_call.1}
  #allocation0 [shape = 'u32[]', space=smem, size = 0x4, offset = 0x4, fixed_abs, tag = 'smem constant byte address 0x4 - core index']
  #allocation1 [shape = 'u32[144,128]{1,0:T(1,128)}', space=vmem, size = 0x12000, scoped, tag = 'internal scratch']
  %s0 = inlined_call_operand.hbm [shape: bf16[2,32,32], index: 0, kind: input, shape index: {}]
  %s1 = inlined_call_operand.hbm [shape: bf16[5,32,512], index: 1, kind: input, shape index: {}]
  %s2 = inlined_call_operand.vmem [shape: f32[1,512], index: 2, kind: input, shape index: {}]
  %s3 = inlined_call_operand.hbm [shape: f32[16,512], index: 3, kind: input, shape index: {}]
  %s4 = inlined_call_operand.hbm [shape: bf16[512,512], index: 4, kind: input, shape index: {}]
  %s5 = inlined_call_operand.vmem [shape: f32[1,512], index: 5, kind: input, shape index: {}]
  %s6 = inlined_call_operand.hbm [shape: bf16[512,128], index: 6, kind: input, shape index: {}]
  %s7 = inlined_call_operand.vmem [shape: f32[1,128], index: 7, kind: input, shape index: {}]
  %s8 = inlined_call_operand.hbm [shape: f32[2,128], index: 8, kind: output, shape index: {}]
  %s9 = sld [smem:[#allocation0]]
  $region62: #{tpu_custom_call.1} parent=0
    _
  %s11 = ssub.s32 1, %s9
  %s12 = scalar_select 0, %s11, %s9
  $region1: #{tpu_custom_call.1} parent=0
    #allocation2 [shape = 'u8[16384]{0}', space=vmem, size = 0x4000, scoped, tag = 'input window, operand 0, single buffered']
    #allocation3 [shape = 's32[1]{0}', space=sflag, size = 0x4, scoped, tag = 'scoped memory for tpu_custom_call.1']
    #allocation4 [shape = 's32[1]{0}', space=sflag, size = 0x4, scoped, tag = 'scoped memory for tpu_custom_call.1']
    #allocation5 [shape = 'u8[163840]{0}', space=vmem, size = 0x28000, scoped, tag = 'input window, operand 1, single buffered']
    #allocation6 [shape = 's32[1]{0}', space=sflag, size = 0x4, scoped, tag = 'scoped memory for tpu_custom_call.1']
    #allocation7 [shape = 'u8[32768]{0}', space=vmem, size = 0x8000, scoped, tag = 'input window, operand 3, single buffered']
    #allocation8 [shape = 'u8[524288]{0}', space=vmem, size = 0x80000, scoped, tag = 'input window, operand 4, single buffered']
    #allocation9 [shape = 's32[1]{0}', space=sflag, size = 0x4, scoped, tag = 'scoped memory for tpu_custom_call.1']
    #allocation10 [shape = 'u8[131072]{0}', space=vmem, size = 0x20000, scoped, tag = 'input window, operand 6, single buffered']
    #allocation11 [shape = 'u8[1024]{0}', space=vmem, size = 0x400, scoped, tag = 'output window, operand 0, single buffered']
    %13 = vsyncpa [#allocation3], 0
    %14 = vsyncpa [#allocation6], 0
    %15 = vsyncpa [#allocation9], 0
    %16 = vsyncpa [#allocation4], 0
    // Predicated region
    $region2: #{tpu_custom_call.1} parent=1 // pred_check
      _
    $region3: #{tpu_custom_call.1} parent=1 // pred_check_branch
      %18 = sbr.rel (0) target = $region5
    $region4: #{tpu_custom_call.1} parent=1 // pred_region
      %s20 = ssub.s32 512, 512
      %21 = vsyncadd [#allocation3], %s20
      %s22 = sshll.u32 [#allocation2], 4
      %s23 = int_to_ptr.vmem [resolvable:$true] %s22
      %28 = dma.hbm_to_vmem [thread:$0]  %s0, 512, %s23, [#allocation3], 64, 64, 4
    $region5: #{tpu_custom_call.1} parent=1 // pred_fallthru
      _
    // Predicated region
    $region6: #{tpu_custom_call.1} parent=1 // pred_check
      _
    $region7: #{tpu_custom_call.1} parent=1 // pred_check_branch
      %30 = sbr.rel (0) target = $region9
    $region8: #{tpu_custom_call.1} parent=1 // pred_region
      %s32 = ssub.s32 5120, 5120
      %33 = vsyncadd [#allocation6], %s32
      %s34 = sshll.u32 [#allocation5], 4
      %s35 = int_to_ptr.vmem [resolvable:$true] %s34
      %40 = dma.hbm_to_vmem [thread:$0]  %s1, 5120, %s35, [#allocation6], 256, 256, 16
    $region9: #{tpu_custom_call.1} parent=1 // pred_fallthru
      _
    // Predicated region
    $region10: #{tpu_custom_call.1} parent=1 // pred_check
      _
    $region11: #{tpu_custom_call.1} parent=1 // pred_check_branch
      %42 = sbr.rel (0) target = $region13
    $region12: #{tpu_custom_call.1} parent=1 // pred_region
      _
    $region13: #{tpu_custom_call.1} parent=1 // pred_fallthru
      _
    // Predicated region
    $region14: #{tpu_custom_call.1} parent=1 // pred_check
      _
    $region15: #{tpu_custom_call.1} parent=1 // pred_check_branch
      %44 = sbr.rel (0) target = $region17
    $region16: #{tpu_custom_call.1} parent=1 // pred_region
      %s46 = ssub.s32 1024, 1024
      %47 = vsyncadd [#allocation6], %s46
      %s48 = sshll.u32 [#allocation7], 4
      %s49 = int_to_ptr.vmem [resolvable:$true] %s48
      %54 = dma.hbm_to_vmem [thread:$0]  %s3, 1024, %s49, [#allocation6], 512, 512, 32
    $region17: #{tpu_custom_call.1} parent=1 // pred_fallthru
      _
    // Predicated region
    $region18: #{tpu_custom_call.1} parent=1 // pred_check
      _
    $region19: #{tpu_custom_call.1} parent=1 // pred_check_branch
      %56 = sbr.rel (0) target = $region21
    $region20: #{tpu_custom_call.1} parent=1 // pred_region
      %s58 = ssub.s32 16384, 16384
      %59 = vsyncadd [#allocation9], %s58
      %s60 = sshll.u32 [#allocation8], 4
      %s61 = int_to_ptr.vmem [resolvable:$true] %s60
      %66 = dma.hbm_to_vmem [thread:$0]  %s4, 16384, %s61, [#allocation9], 256, 256, 16
    $region21: #{tpu_custom_call.1} parent=1 // pred_fallthru
      _
    // Predicated region
    $region22: #{tpu_custom_call.1} parent=1 // pred_check
      _
    $region23: #{tpu_custom_call.1} parent=1 // pred_check_branch
      %68 = sbr.rel (0) target = $region25
    $region24: #{tpu_custom_call.1} parent=1 // pred_region
      _
    $region25: #{tpu_custom_call.1} parent=1 // pred_fallthru
      _
    // Predicated region
    $region26: #{tpu_custom_call.1} parent=1 // pred_check
      _
    $region27: #{tpu_custom_call.1} parent=1 // pred_check_branch
      %70 = sbr.rel (0) target = $region29
    $region28: #{tpu_custom_call.1} parent=1 // pred_region
      %s72 = ssub.s32 4096, 4096
      %73 = vsyncadd [#allocation9], %s72
      %s74 = sshll.u32 [#allocation10], 4
      %s75 = int_to_ptr.vmem [resolvable:$true] %s74
      %80 = dma.hbm_to_vmem [thread:$0]  %s6, 4096, %s75, [#allocation9], 64, 64, 4
    $region29: #{tpu_custom_call.1} parent=1 // pred_fallthru
      _
    // Predicated region
    $region30: #{tpu_custom_call.1} parent=1 // pred_check
      _
    $region31: #{tpu_custom_call.1} parent=1 // pred_check_branch
      %82 = sbr.rel (0) target = $region33
    $region32: #{tpu_custom_call.1} parent=1 // pred_region
      _
    $region33: #{tpu_custom_call.1} parent=1 // pred_fallthru
      _
    // Predicated region
    $region34: #{tpu_custom_call.1} parent=1 // pred_check
      _
    $region35: #{tpu_custom_call.1} parent=1 // pred_check_branch
      %84 = sbr.rel (0) target = $region37
    $region36: #{tpu_custom_call.1} parent=1 // pred_region
      %85 = dma.done [#allocation3], 512
    $region37: #{tpu_custom_call.1} parent=1 // pred_fallthru
      _
    // Predicated region
    $region38: #{tpu_custom_call.1} parent=1 // pred_check
      _
    $region39: #{tpu_custom_call.1} parent=1 // pred_check_branch
      %87 = sbr.rel (0) target = $region41
    $region40: #{tpu_custom_call.1} parent=1 // pred_region
      %88 = dma.done [#allocation6], 5120
    $region41: #{tpu_custom_call.1} parent=1 // pred_fallthru
      _
    // Predicated region
    $region42: #{tpu_custom_call.1} parent=1 // pred_check
      _
    $region43: #{tpu_custom_call.1} parent=1 // pred_check_branch
      %90 = sbr.rel (0) target = $region45
    $region44: #{tpu_custom_call.1} parent=1 // pred_region
      %91 = dma.done [#allocation6], 1024
    $region45: #{tpu_custom_call.1} parent=1 // pred_fallthru
      _
    // Predicated region
    $region46: #{tpu_custom_call.1} parent=1 // pred_check
      _
    $region47: #{tpu_custom_call.1} parent=1 // pred_check_branch
      %93 = sbr.rel (0) target = $region49
    $region48: #{tpu_custom_call.1} parent=1 // pred_region
      %94 = dma.done [#allocation9], 16384
    $region49: #{tpu_custom_call.1} parent=1 // pred_fallthru
      _
    // Predicated region
    $region50: #{tpu_custom_call.1} parent=1 // pred_check
      _
    $region51: #{tpu_custom_call.1} parent=1 // pred_check_branch
      %96 = sbr.rel (0) target = $region53
    $region52: #{tpu_custom_call.1} parent=1 // pred_region
      %97 = dma.done [#allocation9], 4096
    $region53: #{tpu_custom_call.1} parent=1 // pred_fallthru
      _
    %v99 = vld [vmem:[#allocation2] sm:$0xf]
    %v100 = vld [vmem:[#allocation2 + $0x4] sm:$0xf]
    %v101 = vld [vmem:[#allocation2 + $0x8] sm:$0xf]
    %v102 = vld [vmem:[#allocation2 + $0x10] sm:$0xf]
    %v103 = vld [vmem:[#allocation2 + $0x14] sm:$0xf]
    %v104 = vld [vmem:[#allocation2 + $0x18] sm:$0xf]
    %v105 = vld [vmem:[#allocation5] sm:$0xff]
    %v106 = vld [vmem:[#allocation5 + $0x8] sm:$0xff]
    %v107 = vld [vmem:[#allocation5 + $0x10] sm:$0xff]
    %v108 = vld [vmem:[#allocation5 + $0x18] sm:$0xff]
    %v109 = vld [vmem:[#allocation5 + $0x20] sm:$0xff]
    %v110 = vld [vmem:[#allocation5 + $0x28] sm:$0xff]
    %v111 = vld [vmem:[#allocation5 + $0x30] sm:$0xff]
    %v112 = vld [vmem:[#allocation5 + $0x38] sm:$0xff]
    %vm113 = vsmask.f32 3328
    %vm114 = vsmask.f32 7440
    %vm115 = vmor %vm113, %vm114
    %v117 = vshrl.u32 %v99, 16
    %v119 = vrot.slane %v117, 4
    %v120 = vshll.u32 %v99, 16
    %v122 = vrot.slane %v120, 5
    %v123 = vor.u32 %v119, %v122
    %v124 = vrot.slane %v123, 4
    %v126 = vshll.u32 %v100, 16
    %v128 = vrot.slane %v126, 5
    %v129 = vsel %vm115, %v124, %v128
    %v130 = vshrl.u32 %v100, 16
    %v132 = vrot.slane %v130, 4
    %v133 = vor.u32 %v132, %v128
    %v134 = vrot.slane %v133, 4
    %v136 = vshll.u32 %v101, 16
    %v138 = vrot.slane %v136, 5
    %v139 = vsel %vm115, %v134, %v138
    %v141 = vshrl.u32 %v102, 16
    %v143 = vrot.slane %v141, 4
    %v144 = vshll.u32 %v102, 16
    %v146 = vrot.slane %v144, 5
    %v147 = vor.u32 %v143, %v146
    %v148 = vrot.slane %v147, 4
    %v150 = vshll.u32 %v103, 16
    %v152 = vrot.slane %v150, 5
    %v153 = vsel %vm115, %v148, %v152
    %v154 = vshrl.u32 %v103, 16
    %v156 = vrot.slane %v154, 4
    %v157 = vor.u32 %v156, %v152
    %v158 = vrot.slane %v157, 4
    %v160 = vshll.u32 %v104, 16
    %v162 = vrot.slane %v160, 5
    %v163 = vsel %vm115, %v158, %v162
    %s164 = scalar_lea.vmem [#allocation5], 64
    %v165 = vld [vmem:[%s164] sm:$0xff]
    %v166 = vld [vmem:[%s164 + $0x8] sm:$0xff]
    %v167 = vld [vmem:[%s164 + $0x10] sm:$0xff]
    %v168 = vld [vmem:[%s164 + $0x18] sm:$0xff]
    %v169 = vld [vmem:[%s164 + $0x20] sm:$0xff]
    %v170 = vld [vmem:[%s164 + $0x28] sm:$0xff]
    %v171 = vld [vmem:[%s164 + $0x30] sm:$0xff]
    %v172 = vld [vmem:[%s164 + $0x38] sm:$0xff]
    %v173 = vunpack.c.l.b16 %v129
    %v174 = vunpack.c.l.b16 %v139
    %v175 = vunpack.c.l.b16 %v153
    %v176 = vunpack.c.l.b16 %v163
    %v177 = vpack.c.b16 %v174, %v173
    %v178 = vpack.c.b16 %v176, %v175
    %v187 = vunpack.c.l.b16 %v165
    %v188 = vunpack.c.h.b16 %v165
    %v189 = vunpack.c.l.b16 %v166
    %v190 = vunpack.c.h.b16 %v166
    %v191 = vunpack.c.l.b16 %v167
    %v192 = vunpack.c.h.b16 %v167
    %v193 = vunpack.c.l.b16 %v168
    %v194 = vunpack.c.h.b16 %v168
    %v195 = vunpack.c.l.b16 %v169
    %v196 = vunpack.c.h.b16 %v169
    %v197 = vunpack.c.l.b16 %v170
    %v198 = vunpack.c.h.b16 %v170
    %v199 = vunpack.c.l.b16 %v171
    %v200 = vunpack.c.h.b16 %v171
    %v201 = vunpack.c.l.b16 %v172
    %v202 = vunpack.c.h.b16 %v172
    %v203 = vpack.c.b16 %v191, %v187
    %v204 = vpack.c.b16 %v192, %v188
    %v205 = vpack.c.b16 %v193, %v189
    %v206 = vpack.c.b16 %v194, %v190
    %v207 = vpack.c.b16 %v199, %v195
    %v208 = vpack.c.b16 %v200, %v196
    %v209 = vpack.c.b16 %v201, %v197
    %v210 = vpack.c.b16 %v202, %v198
    %vm219 = vcmask 261120
    %v221 = vsel %vm219, %v177, 0
    %v224 = vsel %vm219, %v178, 0
    %226 = vmatprep.subr.bf16.mxu0 %v204
    %227 = vmatpush1.bf16.msra.mxu0 %v203
    %228 = vmatprep.subr.bf16.mxu0 %v208
    %229 = vmatpush1.bf16.msra.mxu0 %v207
    %230 = vmatprep.subr.bf16.mxu0 0
    %231 = vmatpush1.bf16.msra.mxu0 0
    %232 = vmatprep.subr.bf16.mxu0 0
    %233 = vmatpush1.bf16.msra.mxu0 0
    %234 = vmatprep.subr.bf16.mxu0 0
    %235 = vmatpush1.bf16.msra.mxu0 0
    %236 = vmatprep.subr.bf16.mxu0 0
    %237 = vmatpush1.bf16.msra.mxu0 0
    %238 = vmatprep.subr.bf16.mxu0 0
    %239 = vmatpush1.bf16.msra.mxu0 0
    %240 = vmatprep.subr.bf16.mxu0 0
    %241 = vmatpush1.bf16.msra.mxu0 0
    %242 = vmatprep.subr.bf16.mxu0 0
    %243 = vmatpush1.bf16.msra.mxu0 0
    %244 = vmatprep.subr.bf16.mxu0 0
    %245 = vmatpush1.bf16.msra.mxu0 0
    %246 = vmatprep.subr.bf16.mxu0 0
    %247 = vmatpush1.bf16.msra.mxu0 0
    %248 = vmatprep.subr.bf16.mxu0 0
    %249 = vmatpush1.bf16.msra.mxu0 0
    %250 = vmatprep.subr.bf16.mxu0 0
    %251 = vmatpush1.bf16.msra.mxu0 0
    %252 = vmatprep.subr.bf16.mxu0 0
    %253 = vmatpush1.bf16.msra.mxu0 0
    %254 = vmatprep.subr.bf16.mxu0 0
    %255 = vmatpush1.bf16.msra.mxu0 0
    %256 = vmatprep.subr.bf16.mxu0 0
    %257 = vmatpush1.bf16.msra.mxu0 0
    %258 = vmatprep.mubr.bf16.mxu0 0
    %259 = vmatmul.mubr.bf16.gmra.mrb[0].mxu0 %v221
    %v260 = vpop.f32.mrb[0].mxu0
    %v261 = vadd.f32 0.0, %v260
    %v262 = vpop.f32.mrb[0].mxu0
    %v263 = vadd.f32 0.0, %v262
    %v264 = vpop.f32.mrb[0].mxu0
    %v265 = vadd.f32 0.0, %v264
    %v266 = vpop.f32.mrb[0].mxu0
    %v267 = vadd.f32 0.0, %v266
    %268 = vmatprep.mubr.bf16.mxu0 0
    %269 = vmatmul.mubr.bf16.gmra.mrb[0].mxu0 %v224
    %v270 = vpop.f32.mrb[0].mxu0
    %v271 = vadd.f32 0.0, %v270
    %v272 = vpop.f32.mrb[0].mxu0
    %v273 = vadd.f32 0.0, %v272
    %v274 = vpop.f32.mrb[0].mxu0
    %v275 = vadd.f32 0.0, %v274
    %v276 = vpop.f32.mrb[0].mxu0
    %v277 = vadd.f32 0.0, %v276
    %278 = vdwg.mxu0
    %279 = vmatprep.subr.bf16.mxu0 %v206
    %280 = vmatpush1.bf16.msra.mxu0 %v205
    %281 = vmatprep.subr.bf16.mxu0 %v210
    %282 = vmatpush1.bf16.msra.mxu0 %v209
    %283 = vmatprep.subr.bf16.mxu0 0
    %284 = vmatpush1.bf16.msra.mxu0 0
    %285 = vmatprep.subr.bf16.mxu0 0
    %286 = vmatpush1.bf16.msra.mxu0 0
    %287 = vmatprep.subr.bf16.mxu0 0
    %288 = vmatpush1.bf16.msra.mxu0 0
    %289 = vmatprep.subr.bf16.mxu0 0
    %290 = vmatpush1.bf16.msra.mxu0 0
    %291 = vmatprep.subr.bf16.mxu0 0
    %292 = vmatpush1.bf16.msra.mxu0 0
    %293 = vmatprep.subr.bf16.mxu0 0
    %294 = vmatpush1.bf16.msra.mxu0 0
    %295 = vmatprep.subr.bf16.mxu0 0
    %296 = vmatpush1.bf16.msra.mxu0 0
    %297 = vmatprep.subr.bf16.mxu0 0
    %298 = vmatpush1.bf16.msra.mxu0 0
    %299 = vmatprep.subr.bf16.mxu0 0
    %300 = vmatpush1.bf16.msra.mxu0 0
    %301 = vmatprep.subr.bf16.mxu0 0
    %302 = vmatpush1.bf16.msra.mxu0 0
    %303 = vmatprep.subr.bf16.mxu0 0
    %304 = vmatpush1.bf16.msra.mxu0 0
    %305 = vmatprep.subr.bf16.mxu0 0
    %306 = vmatpush1.bf16.msra.mxu0 0
    %307 = vmatprep.subr.bf16.mxu0 0
    %308 = vmatpush1.bf16.msra.mxu0 0
    %309 = vmatprep.subr.bf16.mxu0 0
    %310 = vmatpush1.bf16.msra.mxu0 0
    %311 = vmatprep.mubr.bf16.mxu0 0
    %312 = vmatmul.mubr.bf16.gmra.mrb[0].mxu0 %v221
    %v313 = vpop.f32.mrb[0].mxu0
    %v314 = vadd.f32 0.0, %v313
    %v315 = vpop.f32.mrb[0].mxu0
    %v316 = vadd.f32 0.0, %v315
    %v317 = vpop.f32.mrb[0].mxu0
    %v318 = vadd.f32 0.0, %v317
    %v319 = vpop.f32.mrb[0].mxu0
    %v320 = vadd.f32 0.0, %v319
    %321 = vmatprep.mubr.bf16.mxu0 0
    %322 = vmatmul.mubr.bf16.gmra.mrb[0].mxu0 %v224
    %v323 = vpop.f32.mrb[0].mxu0
    %v324 = vadd.f32 0.0, %v323
    %v325 = vpop.f32.mrb[0].mxu0
    %v326 = vadd.f32 0.0, %v325
    %v327 = vpop.f32.mrb[0].mxu0
    %v328 = vadd.f32 0.0, %v327
    %v329 = vpop.f32.mrb[0].mxu0
    %v330 = vadd.f32 0.0, %v329
    %331 = vdwg.mxu0
    %v336 = vunpack.c.l.b16 %v99
    %v337 = vunpack.c.l.b16 %v100
    %v338 = vunpack.c.l.b16 %v102
    %v339 = vunpack.c.l.b16 %v103
    %v340 = vpack.c.b16 %v337, %v336
    %v341 = vpack.c.b16 %v339, %v338
    %v350 = vunpack.c.l.b16 %v105
    %v351 = vunpack.c.h.b16 %v105
    %v352 = vunpack.c.l.b16 %v106
    %v353 = vunpack.c.h.b16 %v106
    %v354 = vunpack.c.l.b16 %v107
    %v355 = vunpack.c.h.b16 %v107
    %v356 = vunpack.c.l.b16 %v108
    %v357 = vunpack.c.h.b16 %v108
    %v358 = vunpack.c.l.b16 %v109
    %v359 = vunpack.c.h.b16 %v109
    %v360 = vunpack.c.l.b16 %v110
    %v361 = vunpack.c.h.b16 %v110
    %v362 = vunpack.c.l.b16 %v111
    %v363 = vunpack.c.h.b16 %v111
    %v364 = vunpack.c.l.b16 %v112
    %v365 = vunpack.c.h.b16 %v112
    %v366 = vpack.c.b16 %v354, %v350
    %v367 = vpack.c.b16 %v355, %v351
    %v368 = vpack.c.b16 %v356, %v352
    %v369 = vpack.c.b16 %v357, %v353
    %v370 = vpack.c.b16 %v362, %v358
    %v371 = vpack.c.b16 %v363, %v359
    %v372 = vpack.c.b16 %v364, %v360
    %v373 = vpack.c.b16 %v365, %v361
    %v383 = vsel %vm219, %v340, 0
    %v386 = vsel %vm219, %v341, 0
    %388 = vmatprep.subr.bf16.mxu0 %v367
    %389 = vmatpush1.bf16.msra.mxu0 %v366
    %390 = vmatprep.subr.bf16.mxu0 %v371
    %391 = vmatpush1.bf16.msra.mxu0 %v370
    %392 = vmatprep.subr.bf16.mxu0 0
    %393 = vmatpush1.bf16.msra.mxu0 0
    %394 = vmatprep.subr.bf16.mxu0 0
    %395 = vmatpush1.bf16.msra.mxu0 0
    %396 = vmatprep.subr.bf16.mxu0 0
    %397 = vmatpush1.bf16.msra.mxu0 0
    %398 = vmatprep.subr.bf16.mxu0 0
    %399 = vmatpush1.bf16.msra.mxu0 0
    %400 = vmatprep.subr.bf16.mxu0 0
    %401 = vmatpush1.bf16.msra.mxu0 0
    %402 = vmatprep.subr.bf16.mxu0 0
    %403 = vmatpush1.bf16.msra.mxu0 0
    %404 = vmatprep.subr.bf16.mxu0 0
    %405 = vmatpush1.bf16.msra.mxu0 0
    %406 = vmatprep.subr.bf16.mxu0 0
    %407 = vmatpush1.bf16.msra.mxu0 0
    %408 = vmatprep.subr.bf16.mxu0 0
    %409 = vmatpush1.bf16.msra.mxu0 0
    %410 = vmatprep.subr.bf16.mxu0 0
    %411 = vmatpush1.bf16.msra.mxu0 0
    %412 = vmatprep.subr.bf16.mxu0 0
    %413 = vmatpush1.bf16.msra.mxu0 0
    %414 = vmatprep.subr.bf16.mxu0 0
    %415 = vmatpush1.bf16.msra.mxu0 0
    %416 = vmatprep.subr.bf16.mxu0 0
    %417 = vmatpush1.bf16.msra.mxu0 0
    %418 = vmatprep.subr.bf16.mxu0 0
    %419 = vmatpush1.bf16.msra.mxu0 0
    %420 = vmatprep.mubr.bf16.mxu0 0
    %421 = vmatmul.mubr.bf16.gmra.mrb[0].mxu0 %v383
    %v422 = vpop.f32.mrb[0].mxu0
    %v423 = vadd.f32 %v261, %v422
    %v424 = vpop.f32.mrb[0].mxu0
    %v425 = vadd.f32 %v263, %v424
    %v426 = vpop.f32.mrb[0].mxu0
    %v427 = vadd.f32 %v265, %v426
    %v428 = vpop.f32.mrb[0].mxu0
    %v429 = vadd.f32 %v267, %v428
    %430 = vmatprep.mubr.bf16.mxu0 0
    %431 = vmatmul.mubr.bf16.gmra.mrb[0].mxu0 %v386
    %v432 = vpop.f32.mrb[0].mxu0
    %v433 = vadd.f32 %v271, %v432
    %v434 = vpop.f32.mrb[0].mxu0
    %v435 = vadd.f32 %v273, %v434
    %v436 = vpop.f32.mrb[0].mxu0
    %v437 = vadd.f32 %v275, %v436
    %v438 = vpop.f32.mrb[0].mxu0
    %v439 = vadd.f32 %v277, %v438
    %440 = vdwg.mxu0
    %441 = vmatprep.subr.bf16.mxu0 %v369
    %442 = vmatpush1.bf16.msra.mxu0 %v368
    %443 = vmatprep.subr.bf16.mxu0 %v373
    %444 = vmatpush1.bf16.msra.mxu0 %v372
    %445 = vmatprep.subr.bf16.mxu0 0
    %446 = vmatpush1.bf16.msra.mxu0 0
    %447 = vmatprep.subr.bf16.mxu0 0
    %448 = vmatpush1.bf16.msra.mxu0 0
    %449 = vmatprep.subr.bf16.mxu0 0
    %450 = vmatpush1.bf16.msra.mxu0 0
    %451 = vmatprep.subr.bf16.mxu0 0
    %452 = vmatpush1.bf16.msra.mxu0 0
    %453 = vmatprep.subr.bf16.mxu0 0
    %454 = vmatpush1.bf16.msra.mxu0 0
    %455 = vmatprep.subr.bf16.mxu0 0
    %456 = vmatpush1.bf16.msra.mxu0 0
    %457 = vmatprep.subr.bf16.mxu0 0
    %458 = vmatpush1.bf16.msra.mxu0 0
    %459 = vmatprep.subr.bf16.mxu0 0
    %460 = vmatpush1.bf16.msra.mxu0 0
    %461 = vmatprep.subr.bf16.mxu0 0
    %462 = vmatpush1.bf16.msra.mxu0 0
    %463 = vmatprep.subr.bf16.mxu0 0
    %464 = vmatpush1.bf16.msra.mxu0 0
    %465 = vmatprep.subr.bf16.mxu0 0
    %466 = vmatpush1.bf16.msra.mxu0 0
    %467 = vmatprep.subr.bf16.mxu0 0
    %468 = vmatpush1.bf16.msra.mxu0 0
    %469 = vmatprep.subr.bf16.mxu0 0
    %470 = vmatpush1.bf16.msra.mxu0 0
    %471 = vmatprep.subr.bf16.mxu0 0
    %472 = vmatpush1.bf16.msra.mxu0 0
    %473 = vmatprep.mubr.bf16.mxu0 0
    %474 = vmatmul.mubr.bf16.gmra.mrb[0].mxu0 %v383
    %v475 = vpop.f32.mrb[0].mxu0
    %v476 = vadd.f32 %v314, %v475
    %v477 = vpop.f32.mrb[0].mxu0
    %v478 = vadd.f32 %v316, %v477
    %v479 = vpop.f32.mrb[0].mxu0
    %v480 = vadd.f32 %v318, %v479
    %v481 = vpop.f32.mrb[0].mxu0
    %v482 = vadd.f32 %v320, %v481
    %483 = vmatprep.mubr.bf16.mxu0 0
    %484 = vmatmul.mubr.bf16.gmra.mrb[0].mxu0 %v386
    %v485 = vpop.f32.mrb[0].mxu0
    %v486 = vadd.f32 %v324, %v485
    %v487 = vpop.f32.mrb[0].mxu0
    %v488 = vadd.f32 %v326, %v487
    %v489 = vpop.f32.mrb[0].mxu0
    %v490 = vadd.f32 %v328, %v489
    %v491 = vpop.f32.mrb[0].mxu0
    %v492 = vadd.f32 %v330, %v491
    %493 = vdwg.mxu0
    %vm496 = vcmask 1042432
    %vm497 = vcmask 1046532
    %vm498 = vmor %vm496, %vm497
    %v499 = vrot.slane %v99, 5
    %v500 = vrot.slane %v499, 4
    %v501 = vrot.slane %v100, 5
    %v502 = vsel %vm498, %v500, %v501
    %v503 = vrot.slane %v501, 4
    %v504 = vrot.slane %v101, 5
    %v505 = vsel %vm498, %v503, %v504
    %v506 = vrot.slane %v102, 5
    %v507 = vrot.slane %v506, 4
    %v508 = vrot.slane %v103, 5
    %v509 = vsel %vm498, %v507, %v508
    %v510 = vrot.slane %v508, 4
    %v511 = vrot.slane %v104, 5
    %v512 = vsel %vm498, %v510, %v511
    %s513 = scalar_lea.vmem [#allocation5], 128
    %v514 = vld [vmem:[%s513] sm:$0xff]
    %v515 = vld [vmem:[%s513 + $0x8] sm:$0xff]
    %v516 = vld [vmem:[%s513 + $0x10] sm:$0xff]
    %v517 = vld [vmem:[%s513 + $0x18] sm:$0xff]
    %v518 = vld [vmem:[%s513 + $0x20] sm:$0xff]
    %v519 = vld [vmem:[%s513 + $0x28] sm:$0xff]
    %v520 = vld [vmem:[%s513 + $0x30] sm:$0xff]
    %v521 = vld [vmem:[%s513 + $0x38] sm:$0xff]
    %v522 = vunpack.c.l.b16 %v502
    %v523 = vunpack.c.l.b16 %v505
    %v524 = vunpack.c.l.b16 %v509
    %v525 = vunpack.c.l.b16 %v512
    %v526 = vpack.c.b16 %v523, %v522
    %v527 = vpack.c.b16 %v525, %v524
    %v536 = vunpack.c.l.b16 %v514
    %v537 = vunpack.c.h.b16 %v514
    %v538 = vunpack.c.l.b16 %v515
    %v539 = vunpack.c.h.b16 %v515
    %v540 = vunpack.c.l.b16 %v516
    %v541 = vunpack.c.h.b16 %v516
    %v542 = vunpack.c.l.b16 %v517
    %v543 = vunpack.c.h.b16 %v517
    %v544 = vunpack.c.l.b16 %v518
    %v545 = vunpack.c.h.b16 %v518
    %v546 = vunpack.c.l.b16 %v519
    %v547 = vunpack.c.h.b16 %v519
    %v548 = vunpack.c.l.b16 %v520
    %v549 = vunpack.c.h.b16 %v520
    %v550 = vunpack.c.l.b16 %v521
    %v551 = vunpack.c.h.b16 %v521
    %v552 = vpack.c.b16 %v540, %v536
    %v553 = vpack.c.b16 %v541, %v537
    %v554 = vpack.c.b16 %v542, %v538
    %v555 = vpack.c.b16 %v543, %v539
    %v556 = vpack.c.b16 %v548, %v544
    %v557 = vpack.c.b16 %v549, %v545
    %v558 = vpack.c.b16 %v550, %v546
    %v559 = vpack.c.b16 %v551, %v547
    %v569 = vsel %vm219, %v526, 0
    %v572 = vsel %vm219, %v527, 0
    %574 = vmatprep.subr.bf16.mxu0 %v553
    %575 = vmatpush1.bf16.msra.mxu0 %v552
    %576 = vmatprep.subr.bf16.mxu0 %v557
    %577 = vmatpush1.bf16.msra.mxu0 %v556
    %578 = vmatprep.subr.bf16.mxu0 0
    %579 = vmatpush1.bf16.msra.mxu0 0
    %580 = vmatprep.subr.bf16.mxu0 0
    %581 = vmatpush1.bf16.msra.mxu0 0
    %582 = vmatprep.subr.bf16.mxu0 0
    %583 = vmatpush1.bf16.msra.mxu0 0
    %584 = vmatprep.subr.bf16.mxu0 0
    %585 = vmatpush1.bf16.msra.mxu0 0
    %586 = vmatprep.subr.bf16.mxu0 0
    %587 = vmatpush1.bf16.msra.mxu0 0
    %588 = vmatprep.subr.bf16.mxu0 0
    %589 = vmatpush1.bf16.msra.mxu0 0
    %590 = vmatprep.subr.bf16.mxu0 0
    %591 = vmatpush1.bf16.msra.mxu0 0
    %592 = vmatprep.subr.bf16.mxu0 0
    %593 = vmatpush1.bf16.msra.mxu0 0
    %594 = vmatprep.subr.bf16.mxu0 0
    %595 = vmatpush1.bf16.msra.mxu0 0
    %596 = vmatprep.subr.bf16.mxu0 0
    %597 = vmatpush1.bf16.msra.mxu0 0
    %598 = vmatprep.subr.bf16.mxu0 0
    %599 = vmatpush1.bf16.msra.mxu0 0
    %600 = vmatprep.subr.bf16.mxu0 0
    %601 = vmatpush1.bf16.msra.mxu0 0
    %602 = vmatprep.subr.bf16.mxu0 0
    %603 = vmatpush1.bf16.msra.mxu0 0
    %604 = vmatprep.subr.bf16.mxu0 0
    %605 = vmatpush1.bf16.msra.mxu0 0
    %606 = vmatprep.mubr.bf16.mxu0 0
    %607 = vmatmul.mubr.bf16.gmra.mrb[0].mxu0 %v569
    %v608 = vpop.f32.mrb[0].mxu0
    %v609 = vadd.f32 0.0, %v608
    %v610 = vpop.f32.mrb[0].mxu0
    %v611 = vadd.f32 0.0, %v610
    %v612 = vpop.f32.mrb[0].mxu0
    %v613 = vadd.f32 0.0, %v612
    %v614 = vpop.f32.mrb[0].mxu0
    %v615 = vadd.f32 0.0, %v614
    %616 = vmatprep.mubr.bf16.mxu0 0
    %617 = vmatmul.mubr.bf16.gmra.mrb[0].mxu0 %v572
    %v618 = vpop.f32.mrb[0].mxu0
    %v619 = vadd.f32 0.0, %v618
    %v620 = vpop.f32.mrb[0].mxu0
    %v621 = vadd.f32 0.0, %v620
    %v622 = vpop.f32.mrb[0].mxu0
    %v623 = vadd.f32 0.0, %v622
    %v624 = vpop.f32.mrb[0].mxu0
    %v625 = vadd.f32 0.0, %v624
    %626 = vdwg.mxu0
    %627 = vmatprep.subr.bf16.mxu0 %v555
    %628 = vmatpush1.bf16.msra.mxu0 %v554
    %629 = vmatprep.subr.bf16.mxu0 %v559
    %630 = vmatpush1.bf16.msra.mxu0 %v558
    %631 = vmatprep.subr.bf16.mxu0 0
    %632 = vmatpush1.bf16.msra.mxu0 0
    %633 = vmatprep.subr.bf16.mxu0 0
    %634 = vmatpush1.bf16.msra.mxu0 0
    %635 = vmatprep.subr.bf16.mxu0 0
    %636 = vmatpush1.bf16.msra.mxu0 0
    %637 = vmatprep.subr.bf16.mxu0 0
    %638 = vmatpush1.bf16.msra.mxu0 0
    %639 = vmatprep.subr.bf16.mxu0 0
    %640 = vmatpush1.bf16.msra.mxu0 0
    %641 = vmatprep.subr.bf16.mxu0 0
    %642 = vmatpush1.bf16.msra.mxu0 0
    %643 = vmatprep.subr.bf16.mxu0 0
    %644 = vmatpush1.bf16.msra.mxu0 0
    %645 = vmatprep.subr.bf16.mxu0 0
    %646 = vmatpush1.bf16.msra.mxu0 0
    %647 = vmatprep.subr.bf16.mxu0 0
    %648 = vmatpush1.bf16.msra.mxu0 0
    %649 = vmatprep.subr.bf16.mxu0 0
    %650 = vmatpush1.bf16.msra.mxu0 0
    %651 = vmatprep.subr.bf16.mxu0 0
    %652 = vmatpush1.bf16.msra.mxu0 0
    %653 = vmatprep.subr.bf16.mxu0 0
    %654 = vmatpush1.bf16.msra.mxu0 0
    %655 = vmatprep.subr.bf16.mxu0 0
    %656 = vmatpush1.bf16.msra.mxu0 0
    %657 = vmatprep.subr.bf16.mxu0 0
    %658 = vmatpush1.bf16.msra.mxu0 0
    %659 = vmatprep.mubr.bf16.mxu0 0
    %660 = vmatmul.mubr.bf16.gmra.mrb[0].mxu0 %v569
    %v661 = vpop.f32.mrb[0].mxu0
    %v662 = vadd.f32 0.0, %v661
    %v663 = vpop.f32.mrb[0].mxu0
    %v664 = vadd.f32 0.0, %v663
    %v665 = vpop.f32.mrb[0].mxu0
    %v666 = vadd.f32 0.0, %v665
    %v667 = vpop.f32.mrb[0].mxu0
    %v668 = vadd.f32 0.0, %v667
    %669 = vmatprep.mubr.bf16.mxu0 0
    %670 = vmatmul.mubr.bf16.gmra.mrb[0].mxu0 %v572
    %v671 = vpop.f32.mrb[0].mxu0
    %v672 = vadd.f32 0.0, %v671
    %v673 = vpop.f32.mrb[0].mxu0
    %v674 = vadd.f32 0.0, %v673
    %v675 = vpop.f32.mrb[0].mxu0
    %v676 = vadd.f32 0.0, %v675
    %v677 = vpop.f32.mrb[0].mxu0
    %v678 = vadd.f32 0.0, %v677
    %679 = vdwg.mxu0
    %v680 = vadd.f32 %v423, %v609
    %v681 = vadd.f32 %v425, %v611
    %v682 = vadd.f32 %v476, %v662
    %v683 = vadd.f32 %v478, %v664
    %v684 = vadd.f32 %v427, %v613
    %v685 = vadd.f32 %v429, %v615
    %v686 = vadd.f32 %v480, %v666
    %v687 = vadd.f32 %v482, %v668
    %v688 = vadd.f32 %v433, %v619
    %v689 = vadd.f32 %v435, %v621
    %v690 = vadd.f32 %v486, %v672
    %v691 = vadd.f32 %v488, %v674
    %v692 = vadd.f32 %v437, %v623
    %v693 = vadd.f32 %v439, %v625
    %v694 = vadd.f32 %v490, %v676
    %v695 = vadd.f32 %v492, %v678
    %vm696 = vsmask.f32 2304
    %vm697 = vsmask.f32 6416
    %vm698 = vmor %vm696, %vm697
    %v699 = vrot.slane %v117, 5
    %v700 = vrot.slane %v120, 6
    %v701 = vor.u32 %v699, %v700
    %v702 = vrot.slane %v701, 4
    %v703 = vrot.slane %v130, 5
    %v704 = vrot.slane %v126, 6
    %v705 = vor.u32 %v703, %v704
    %v706 = vsel %vm698, %v702, %v705
    %v707 = vrot.slane %v705, 4
    %v708 = vshrl.u32 %v101, 16
    %v710 = vrot.slane %v708, 5
    %v711 = vrot.slane %v136, 6
    %v712 = vor.u32 %v710, %v711
    %v713 = vsel %vm698, %v707, %v712
    %v714 = vrot.slane %v141, 5
    %v715 = vrot.slane %v144, 6
    %v716 = vor.u32 %v714, %v715
    %v717 = vrot.slane %v716, 4
    %v718 = vrot.slane %v154, 5
    %v719 = vrot.slane %v150, 6
    %v720 = vor.u32 %v718, %v719
    %v721 = vsel %vm698, %v717, %v720
    %v722 = vrot.slane %v720, 4
    %v723 = vshrl.u32 %v104, 16
    %v725 = vrot.slane %v723, 5
    %v726 = vrot.slane %v160, 6
    %v727 = vor.u32 %v725, %v726
    %v728 = vsel %vm698, %v722, %v727
    %s729 = scalar_lea.vmem [#allocation5], 192
    %v730 = vld [vmem:[%s729] sm:$0xff]
    %v731 = vld [vmem:[%s729 + $0x8] sm:$0xff]
    %v732 = vld [vmem:[%s729 + $0x10] sm:$0xff]
    %v733 = vld [vmem:[%s729 + $0x18] sm:$0xff]
    %v734 = vld [vmem:[%s729 + $0x20] sm:$0xff]
    %v735 = vld [vmem:[%s729 + $0x28] sm:$0xff]
    %v736 = vld [vmem:[%s729 + $0x30] sm:$0xff]
    %v737 = vld [vmem:[%s729 + $0x38] sm:$0xff]
    %v738 = vunpack.c.l.b16 %v706
    %v739 = vunpack.c.l.b16 %v713
    %v740 = vunpack.c.l.b16 %v721
    %v741 = vunpack.c.l.b16 %v728
    %v742 = vpack.c.b16 %v739, %v738
    %v743 = vpack.c.b16 %v741, %v740
    %v752 = vunpack.c.l.b16 %v730
    %v753 = vunpack.c.h.b16 %v730
    %v754 = vunpack.c.l.b16 %v731
    %v755 = vunpack.c.h.b16 %v731
    %v756 = vunpack.c.l.b16 %v732
    %v757 = vunpack.c.h.b16 %v732
    %v758 = vunpack.c.l.b16 %v733
    %v759 = vunpack.c.h.b16 %v733
    %v760 = vunpack.c.l.b16 %v734
    %v761 = vunpack.c.h.b16 %v734
    %v762 = vunpack.c.l.b16 %v735
    %v763 = vunpack.c.h.b16 %v735
    %v764 = vunpack.c.l.b16 %v736
    %v765 = vunpack.c.h.b16 %v736
    %v766 = vunpack.c.l.b16 %v737
    %v767 = vunpack.c.h.b16 %v737
    %v768 = vpack.c.b16 %v756, %v752
    %v769 = vpack.c.b16 %v757, %v753
    %v770 = vpack.c.b16 %v758, %v754
    %v771 = vpack.c.b16 %v759, %v755
    %v772 = vpack.c.b16 %v764, %v760
    %v773 = vpack.c.b16 %v765, %v761
    %v774 = vpack.c.b16 %v766, %v762
    %v775 = vpack.c.b16 %v767, %v763
    %v785 = vsel %vm219, %v742, 0
    %v788 = vsel %vm219, %v743, 0
    %790 = vmatprep.subr.bf16.mxu0 %v769
    %791 = vmatpush1.bf16.msra.mxu0 %v768
    %792 = vmatprep.subr.bf16.mxu0 %v773
    %793 = vmatpush1.bf16.msra.mxu0 %v772
    %794 = vmatprep.subr.bf16.mxu0 0
    %795 = vmatpush1.bf16.msra.mxu0 0
    %796 = vmatprep.subr.bf16.mxu0 0
    %797 = vmatpush1.bf16.msra.mxu0 0
    %798 = vmatprep.subr.bf16.mxu0 0
    %799 = vmatpush1.bf16.msra.mxu0 0
    %800 = vmatprep.subr.bf16.mxu0 0
    %801 = vmatpush1.bf16.msra.mxu0 0
    %802 = vmatprep.subr.bf16.mxu0 0
    %803 = vmatpush1.bf16.msra.mxu0 0
    %804 = vmatprep.subr.bf16.mxu0 0
    %805 = vmatpush1.bf16.msra.mxu0 0
    %806 = vmatprep.subr.bf16.mxu0 0
    %807 = vmatpush1.bf16.msra.mxu0 0
    %808 = vmatprep.subr.bf16.mxu0 0
    %809 = vmatpush1.bf16.msra.mxu0 0
    %810 = vmatprep.subr.bf16.mxu0 0
    %811 = vmatpush1.bf16.msra.mxu0 0
    %812 = vmatprep.subr.bf16.mxu0 0
    %813 = vmatpush1.bf16.msra.mxu0 0
    %814 = vmatprep.subr.bf16.mxu0 0
    %815 = vmatpush1.bf16.msra.mxu0 0
    %816 = vmatprep.subr.bf16.mxu0 0
    %817 = vmatpush1.bf16.msra.mxu0 0
    %818 = vmatprep.subr.bf16.mxu0 0
    %819 = vmatpush1.bf16.msra.mxu0 0
    %820 = vmatprep.subr.bf16.mxu0 0
    %821 = vmatpush1.bf16.msra.mxu0 0
    %822 = vmatprep.mubr.bf16.mxu0 0
    %823 = vmatmul.mubr.bf16.gmra.mrb[0].mxu0 %v785
    %v824 = vpop.f32.mrb[0].mxu0
    %v825 = vadd.f32 0.0, %v824
    %v826 = vpop.f32.mrb[0].mxu0
    %v827 = vadd.f32 0.0, %v826
    %v828 = vpop.f32.mrb[0].mxu0
    %v829 = vadd.f32 0.0, %v828
    %v830 = vpop.f32.mrb[0].mxu0
    %v831 = vadd.f32 0.0, %v830
    %832 = vmatprep.mubr.bf16.mxu0 0
    %833 = vmatmul.mubr.bf16.gmra.mrb[0].mxu0 %v788
    %v834 = vpop.f32.mrb[0].mxu0
    %v835 = vadd.f32 0.0, %v834
    %v836 = vpop.f32.mrb[0].mxu0
    %v837 = vadd.f32 0.0, %v836
    %v838 = vpop.f32.mrb[0].mxu0
    %v839 = vadd.f32 0.0, %v838
    %v840 = vpop.f32.mrb[0].mxu0
    %v841 = vadd.f32 0.0, %v840
    %842 = vdwg.mxu0
    %843 = vmatprep.subr.bf16.mxu0 %v771
    %844 = vmatpush1.bf16.msra.mxu0 %v770
    %845 = vmatprep.subr.bf16.mxu0 %v775
    %846 = vmatpush1.bf16.msra.mxu0 %v774
    %847 = vmatprep.subr.bf16.mxu0 0
    %848 = vmatpush1.bf16.msra.mxu0 0
    %849 = vmatprep.subr.bf16.mxu0 0
    %850 = vmatpush1.bf16.msra.mxu0 0
    %851 = vmatprep.subr.bf16.mxu0 0
    %852 = vmatpush1.bf16.msra.mxu0 0
    %853 = vmatprep.subr.bf16.mxu0 0
    %854 = vmatpush1.bf16.msra.mxu0 0
    %855 = vmatprep.subr.bf16.mxu0 0
    %856 = vmatpush1.bf16.msra.mxu0 0
    %857 = vmatprep.subr.bf16.mxu0 0
    %858 = vmatpush1.bf16.msra.mxu0 0
    %859 = vmatprep.subr.bf16.mxu0 0
    %860 = vmatpush1.bf16.msra.mxu0 0
    %861 = vmatprep.subr.bf16.mxu0 0
    %862 = vmatpush1.bf16.msra.mxu0 0
    %863 = vmatprep.subr.bf16.mxu0 0
    %864 = vmatpush1.bf16.msra.mxu0 0
    %865 = vmatprep.subr.bf16.mxu0 0
    %866 = vmatpush1.bf16.msra.mxu0 0
    %867 = vmatprep.subr.bf16.mxu0 0
    %868 = vmatpush1.bf16.msra.mxu0 0
    %869 = vmatprep.subr.bf16.mxu0 0
    %870 = vmatpush1.bf16.msra.mxu0 0
    %871 = vmatprep.subr.bf16.mxu0 0
    %872 = vmatpush1.bf16.msra.mxu0 0
    %873 = vmatprep.subr.bf16.mxu0 0
    %874 = vmatpush1.bf16.msra.mxu0 0
    %875 = vmatprep.mubr.bf16.mxu0 0
    %876 = vmatmul.mubr.bf16.gmra.mrb[0].mxu0 %v785
    %v877 = vpop.f32.mrb[0].mxu0
    %v878 = vadd.f32 0.0, %v877
    %v879 = vpop.f32.mrb[0].mxu0
    %v880 = vadd.f32 0.0, %v879
    %v881 = vpop.f32.mrb[0].mxu0
    %v882 = vadd.f32 0.0, %v881
    %v883 = vpop.f32.mrb[0].mxu0
    %v884 = vadd.f32 0.0, %v883
    %885 = vmatprep.mubr.bf16.mxu0 0
    %886 = vmatmul.mubr.bf16.gmra.mrb[0].mxu0 %v788
    %v887 = vpop.f32.mrb[0].mxu0
    %v888 = vadd.f32 0.0, %v887
    %v889 = vpop.f32.mrb[0].mxu0
    %v890 = vadd.f32 0.0, %v889
    %v891 = vpop.f32.mrb[0].mxu0
    %v892 = vadd.f32 0.0, %v891
    %v893 = vpop.f32.mrb[0].mxu0
    %v894 = vadd.f32 0.0, %v893
    %895 = vdwg.mxu0
    %v896 = vadd.f32 %v680, %v825
    %v897 = vadd.f32 %v681, %v827
    %v898 = vadd.f32 %v682, %v878
    %v899 = vadd.f32 %v683, %v880
    %v900 = vadd.f32 %v684, %v829
    %v901 = vadd.f32 %v685, %v831
    %v902 = vadd.f32 %v686, %v882
    %v903 = vadd.f32 %v687, %v884
    %v904 = vadd.f32 %v688, %v835
    %v905 = vadd.f32 %v689, %v837
    %v906 = vadd.f32 %v690, %v888
    %v907 = vadd.f32 %v691, %v890
    %v908 = vadd.f32 %v692, %v839
    %v909 = vadd.f32 %v693, %v841
    %v910 = vadd.f32 %v694, %v892
    %v911 = vadd.f32 %v695, %v894
    %vm912 = vcmask 1041408
    %vm913 = vcmask 1045508
    %vm914 = vmor %vm912, %vm913
    %v915 = vrot.slane %v99, 6
    %v916 = vrot.slane %v915, 4
    %v917 = vrot.slane %v100, 6
    %v918 = vsel %vm914, %v916, %v917
    %v919 = vrot.slane %v917, 4
    %v920 = vrot.slane %v101, 6
    %v921 = vsel %vm914, %v919, %v920
    %v922 = vrot.slane %v102, 6
    %v923 = vrot.slane %v922, 4
    %v924 = vrot.slane %v103, 6
    %v925 = vsel %vm914, %v923, %v924
    %v926 = vrot.slane %v924, 4
    %v927 = vrot.slane %v104, 6
    %v928 = vsel %vm914, %v926, %v927
    %s929 = scalar_lea.vmem [#allocation5], 256
    %v930 = vld [vmem:[%s929] sm:$0xff]
    %v931 = vld [vmem:[%s929 + $0x8] sm:$0xff]
    %v932 = vld [vmem:[%s929 + $0x10] sm:$0xff]
    %v933 = vld [vmem:[%s929 + $0x18] sm:$0xff]
    %v934 = vld [vmem:[%s929 + $0x20] sm:$0xff]
    %v935 = vld [vmem:[%s929 + $0x28] sm:$0xff]
    %v936 = vld [vmem:[%s929 + $0x30] sm:$0xff]
    %v937 = vld [vmem:[%s929 + $0x38] sm:$0xff]
    %v938 = vunpack.c.l.b16 %v918
    %v939 = vunpack.c.l.b16 %v921
    %v940 = vunpack.c.l.b16 %v925
    %v941 = vunpack.c.l.b16 %v928
    %v942 = vpack.c.b16 %v939, %v938
    %v943 = vpack.c.b16 %v941, %v940
    %v952 = vunpack.c.l.b16 %v930
    %v953 = vunpack.c.h.b16 %v930
    %v954 = vunpack.c.l.b16 %v931
    %v955 = vunpack.c.h.b16 %v931
    %v956 = vunpack.c.l.b16 %v932
    %v957 = vunpack.c.h.b16 %v932
    %v958 = vunpack.c.l.b16 %v933
    %v959 = vunpack.c.h.b16 %v933
    %v960 = vunpack.c.l.b16 %v934
    %v961 = vunpack.c.h.b16 %v934
    %v962 = vunpack.c.l.b16 %v935
    %v963 = vunpack.c.h.b16 %v935
    %v964 = vunpack.c.l.b16 %v936
    %v965 = vunpack.c.h.b16 %v936
    %v966 = vunpack.c.l.b16 %v937
    %v967 = vunpack.c.h.b16 %v937
    %v968 = vpack.c.b16 %v956, %v952
    %v969 = vpack.c.b16 %v957, %v953
    %v970 = vpack.c.b16 %v958, %v954
    %v971 = vpack.c.b16 %v959, %v955
    %v972 = vpack.c.b16 %v964, %v960
    %v973 = vpack.c.b16 %v965, %v961
    %v974 = vpack.c.b16 %v966, %v962
    %v975 = vpack.c.b16 %v967, %v963
    %v985 = vsel %vm219, %v942, 0
    %v988 = vsel %vm219, %v943, 0
    %990 = vmatprep.subr.bf16.mxu0 %v969
    %991 = vmatpush1.bf16.msra.mxu0 %v968
    %992 = vmatprep.subr.bf16.mxu0 %v973
    %993 = vmatpush1.bf16.msra.mxu0 %v972
    %994 = vmatprep.subr.bf16.mxu0 0
    %995 = vmatpush1.bf16.msra.mxu0 0
    %996 = vmatprep.subr.bf16.mxu0 0
    %997 = vmatpush1.bf16.msra.mxu0 0
    %998 = vmatprep.subr.bf16.mxu0 0
    %999 = vmatpush1.bf16.msra.mxu0 0
    %1000 = vmatprep.subr.bf16.mxu0 0
    %1001 = vmatpush1.bf16.msra.mxu0 0
    %1002 = vmatprep.subr.bf16.mxu0 0
    %1003 = vmatpush1.bf16.msra.mxu0 0
    %1004 = vmatprep.subr.bf16.mxu0 0
    %1005 = vmatpush1.bf16.msra.mxu0 0
    %1006 = vmatprep.subr.bf16.mxu0 0
    %1007 = vmatpush1.bf16.msra.mxu0 0
    %1008 = vmatprep.subr.bf16.mxu0 0
    %1009 = vmatpush1.bf16.msra.mxu0 0
    %1010 = vmatprep.subr.bf16.mxu0 0
    %1011 = vmatpush1.bf16.msra.mxu0 0
    %1012 = vmatprep.subr.bf16.mxu0 0
    %1013 = vmatpush1.bf16.msra.mxu0 0
    %1014 = vmatprep.subr.bf16.mxu0 0
    %1015 = vmatpush1.bf16.msra.mxu0 0
    %1016 = vmatprep.subr.bf16.mxu0 0
    %1017 = vmatpush1.bf16.msra.mxu0 0
    %1018 = vmatprep.subr.bf16.mxu0 0
    %1019 = vmatpush1.bf16.msra.mxu0 0
    %1020 = vmatprep.subr.bf16.mxu0 0
    %1021 = vmatpush1.bf16.msra.mxu0 0
    %1022 = vmatprep.mubr.bf16.mxu0 0
    %1023 = vmatmul.mubr.bf16.gmra.mrb[0].mxu0 %v985
    %v1024 = vpop.f32.mrb[0].mxu0
    %v1025 = vadd.f32 0.0, %v1024
    %v1026 = vpop.f32.mrb[0].mxu0
    %v1027 = vadd.f32 0.0, %v1026
    %v1028 = vpop.f32.mrb[0].mxu0
    %v1029 = vadd.f32 0.0, %v1028
    %v1030 = vpop.f32.mrb[0].mxu0
    %v1031 = vadd.f32 0.0, %v1030
    %1032 = vmatprep.mubr.bf16.mxu0 0
    %1033 = vmatmul.mubr.bf16.gmra.mrb[0].mxu0 %v988
    %v1034 = vpop.f32.mrb[0].mxu0
    %v1035 = vadd.f32 0.0, %v1034
    %v1036 = vpop.f32.mrb[0].mxu0
    %v1037 = vadd.f32 0.0, %v1036
    %v1038 = vpop.f32.mrb[0].mxu0
    %v1039 = vadd.f32 0.0, %v1038
    %v1040 = vpop.f32.mrb[0].mxu0
    %v1041 = vadd.f32 0.0, %v1040
    %1042 = vdwg.mxu0
    %1043 = vmatprep.subr.bf16.mxu0 %v971
    %1044 = vmatpush1.bf16.msra.mxu0 %v970
    %1045 = vmatprep.subr.bf16.mxu0 %v975
    %1046 = vmatpush1.bf16.msra.mxu0 %v974
    %1047 = vmatprep.subr.bf16.mxu0 0
    %1048 = vmatpush1.bf16.msra.mxu0 0
    %1049 = vmatprep.subr.bf16.mxu0 0
    %1050 = vmatpush1.bf16.msra.mxu0 0
    %1051 = vmatprep.subr.bf16.mxu0 0
    %1052 = vmatpush1.bf16.msra.mxu0 0
    %1053 = vmatprep.subr.bf16.mxu0 0
    %1054 = vmatpush1.bf16.msra.mxu0 0
    %1055 = vmatprep.subr.bf16.mxu0 0
    %1056 = vmatpush1.bf16.msra.mxu0 0
    %1057 = vmatprep.subr.bf16.mxu0 0
    %1058 = vmatpush1.bf16.msra.mxu0 0
    %1059 = vmatprep.subr.bf16.mxu0 0
    %1060 = vmatpush1.bf16.msra.mxu0 0
    %1061 = vmatprep.subr.bf16.mxu0 0
    %1062 = vmatpush1.bf16.msra.mxu0 0
    %1063 = vmatprep.subr.bf16.mxu0 0
    %1064 = vmatpush1.bf16.msra.mxu0 0
    %1065 = vmatprep.subr.bf16.mxu0 0
    %1066 = vmatpush1.bf16.msra.mxu0 0
    %1067 = vmatprep.subr.bf16.mxu0 0
    %1068 = vmatpush1.bf16.msra.mxu0 0
    %1069 = vmatprep.subr.bf16.mxu0 0
    %1070 = vmatpush1.bf16.msra.mxu0 0
    %1071 = vmatprep.subr.bf16.mxu0 0
    %1072 = vmatpush1.bf16.msra.mxu0 0
    %1073 = vmatprep.subr.bf16.mxu0 0
    %1074 = vmatpush1.bf16.msra.mxu0 0
    %1075 = vmatprep.mubr.bf16.mxu0 0
    %1076 = vmatmul.mubr.bf16.gmra.mrb[0].mxu0 %v985
    %v1077 = vpop.f32.mrb[0].mxu0
    %v1078 = vadd.f32 0.0, %v1077
    %v1079 = vpop.f32.mrb[0].mxu0
    %v1080 = vadd.f32 0.0, %v1079
    %v1081 = vpop.f32.mrb[0].mxu0
    %v1082 = vadd.f32 0.0, %v1081
    %v1083 = vpop.f32.mrb[0].mxu0
    %v1084 = vadd.f32 0.0, %v1083
    %1085 = vmatprep.mubr.bf16.mxu0 0
    %1086 = vmatmul.mubr.bf16.gmra.mrb[0].mxu0 %v988
    %v1087 = vpop.f32.mrb[0].mxu0
    %v1088 = vadd.f32 0.0, %v1087
    %v1089 = vpop.f32.mrb[0].mxu0
    %v1090 = vadd.f32 0.0, %v1089
    %v1091 = vpop.f32.mrb[0].mxu0
    %v1092 = vadd.f32 0.0, %v1091
    %v1093 = vpop.f32.mrb[0].mxu0
    %v1094 = vadd.f32 0.0, %v1093
    %1095 = vdwg.mxu0
    %v1096 = vadd.f32 %v896, %v1025
    %v1097 = vadd.f32 %v897, %v1027
    %v1098 = vadd.f32 %v898, %v1078
    %v1099 = vadd.f32 %v899, %v1080
    %v1100 = vadd.f32 %v900, %v1029
    %v1101 = vadd.f32 %v901, %v1031
    %v1102 = vadd.f32 %v902, %v1082
    %v1103 = vadd.f32 %v903, %v1084
    %v1104 = vadd.f32 %v904, %v1035
    %v1105 = vadd.f32 %v905, %v1037
    %v1106 = vadd.f32 %v906, %v1088
    %v1107 = vadd.f32 %v907, %v1090
    %v1108 = vadd.f32 %v908, %v1039
    %v1109 = vadd.f32 %v909, %v1041
    %v1110 = vadd.f32 %v910, %v1092
    %v1111 = vadd.f32 %v911, %v1094
    %v1112 = vld [vmem:[%s2] sm:$0xf]
    %v1114 = vlaneseq
    %v1115 = vshrl.u32 %v1114, 7
    %v1116 = vsub.s32 0, %v1115
    %v1117 = vrot.slane %v1112, %v1116
    %v1118 = vlaneseq
    %v1119 = vshrl.u32 %v1118, 7
    %v1120 = vsub.s32 1, %v1119
    %v1121 = vrot.slane %v1112, %v1120
    %v1122 = vlaneseq
    %v1123 = vshrl.u32 %v1122, 7
    %v1124 = vsub.s32 2, %v1123
    %v1125 = vrot.slane %v1112, %v1124
    %v1126 = vlaneseq
    %v1127 = vshrl.u32 %v1126, 7
    %v1128 = vsub.s32 3, %v1127
    %v1129 = vrot.slane %v1112, %v1128
    %v1134 = vadd.f32 %v1096, %v1117
    %v1135 = vadd.f32 %v1097, %v1121
    %v1136 = vadd.f32 %v1098, %v1125
    %v1137 = vadd.f32 %v1099, %v1129
    %v1138 = vadd.f32 %v1100, %v1117
    %v1139 = vadd.f32 %v1101, %v1121
    %v1140 = vadd.f32 %v1102, %v1125
    %v1141 = vadd.f32 %v1103, %v1129
    %v1142 = vadd.f32 %v1104, %v1117
    %v1143 = vadd.f32 %v1105, %v1121
    %v1144 = vadd.f32 %v1106, %v1125
    %v1145 = vadd.f32 %v1107, %v1129
    %v1146 = vadd.f32 %v1108, %v1117
    %v1147 = vadd.f32 %v1109, %v1121
    %v1148 = vadd.f32 %v1110, %v1125
    %v1149 = vadd.f32 %v1111, %v1129
    %v1150 = vmax.f32 %v1134, 0.0
    %v1151 = vmax.f32 %v1135, 0.0
    %v1152 = vmax.f32 %v1136, 0.0
    %v1153 = vmax.f32 %v1137, 0.0
    %v1154 = vmax.f32 %v1138, 0.0
    %v1155 = vmax.f32 %v1139, 0.0
    %v1156 = vmax.f32 %v1140, 0.0
    %v1157 = vmax.f32 %v1141, 0.0
    %v1158 = vmax.f32 %v1142, 0.0
    %v1159 = vmax.f32 %v1143, 0.0
    %v1160 = vmax.f32 %v1144, 0.0
    %v1161 = vmax.f32 %v1145, 0.0
    %v1162 = vmax.f32 %v1146, 0.0
    %v1163 = vmax.f32 %v1147, 0.0
    %v1164 = vmax.f32 %v1148, 0.0
    %v1165 = vmax.f32 %v1149, 0.0
    %s1166 = smul.u32 0, 4
    %s1167 = smul.addr %s1166, 8
    %s1168 = scalar_lea.vmem [#allocation7], %s1167
    %v1169 = vld [vmem:[%s1168] sm:$0xff]
    %v1170 = vld [vmem:[%s1168 + $0x8] sm:$0xff]
    %v1171 = vld [vmem:[%s1168 + $0x10] sm:$0xff]
    %v1172 = vld [vmem:[%s1168 + $0x18] sm:$0xff]
    %v1173 = vld [vmem:[%s1168 + $0x20] sm:$0xff]
    %v1174 = vld [vmem:[%s1168 + $0x28] sm:$0xff]
    %v1175 = vld [vmem:[%s1168 + $0x30] sm:$0xff]
    %v1176 = vld [vmem:[%s1168 + $0x38] sm:$0xff]
    %v1177 = vmul.f32 %v1150, %v1169
    %v1178 = vmul.f32 %v1151, %v1170
    %v1179 = vmul.f32 %v1152, %v1171
    %v1180 = vmul.f32 %v1153, %v1172
    %v1181 = vmul.f32 %v1154, %v1173
    %v1182 = vmul.f32 %v1155, %v1174
    %v1183 = vmul.f32 %v1156, %v1175
    %v1184 = vmul.f32 %v1157, %v1176
    %v1185 = vmul.f32 %v1158, %v1169
    %v1186 = vmul.f32 %v1159, %v1170
    %v1187 = vmul.f32 %v1160, %v1171
    %v1188 = vmul.f32 %v1161, %v1172
    %v1189 = vmul.f32 %v1162, %v1173
    %v1190 = vmul.f32 %v1163, %v1174
    %v1191 = vmul.f32 %v1164, %v1175
    %v1192 = vmul.f32 %v1165, %v1176
    %v1193 = vmax.f32 %v1177, %v1181
    %v1194 = vrot.slane %v1193, 4
    %v1195 = vmax.f32 %v1193, %v1194
    %v1196 = vrot.slane %v1195, 2
    %v1197 = vmax.f32 %v1195, %v1196
    %v1198 = vrot.slane %v1197, 1
    %v1199 = vmax.f32 %v1197, %v1198
    %v1200 = vmax.f32 %v1178, %v1182
    %v1201 = vrot.slane %v1200, 4
    %v1202 = vmax.f32 %v1200, %v1201
    %v1203 = vrot.slane %v1202, 2
    %v1204 = vmax.f32 %v1202, %v1203
    %v1205 = vrot.slane %v1204, 1
    %v1206 = vmax.f32 %v1204, %v1205
    %v1207 = vmax.f32 %v1179, %v1183
    %v1208 = vrot.slane %v1207, 4
    %v1209 = vmax.f32 %v1207, %v1208
    %v1210 = vrot.slane %v1209, 2
    %v1211 = vmax.f32 %v1209, %v1210
    %v1212 = vrot.slane %v1211, 1
    %v1213 = vmax.f32 %v1211, %v1212
    %v1214 = vmax.f32 %v1180, %v1184
    %v1215 = vrot.slane %v1214, 4
    %v1216 = vmax.f32 %v1214, %v1215
    %v1217 = vrot.slane %v1216, 2
    %v1218 = vmax.f32 %v1216, %v1217
    %v1219 = vrot.slane %v1218, 1
    %v1220 = vmax.f32 %v1218, %v1219
    %v1221 = vmax.f32 %v1185, %v1189
    %v1222 = vrot.slane %v1221, 4
    %v1223 = vmax.f32 %v1221, %v1222
    %v1224 = vrot.slane %v1223, 2
    %v1225 = vmax.f32 %v1223, %v1224
    %v1226 = vrot.slane %v1225, 1
    %v1227 = vmax.f32 %v1225, %v1226
    %v1228 = vmax.f32 %v1186, %v1190
    %v1229 = vrot.slane %v1228, 4
    %v1230 = vmax.f32 %v1228, %v1229
    %v1231 = vrot.slane %v1230, 2
    %v1232 = vmax.f32 %v1230, %v1231
    %v1233 = vrot.slane %v1232, 1
    %v1234 = vmax.f32 %v1232, %v1233
    %v1235 = vmax.f32 %v1187, %v1191
    %v1236 = vrot.slane %v1235, 4
    %v1237 = vmax.f32 %v1235, %v1236
    %v1238 = vrot.slane %v1237, 2
    %v1239 = vmax.f32 %v1237, %v1238
    %v1240 = vrot.slane %v1239, 1
    %v1241 = vmax.f32 %v1239, %v1240
    %v1242 = vmax.f32 %v1188, %v1192
    %v1243 = vrot.slane %v1242, 4
    %v1244 = vmax.f32 %v1242, %v1243
    %v1245 = vrot.slane %v1244, 2
    %v1246 = vmax.f32 %v1244, %v1245
    %v1247 = vrot.slane %v1246, 1
    %v1248 = vmax.f32 %v1246, %v1247
    %v1249 = vmax.f32 %v1199, 0.0
    %v1250 = vmax.f32 %v1206, 0.0
    %v1251 = vmax.f32 %v1213, 0.0
    %v1252 = vmax.f32 %v1220, 0.0
    %v1253 = vmax.f32 %v1227, 0.0
    %v1254 = vmax.f32 %v1234, 0.0
    %v1255 = vmax.f32 %v1241, 0.0
    %v1256 = vmax.f32 %v1248, 0.0
    %v1257 = vpack.c.bf16 %v1249, %v1249
    %v1258 = vpack.c.bf16 %v1250, %v1250
    %v1259 = vpack.c.bf16 %v1251, %v1251
    %v1260 = vpack.c.bf16 %v1252, %v1252
    %v1261 = vpack.c.bf16 %v1253, %v1253
    %v1262 = vpack.c.bf16 %v1254, %v1254
    %v1263 = vpack.c.bf16 %v1255, %v1255
    %v1264 = vpack.c.bf16 %v1256, %v1256
    %v1265 = vld [vmem:[#allocation8] sm:$0xff]
    %v1266 = vld [vmem:[#allocation8 + $0x8] sm:$0xff]
    %v1267 = vld [vmem:[#allocation8 + $0x10] sm:$0xff]
    %v1268 = vld [vmem:[#allocation8 + $0x18] sm:$0xff]
    %v1269 = vld [vmem:[#allocation8 + $0x20] sm:$0xff]
    %v1270 = vld [vmem:[#allocation8 + $0x28] sm:$0xff]
    %v1271 = vld [vmem:[#allocation8 + $0x30] sm:$0xff]
    %v1272 = vld [vmem:[#allocation8 + $0x38] sm:$0xff]
    %v1273 = vld [vmem:[#allocation8 + $0x40] sm:$0xff]
    %v1274 = vld [vmem:[#allocation8 + $0x48] sm:$0xff]
    %v1275 = vld [vmem:[#allocation8 + $0x50] sm:$0xff]
    %v1276 = vld [vmem:[#allocation8 + $0x58] sm:$0xff]
    %v1277 = vld [vmem:[#allocation8 + $0x60] sm:$0xff]
    %v1278 = vld [vmem:[#allocation8 + $0x68] sm:$0xff]
    %v1279 = vld [vmem:[#allocation8 + $0x70] sm:$0xff]
    %v1280 = vld [vmem:[#allocation8 + $0x78] sm:$0xff]
    %v1281 = vld [vmem:[#allocation8 + $0x80] sm:$0xff]
    %v1282 = vld [vmem:[#allocation8 + $0x88] sm:$0xff]
    %v1283 = vld [vmem:[#allocation8 + $0x90] sm:$0xff]
    %v1284 = vld [vmem:[#allocation8 + $0x98] sm:$0xff]
    %v1285 = vld [vmem:[#allocation8 + $0xa0] sm:$0xff]
    %v1286 = vld [vmem:[#allocation8 + $0xa8] sm:$0xff]
    %v1287 = vld [vmem:[#allocation8 + $0xb0] sm:$0xff]
    %v1288 = vld [vmem:[#allocation8 + $0xb8] sm:$0xff]
    %v1289 = vld [vmem:[#allocation8 + $0xc0] sm:$0xff]
    %v1290 = vld [vmem:[#allocation8 + $0xc8] sm:$0xff]
    %v1291 = vld [vmem:[#allocation8 + $0xd0] sm:$0xff]
    %v1292 = vld [vmem:[#allocation8 + $0xd8] sm:$0xff]
    %v1293 = vld [vmem:[#allocation8 + $0xe0] sm:$0xff]
    %v1294 = vld [vmem:[#allocation8 + $0xe8] sm:$0xff]
    %v1295 = vld [vmem:[#allocation8 + $0xf0] sm:$0xff]
    %v1296 = vld [vmem:[#allocation8 + $0xf8] sm:$0xff]
    %v1297 = vld [vmem:[#allocation8 + $0x100] sm:$0xff]
    %v1298 = vld [vmem:[#allocation8 + $0x108] sm:$0xff]
    %v1299 = vld [vmem:[#allocation8 + $0x110] sm:$0xff]
    %v1300 = vld [vmem:[#allocation8 + $0x118] sm:$0xff]
    %v1301 = vld [vmem:[#allocation8 + $0x120] sm:$0xff]
    %v1302 = vld [vmem:[#allocation8 + $0x128] sm:$0xff]
    %v1303 = vld [vmem:[#allocation8 + $0x130] sm:$0xff]
    %v1304 = vld [vmem:[#allocation8 + $0x138] sm:$0xff]
    %v1305 = vld [vmem:[#allocation8 + $0x140] sm:$0xff]
    %v1306 = vld [vmem:[#allocation8 + $0x148] sm:$0xff]
    %v1307 = vld [vmem:[#allocation8 + $0x150] sm:$0xff]
    %v1308 = vld [vmem:[#allocation8 + $0x158] sm:$0xff]
    %v1309 = vld [vmem:[#allocation8 + $0x160] sm:$0xff]
    %v1310 = vld [vmem:[#allocation8 + $0x168] sm:$0xff]
    %v1311 = vld [vmem:[#allocation8 + $0x170] sm:$0xff]
    %v1312 = vld [vmem:[#allocation8 + $0x178] sm:$0xff]
    %v1313 = vld [vmem:[#allocation8 + $0x180] sm:$0xff]
    %v1314 = vld [vmem:[#allocation8 + $0x188] sm:$0xff]
    %v1315 = vld [vmem:[#allocation8 + $0x190] sm:$0xff]
    %v1316 = vld [vmem:[#allocation8 + $0x198] sm:$0xff]
    %v1317 = vld [vmem:[#allocation8 + $0x1a0] sm:$0xff]
    %v1318 = vld [vmem:[#allocation8 + $0x1a8] sm:$0xff]
    %v1319 = vld [vmem:[#allocation8 + $0x1b0] sm:$0xff]
    %v1320 = vld [vmem:[#allocation8 + $0x1b8] sm:$0xff]
    %v1321 = vld [vmem:[#allocation8 + $0x1c0] sm:$0xff]
    %v1322 = vld [vmem:[#allocation8 + $0x1c8] sm:$0xff]
    %v1323 = vld [vmem:[#allocation8 + $0x1d0] sm:$0xff]
    %v1324 = vld [vmem:[#allocation8 + $0x1d8] sm:$0xff]
    %v1325 = vld [vmem:[#allocation8 + $0x1e0] sm:$0xff]
    %v1326 = vld [vmem:[#allocation8 + $0x1e8] sm:$0xff]
    %v1327 = vld [vmem:[#allocation8 + $0x1f0] sm:$0xff]
    %v1328 = vld [vmem:[#allocation8 + $0x1f8] sm:$0xff]
    %v1329 = vld [vmem:[#allocation8 + $0x200] sm:$0xff]
    %v1330 = vld [vmem:[#allocation8 + $0x208] sm:$0xff]
    %v1331 = vld [vmem:[#allocation8 + $0x210] sm:$0xff]
    %v1332 = vld [vmem:[#allocation8 + $0x218] sm:$0xff]
    %v1333 = vld [vmem:[#allocation8 + $0x220] sm:$0xff]
    %v1334 = vld [vmem:[#allocation8 + $0x228] sm:$0xff]
    %v1335 = vld [vmem:[#allocation8 + $0x230] sm:$0xff]
    %v1336 = vld [vmem:[#allocation8 + $0x238] sm:$0xff]
    %v1337 = vld [vmem:[#allocation8 + $0x240] sm:$0xff]
    %v1338 = vld [vmem:[#allocation8 + $0x248] sm:$0xff]
    %v1339 = vld [vmem:[#allocation8 + $0x250] sm:$0xff]
    %v1340 = vld [vmem:[#allocation8 + $0x258] sm:$0xff]
    %v1341 = vld [vmem:[#allocation8 + $0x260] sm:$0xff]
    %v1342 = vld [vmem:[#allocation8 + $0x268] sm:$0xff]
    %v1343 = vld [vmem:[#allocation8 + $0x270] sm:$0xff]
    %v1344 = vld [vmem:[#allocation8 + $0x278] sm:$0xff]
    %v1345 = vld [vmem:[#allocation8 + $0x280] sm:$0xff]
    %v1346 = vld [vmem:[#allocation8 + $0x288] sm:$0xff]
    %v1347 = vld [vmem:[#allocation8 + $0x290] sm:$0xff]
    %v1348 = vld [vmem:[#allocation8 + $0x298] sm:$0xff]
    %v1349 = vld [vmem:[#allocation8 + $0x2a0] sm:$0xff]
    %v1350 = vld [vmem:[#allocation8 + $0x2a8] sm:$0xff]
    %v1351 = vld [vmem:[#allocation8 + $0x2b0] sm:$0xff]
    %v1352 = vld [vmem:[#allocation8 + $0x2b8] sm:$0xff]
    %v1353 = vld [vmem:[#allocation8 + $0x2c0] sm:$0xff]
    %v1354 = vld [vmem:[#allocation8 + $0x2c8] sm:$0xff]
    %v1355 = vld [vmem:[#allocation8 + $0x2d0] sm:$0xff]
    %v1356 = vld [vmem:[#allocation8 + $0x2d8] sm:$0xff]
    %v1357 = vld [vmem:[#allocation8 + $0x2e0] sm:$0xff]
    %v1358 = vld [vmem:[#allocation8 + $0x2e8] sm:$0xff]
    %v1359 = vld [vmem:[#allocation8 + $0x2f0] sm:$0xff]
    %v1360 = vld [vmem:[#allocation8 + $0x2f8] sm:$0xff]
    %v1361 = vld [vmem:[#allocation8 + $0x300] sm:$0xff]
    %v1362 = vld [vmem:[#allocation8 + $0x308] sm:$0xff]
    %v1363 = vld [vmem:[#allocation8 + $0x310] sm:$0xff]
    %v1364 = vld [vmem:[#allocation8 + $0x318] sm:$0xff]
    %v1365 = vld [vmem:[#allocation8 + $0x320] sm:$0xff]
    %v1366 = vld [vmem:[#allocation8 + $0x328] sm:$0xff]
    %v1367 = vld [vmem:[#allocation8 + $0x330] sm:$0xff]
    %v1368 = vld [vmem:[#allocation8 + $0x338] sm:$0xff]
    %v1369 = vld [vmem:[#allocation8 + $0x340] sm:$0xff]
    %v1370 = vld [vmem:[#allocation8 + $0x348] sm:$0xff]
    %v1371 = vld [vmem:[#allocation8 + $0x350] sm:$0xff]
    %v1372 = vld [vmem:[#allocation8 + $0x358] sm:$0xff]
    %v1373 = vld [vmem:[#allocation8 + $0x360] sm:$0xff]
    %v1374 = vld [vmem:[#allocation8 + $0x368] sm:$0xff]
    %v1375 = vld [vmem:[#allocation8 + $0x370] sm:$0xff]
    %v1376 = vld [vmem:[#allocation8 + $0x378] sm:$0xff]
    %v1377 = vld [vmem:[#allocation8 + $0x380] sm:$0xff]
    %v1378 = vld [vmem:[#allocation8 + $0x388] sm:$0xff]
    %v1379 = vld [vmem:[#allocation8 + $0x390] sm:$0xff]
    %v1380 = vld [vmem:[#allocation8 + $0x398] sm:$0xff]
    %v1381 = vld [vmem:[#allocation8 + $0x3a0] sm:$0xff]
    %v1382 = vld [vmem:[#allocation8 + $0x3a8] sm:$0xff]
    %v1383 = vld [vmem:[#allocation8 + $0x3b0] sm:$0xff]
    %v1384 = vld [vmem:[#allocation8 + $0x3b8] sm:$0xff]
    %v1385 = vld [vmem:[#allocation8 + $0x3c0] sm:$0xff]
    %v1386 = vld [vmem:[#allocation8 + $0x3c8] sm:$0xff]
    %v1387 = vld [vmem:[#allocation8 + $0x3d0] sm:$0xff]
    %v1388 = vld [vmem:[#allocation8 + $0x3d8] sm:$0xff]
    %v1389 = vld [vmem:[#allocation8 + $0x3e0] sm:$0xff]
    %v1390 = vld [vmem:[#allocation8 + $0x3e8] sm:$0xff]
    %v1391 = vld [vmem:[#allocation8 + $0x3f0] sm:$0xff]
    %v1392 = vld [vmem:[#allocation8 + $0x3f8] sm:$0xff]
    %v1393 = vld [vmem:[%s5] sm:$0xf]
    %v1395 = vlaneseq
    %v1396 = vshrl.u32 %v1395, 7
    %v1397 = vsub.s32 0, %v1396
    %v1398 = vrot.slane %v1393, %v1397
    %v1399 = vlaneseq
    %v1400 = vshrl.u32 %v1399, 7
    %v1401 = vsub.s32 1, %v1400
    %v1402 = vrot.slane %v1393, %v1401
    %v1403 = vlaneseq
    %v1404 = vshrl.u32 %v1403, 7
    %v1405 = vsub.s32 2, %v1404
    %v1406 = vrot.slane %v1393, %v1405
    %v1407 = vlaneseq
    %v1408 = vshrl.u32 %v1407, 7
    %v1409 = vsub.s32 3, %v1408
    %v1410 = vrot.slane %v1393, %v1409
    %v1423 = vunpack.c.l.b16 %v1257
    %v1424 = vunpack.c.l.b16 %v1258
    %v1425 = vunpack.c.l.b16 %v1259
    %v1426 = vunpack.c.l.b16 %v1260
    %v1427 = vunpack.c.l.b16 %v1261
    %v1428 = vunpack.c.l.b16 %v1262
    %v1429 = vunpack.c.l.b16 %v1263
    %v1430 = vunpack.c.l.b16 %v1264
    %vm1431 = vcmask 1041409
    %v1432 = vsel %vm1431, %v1427, %v1423
    %v1433 = vsel %vm1431, %v1428, %v1424
    %v1434 = vsel %vm1431, %v1429, %v1425
    %v1435 = vsel %vm1431, %v1430, %v1426
    %v1436 = vpack.c.b16 %v1432, %v1432
    %v1437 = vpack.c.b16 %v1433, %v1433
    %v1438 = vpack.c.b16 %v1434, %v1434
    %v1439 = vpack.c.b16 %v1435, %v1435
    %v1572 = vunpack.c.l.b16 %v1265
    %v1573 = vunpack.c.h.b16 %v1265
    %v1574 = vunpack.c.l.b16 %v1266
    %v1575 = vunpack.c.h.b16 %v1266
    %v1576 = vunpack.c.l.b16 %v1267
    %v1577 = vunpack.c.h.b16 %v1267
    %v1578 = vunpack.c.l.b16 %v1268
    %v1579 = vunpack.c.h.b16 %v1268
    %v1580 = vunpack.c.l.b16 %v1269
    %v1581 = vunpack.c.h.b16 %v1269
    %v1582 = vunpack.c.l.b16 %v1270
    %v1583 = vunpack.c.h.b16 %v1270
    %v1584 = vunpack.c.l.b16 %v1271
    %v1585 = vunpack.c.h.b16 %v1271
    %v1586 = vunpack.c.l.b16 %v1272
    %v1587 = vunpack.c.h.b16 %v1272
    %v1588 = vunpack.c.l.b16 %v1273
    %v1589 = vunpack.c.h.b16 %v1273
    %v1590 = vunpack.c.l.b16 %v1274
    %v1591 = vunpack.c.h.b16 %v1274
    %v1592 = vunpack.c.l.b16 %v1275
    %v1593 = vunpack.c.h.b16 %v1275
    %v1594 = vunpack.c.l.b16 %v1276
    %v1595 = vunpack.c.h.b16 %v1276
    %v1596 = vunpack.c.l.b16 %v1277
    %v1597 = vunpack.c.h.b16 %v1277
    %v1598 = vunpack.c.l.b16 %v1278
    %v1599 = vunpack.c.h.b16 %v1278
    %v1600 = vunpack.c.l.b16 %v1279
    %v1601 = vunpack.c.h.b16 %v1279
    %v1602 = vunpack.c.l.b16 %v1280
    %v1603 = vunpack.c.h.b16 %v1280
    %v1604 = vunpack.c.l.b16 %v1281
    %v1605 = vunpack.c.h.b16 %v1281
    %v1606 = vunpack.c.l.b16 %v1282
    %v1607 = vunpack.c.h.b16 %v1282
    %v1608 = vunpack.c.l.b16 %v1283
    %v1609 = vunpack.c.h.b16 %v1283
    %v1610 = vunpack.c.l.b16 %v1284
    %v1611 = vunpack.c.h.b16 %v1284
    %v1612 = vunpack.c.l.b16 %v1285
    %v1613 = vunpack.c.h.b16 %v1285
    %v1614 = vunpack.c.l.b16 %v1286
    %v1615 = vunpack.c.h.b16 %v1286
    %v1616 = vunpack.c.l.b16 %v1287
    %v1617 = vunpack.c.h.b16 %v1287
    %v1618 = vunpack.c.l.b16 %v1288
    %v1619 = vunpack.c.h.b16 %v1288
    %v1620 = vunpack.c.l.b16 %v1289
    %v1621 = vunpack.c.h.b16 %v1289
    %v1622 = vunpack.c.l.b16 %v1290
    %v1623 = vunpack.c.h.b16 %v1290
    %v1624 = vunpack.c.l.b16 %v1291
    %v1625 = vunpack.c.h.b16 %v1291
    %v1626 = vunpack.c.l.b16 %v1292
    %v1627 = vunpack.c.h.b16 %v1292
    %v1628 = vunpack.c.l.b16 %v1293
    %v1629 = vunpack.c.h.b16 %v1293
    %v1630 = vunpack.c.l.b16 %v1294
    %v1631 = vunpack.c.h.b16 %v1294
    %v1632 = vunpack.c.l.b16 %v1295
    %v1633 = vunpack.c.h.b16 %v1295
    %v1634 = vunpack.c.l.b16 %v1296
    %v1635 = vunpack.c.h.b16 %v1296
    %v1636 = vunpack.c.l.b16 %v1297
    %v1637 = vunpack.c.h.b16 %v1297
    %v1638 = vunpack.c.l.b16 %v1298
    %v1639 = vunpack.c.h.b16 %v1298
    %v1640 = vunpack.c.l.b16 %v1299
    %v1641 = vunpack.c.h.b16 %v1299
    %v1642 = vunpack.c.l.b16 %v1300
    %v1643 = vunpack.c.h.b16 %v1300
    %v1644 = vunpack.c.l.b16 %v1301
    %v1645 = vunpack.c.h.b16 %v1301
    %v1646 = vunpack.c.l.b16 %v1302
    %v1647 = vunpack.c.h.b16 %v1302
    %v1648 = vunpack.c.l.b16 %v1303
    %v1649 = vunpack.c.h.b16 %v1303
    %v1650 = vunpack.c.l.b16 %v1304
    %v1651 = vunpack.c.h.b16 %v1304
    %v1652 = vunpack.c.l.b16 %v1305
    %v1653 = vunpack.c.h.b16 %v1305
    %v1654 = vunpack.c.l.b16 %v1306
    %v1655 = vunpack.c.h.b16 %v1306
    %v1656 = vunpack.c.l.b16 %v1307
    %v1657 = vunpack.c.h.b16 %v1307
    %v1658 = vunpack.c.l.b16 %v1308
    %v1659 = vunpack.c.h.b16 %v1308
    %v1660 = vunpack.c.l.b16 %v1309
    %v1661 = vunpack.c.h.b16 %v1309
    %v1662 = vunpack.c.l.b16 %v1310
    %v1663 = vunpack.c.h.b16 %v1310
    %v1664 = vunpack.c.l.b16 %v1311
    %v1665 = vunpack.c.h.b16 %v1311
    %v1666 = vunpack.c.l.b16 %v1312
    %v1667 = vunpack.c.h.b16 %v1312
    %v1668 = vunpack.c.l.b16 %v1313
    %v1669 = vunpack.c.h.b16 %v1313
    %v1670 = vunpack.c.l.b16 %v1314
    %v1671 = vunpack.c.h.b16 %v1314
    %v1672 = vunpack.c.l.b16 %v1315
    %v1673 = vunpack.c.h.b16 %v1315
    %v1674 = vunpack.c.l.b16 %v1316
    %v1675 = vunpack.c.h.b16 %v1316
    %v1676 = vunpack.c.l.b16 %v1317
    %v1677 = vunpack.c.h.b16 %v1317
    %v1678 = vunpack.c.l.b16 %v1318
    %v1679 = vunpack.c.h.b16 %v1318
    %v1680 = vunpack.c.l.b16 %v1319
    %v1681 = vunpack.c.h.b16 %v1319
    %v1682 = vunpack.c.l.b16 %v1320
    %v1683 = vunpack.c.h.b16 %v1320
    %v1684 = vunpack.c.l.b16 %v1321
    %v1685 = vunpack.c.h.b16 %v1321
    %v1686 = vunpack.c.l.b16 %v1322
    %v1687 = vunpack.c.h.b16 %v1322
    %v1688 = vunpack.c.l.b16 %v1323
    %v1689 = vunpack.c.h.b16 %v1323
    %v1690 = vunpack.c.l.b16 %v1324
    %v1691 = vunpack.c.h.b16 %v1324
    %v1692 = vunpack.c.l.b16 %v1325
    %v1693 = vunpack.c.h.b16 %v1325
    %v1694 = vunpack.c.l.b16 %v1326
    %v1695 = vunpack.c.h.b16 %v1326
    %v1696 = vunpack.c.l.b16 %v1327
    %v1697 = vunpack.c.h.b16 %v1327
    %v1698 = vunpack.c.l.b16 %v1328
    %v1699 = vunpack.c.h.b16 %v1328
    %v1700 = vunpack.c.l.b16 %v1329
    %v1701 = vunpack.c.h.b16 %v1329
    %v1702 = vunpack.c.l.b16 %v1330
    %v1703 = vunpack.c.h.b16 %v1330
    %v1704 = vunpack.c.l.b16 %v1331
    %v1705 = vunpack.c.h.b16 %v1331
    %v1706 = vunpack.c.l.b16 %v1332
    %v1707 = vunpack.c.h.b16 %v1332
    %v1708 = vunpack.c.l.b16 %v1333
    %v1709 = vunpack.c.h.b16 %v1333
    %v1710 = vunpack.c.l.b16 %v1334
    %v1711 = vunpack.c.h.b16 %v1334
    %v1712 = vunpack.c.l.b16 %v1335
    %v1713 = vunpack.c.h.b16 %v1335
    %v1714 = vunpack.c.l.b16 %v1336
    %v1715 = vunpack.c.h.b16 %v1336
    %v1716 = vunpack.c.l.b16 %v1337
    %v1717 = vunpack.c.h.b16 %v1337
    %v1718 = vunpack.c.l.b16 %v1338
    %v1719 = vunpack.c.h.b16 %v1338
    %v1720 = vunpack.c.l.b16 %v1339
    %v1721 = vunpack.c.h.b16 %v1339
    %v1722 = vunpack.c.l.b16 %v1340
    %v1723 = vunpack.c.h.b16 %v1340
    %v1724 = vunpack.c.l.b16 %v1341
    %v1725 = vunpack.c.h.b16 %v1341
    %v1726 = vunpack.c.l.b16 %v1342
    %v1727 = vunpack.c.h.b16 %v1342
    %v1728 = vunpack.c.l.b16 %v1343
    %v1729 = vunpack.c.h.b16 %v1343
    %v1730 = vunpack.c.l.b16 %v1344
    %v1731 = vunpack.c.h.b16 %v1344
    %v1732 = vunpack.c.l.b16 %v1345
    %v1733 = vunpack.c.h.b16 %v1345
    %v1734 = vunpack.c.l.b16 %v1346
    %v1735 = vunpack.c.h.b16 %v1346
    %v1736 = vunpack.c.l.b16 %v1347
    %v1737 = vunpack.c.h.b16 %v1347
    %v1738 = vunpack.c.l.b16 %v1348
    %v1739 = vunpack.c.h.b16 %v1348
    %v1740 = vunpack.c.l.b16 %v1349
    %v1741 = vunpack.c.h.b16 %v1349
    %v1742 = vunpack.c.l.b16 %v1350
    %v1743 = vunpack.c.h.b16 %v1350
    %v1744 = vunpack.c.l.b16 %v1351
    %v1745 = vunpack.c.h.b16 %v1351
    %v1746 = vunpack.c.l.b16 %v1352
    %v1747 = vunpack.c.h.b16 %v1352
    %v1748 = vunpack.c.l.b16 %v1353
    %v1749 = vunpack.c.h.b16 %v1353
    %v1750 = vunpack.c.l.b16 %v1354
    %v1751 = vunpack.c.h.b16 %v1354
    %v1752 = vunpack.c.l.b16 %v1355
    %v1753 = vunpack.c.h.b16 %v1355
    %v1754 = vunpack.c.l.b16 %v1356
    %v1755 = vunpack.c.h.b16 %v1356
    %v1756 = vunpack.c.l.b16 %v1357
    %v1757 = vunpack.c.h.b16 %v1357
    %v1758 = vunpack.c.l.b16 %v1358
    %v1759 = vunpack.c.h.b16 %v1358
    %v1760 = vunpack.c.l.b16 %v1359
    %v1761 = vunpack.c.h.b16 %v1359
    %v1762 = vunpack.c.l.b16 %v1360
    %v1763 = vunpack.c.h.b16 %v1360
    %v1764 = vunpack.c.l.b16 %v1361
    %v1765 = vunpack.c.h.b16 %v1361
    %v1766 = vunpack.c.l.b16 %v1362
    %v1767 = vunpack.c.h.b16 %v1362
    %v1768 = vunpack.c.l.b16 %v1363
    %v1769 = vunpack.c.h.b16 %v1363
    %v1770 = vunpack.c.l.b16 %v1364
    %v1771 = vunpack.c.h.b16 %v1364
    %v1772 = vunpack.c.l.b16 %v1365
    %v1773 = vunpack.c.h.b16 %v1365
    %v1774 = vunpack.c.l.b16 %v1366
    %v1775 = vunpack.c.h.b16 %v1366
    %v1776 = vunpack.c.l.b16 %v1367
    %v1777 = vunpack.c.h.b16 %v1367
    %v1778 = vunpack.c.l.b16 %v1368
    %v1779 = vunpack.c.h.b16 %v1368
    %v1780 = vunpack.c.l.b16 %v1369
    %v1781 = vunpack.c.h.b16 %v1369
    %v1782 = vunpack.c.l.b16 %v1370
    %v1783 = vunpack.c.h.b16 %v1370
    %v1784 = vunpack.c.l.b16 %v1371
    %v1785 = vunpack.c.h.b16 %v1371
    %v1786 = vunpack.c.l.b16 %v1372
    %v1787 = vunpack.c.h.b16 %v1372
    %v1788 = vunpack.c.l.b16 %v1373
    %v1789 = vunpack.c.h.b16 %v1373
    %v1790 = vunpack.c.l.b16 %v1374
    %v1791 = vunpack.c.h.b16 %v1374
    %v1792 = vunpack.c.l.b16 %v1375
    %v1793 = vunpack.c.h.b16 %v1375
    %v1794 = vunpack.c.l.b16 %v1376
    %v1795 = vunpack.c.h.b16 %v1376
    %v1796 = vunpack.c.l.b16 %v1377
    %v1797 = vunpack.c.h.b16 %v1377
    %v1798 = vunpack.c.l.b16 %v1378
    %v1799 = vunpack.c.h.b16 %v1378
    %v1800 = vunpack.c.l.b16 %v1379
    %v1801 = vunpack.c.h.b16 %v1379
    %v1802 = vunpack.c.l.b16 %v1380
    %v1803 = vunpack.c.h.b16 %v1380
    %v1804 = vunpack.c.l.b16 %v1381
    %v1805 = vunpack.c.h.b16 %v1381
    %v1806 = vunpack.c.l.b16 %v1382
    %v1807 = vunpack.c.h.b16 %v1382
    %v1808 = vunpack.c.l.b16 %v1383
    %v1809 = vunpack.c.h.b16 %v1383
    %v1810 = vunpack.c.l.b16 %v1384
    %v1811 = vunpack.c.h.b16 %v1384
    %v1812 = vunpack.c.l.b16 %v1385
    %v1813 = vunpack.c.h.b16 %v1385
    %v1814 = vunpack.c.l.b16 %v1386
    %v1815 = vunpack.c.h.b16 %v1386
    %v1816 = vunpack.c.l.b16 %v1387
    %v1817 = vunpack.c.h.b16 %v1387
    %v1818 = vunpack.c.l.b16 %v1388
    %v1819 = vunpack.c.h.b16 %v1388
    %v1820 = vunpack.c.l.b16 %v1389
    %v1821 = vunpack.c.h.b16 %v1389
    %v1822 = vunpack.c.l.b16 %v1390
    %v1823 = vunpack.c.h.b16 %v1390
    %v1824 = vunpack.c.l.b16 %v1391
    %v1825 = vunpack.c.h.b16 %v1391
    %v1826 = vunpack.c.l.b16 %v1392
    %v1827 = vunpack.c.h.b16 %v1392
    %v1828 = vpack.c.b16 %v1576, %v1572
    %v1829 = vpack.c.b16 %v1577, %v1573
    %v1830 = vpack.c.b16 %v1578, %v1574
    %v1831 = vpack.c.b16 %v1579, %v1575
    %v1832 = vpack.c.b16 %v1584, %v1580
    %v1833 = vpack.c.b16 %v1585, %v1581
    %v1834 = vpack.c.b16 %v1586, %v1582
    %v1835 = vpack.c.b16 %v1587, %v1583
    %v1836 = vpack.c.b16 %v1592, %v1588
    %v1837 = vpack.c.b16 %v1593, %v1589
    %v1838 = vpack.c.b16 %v1594, %v1590
    %v1839 = vpack.c.b16 %v1595, %v1591
    %v1840 = vpack.c.b16 %v1600, %v1596
    %v1841 = vpack.c.b16 %v1601, %v1597
    %v1842 = vpack.c.b16 %v1602, %v1598
    %v1843 = vpack.c.b16 %v1603, %v1599
    %v1844 = vpack.c.b16 %v1608, %v1604
    %v1845 = vpack.c.b16 %v1609, %v1605
    %v1846 = vpack.c.b16 %v1610, %v1606
    %v1847 = vpack.c.b16 %v1611, %v1607
    %v1848 = vpack.c.b16 %v1616, %v1612
    %v1849 = vpack.c.b16 %v1617, %v1613
    %v1850 = vpack.c.b16 %v1618, %v1614
    %v1851 = vpack.c.b16 %v1619, %v1615
    %v1852 = vpack.c.b16 %v1624, %v1620
    %v1853 = vpack.c.b16 %v1625, %v1621
    %v1854 = vpack.c.b16 %v1626, %v1622
    %v1855 = vpack.c.b16 %v1627, %v1623
    %v1856 = vpack.c.b16 %v1632, %v1628
    %v1857 = vpack.c.b16 %v1633, %v1629
    %v1858 = vpack.c.b16 %v1634, %v1630
    %v1859 = vpack.c.b16 %v1635, %v1631
    %v1860 = vpack.c.b16 %v1640, %v1636
    %v1861 = vpack.c.b16 %v1641, %v1637
    %v1862 = vpack.c.b16 %v1642, %v1638
    %v1863 = vpack.c.b16 %v1643, %v1639
    %v1864 = vpack.c.b16 %v1648, %v1644
    %v1865 = vpack.c.b16 %v1649, %v1645
    %v1866 = vpack.c.b16 %v1650, %v1646
    %v1867 = vpack.c.b16 %v1651, %v1647
    %v1868 = vpack.c.b16 %v1656, %v1652
    %v1869 = vpack.c.b16 %v1657, %v1653
    %v1870 = vpack.c.b16 %v1658, %v1654
    %v1871 = vpack.c.b16 %v1659, %v1655
    %v1872 = vpack.c.b16 %v1664, %v1660
    %v1873 = vpack.c.b16 %v1665, %v1661
    %v1874 = vpack.c.b16 %v1666, %v1662
    %v1875 = vpack.c.b16 %v1667, %v1663
    %v1876 = vpack.c.b16 %v1672, %v1668
    %v1877 = vpack.c.b16 %v1673, %v1669
    %v1878 = vpack.c.b16 %v1674, %v1670
    %v1879 = vpack.c.b16 %v1675, %v1671
    %v1880 = vpack.c.b16 %v1680, %v1676
    %v1881 = vpack.c.b16 %v1681, %v1677
    %v1882 = vpack.c.b16 %v1682, %v1678
    %v1883 = vpack.c.b16 %v1683, %v1679
    %v1884 = vpack.c.b16 %v1688, %v1684
    %v1885 = vpack.c.b16 %v1689, %v1685
    %v1886 = vpack.c.b16 %v1690, %v1686
    %v1887 = vpack.c.b16 %v1691, %v1687
    %v1888 = vpack.c.b16 %v1696, %v1692
    %v1889 = vpack.c.b16 %v1697, %v1693
    %v1890 = vpack.c.b16 %v1698, %v1694
    %v1891 = vpack.c.b16 %v1699, %v1695
    %v1892 = vpack.c.b16 %v1704, %v1700
    %v1893 = vpack.c.b16 %v1705, %v1701
    %v1894 = vpack.c.b16 %v1706, %v1702
    %v1895 = vpack.c.b16 %v1707, %v1703
    %v1896 = vpack.c.b16 %v1712, %v1708
    %v1897 = vpack.c.b16 %v1713, %v1709
    %v1898 = vpack.c.b16 %v1714, %v1710
    %v1899 = vpack.c.b16 %v1715, %v1711
    %v1900 = vpack.c.b16 %v1720, %v1716
    %v1901 = vpack.c.b16 %v1721, %v1717
    %v1902 = vpack.c.b16 %v1722, %v1718
    %v1903 = vpack.c.b16 %v1723, %v1719
    %v1904 = vpack.c.b16 %v1728, %v1724
    %v1905 = vpack.c.b16 %v1729, %v1725
    %v1906 = vpack.c.b16 %v1730, %v1726
    %v1907 = vpack.c.b16 %v1731, %v1727
    %v1908 = vpack.c.b16 %v1736, %v1732
    %v1909 = vpack.c.b16 %v1737, %v1733
    %v1910 = vpack.c.b16 %v1738, %v1734
    %v1911 = vpack.c.b16 %v1739, %v1735
    %v1912 = vpack.c.b16 %v1744, %v1740
    %v1913 = vpack.c.b16 %v1745, %v1741
    %v1914 = vpack.c.b16 %v1746, %v1742
    %v1915 = vpack.c.b16 %v1747, %v1743
    %v1916 = vpack.c.b16 %v1752, %v1748
    %v1917 = vpack.c.b16 %v1753, %v1749
    %v1918 = vpack.c.b16 %v1754, %v1750
    %v1919 = vpack.c.b16 %v1755, %v1751
    %v1920 = vpack.c.b16 %v1760, %v1756
    %v1921 = vpack.c.b16 %v1761, %v1757
    %v1922 = vpack.c.b16 %v1762, %v1758
    %v1923 = vpack.c.b16 %v1763, %v1759
    %v1924 = vpack.c.b16 %v1768, %v1764
    %v1925 = vpack.c.b16 %v1769, %v1765
    %v1926 = vpack.c.b16 %v1770, %v1766
    %v1927 = vpack.c.b16 %v1771, %v1767
    %v1928 = vpack.c.b16 %v1776, %v1772
    %v1929 = vpack.c.b16 %v1777, %v1773
    %v1930 = vpack.c.b16 %v1778, %v1774
    %v1931 = vpack.c.b16 %v1779, %v1775
    %v1932 = vpack.c.b16 %v1784, %v1780
    %v1933 = vpack.c.b16 %v1785, %v1781
    %v1934 = vpack.c.b16 %v1786, %v1782
    %v1935 = vpack.c.b16 %v1787, %v1783
    %v1936 = vpack.c.b16 %v1792, %v1788
    %v1937 = vpack.c.b16 %v1793, %v1789
    %v1938 = vpack.c.b16 %v1794, %v1790
    %v1939 = vpack.c.b16 %v1795, %v1791
    %v1940 = vpack.c.b16 %v1800, %v1796
    %v1941 = vpack.c.b16 %v1801, %v1797
    %v1942 = vpack.c.b16 %v1802, %v1798
    %v1943 = vpack.c.b16 %v1803, %v1799
    %v1944 = vpack.c.b16 %v1808, %v1804
    %v1945 = vpack.c.b16 %v1809, %v1805
    %v1946 = vpack.c.b16 %v1810, %v1806
    %v1947 = vpack.c.b16 %v1811, %v1807
    %v1948 = vpack.c.b16 %v1816, %v1812
    %v1949 = vpack.c.b16 %v1817, %v1813
    %v1950 = vpack.c.b16 %v1818, %v1814
    %v1951 = vpack.c.b16 %v1819, %v1815
    %v1952 = vpack.c.b16 %v1824, %v1820
    %v1953 = vpack.c.b16 %v1825, %v1821
    %v1954 = vpack.c.b16 %v1826, %v1822
    %v1955 = vpack.c.b16 %v1827, %v1823
    %2084 = vmatprep.subr.bf16.mxu0 %v1829
    %2085 = vmatpush1.bf16.msra.mxu0 %v1828
    %2086 = vmatprep.subr.bf16.mxu0 %v1833
    %2087 = vmatpush1.bf16.msra.mxu0 %v1832
    %2088 = vmatprep.subr.bf16.mxu0 %v1837
    %2089 = vmatpush1.bf16.msra.mxu0 %v1836
    %2090 = vmatprep.subr.bf16.mxu0 %v1841
    %2091 = vmatpush1.bf16.msra.mxu0 %v1840
    %2092 = vmatprep.subr.bf16.mxu0 %v1845
    %2093 = vmatpush1.bf16.msra.mxu0 %v1844
    %2094 = vmatprep.subr.bf16.mxu0 %v1849
    %2095 = vmatpush1.bf16.msra.mxu0 %v1848
    %2096 = vmatprep.subr.bf16.mxu0 %v1853
    %2097 = vmatpush1.bf16.msra.mxu0 %v1852
    %2098 = vmatprep.subr.bf16.mxu0 %v1857
    %2099 = vmatpush1.bf16.msra.mxu0 %v1856
    %2100 = vmatprep.subr.bf16.mxu0 %v1861
    %2101 = vmatpush1.bf16.msra.mxu0 %v1860
    %2102 = vmatprep.subr.bf16.mxu0 %v1865
    %2103 = vmatpush1.bf16.msra.mxu0 %v1864
    %2104 = vmatprep.subr.bf16.mxu0 %v1869
    %2105 = vmatpush1.bf16.msra.mxu0 %v1868
    %2106 = vmatprep.subr.bf16.mxu0 %v1873
    %2107 = vmatpush1.bf16.msra.mxu0 %v1872
    %2108 = vmatprep.subr.bf16.mxu0 %v1877
    %2109 = vmatpush1.bf16.msra.mxu0 %v1876
    %2110 = vmatprep.subr.bf16.mxu0 %v1881
    %2111 = vmatpush1.bf16.msra.mxu0 %v1880
    %2112 = vmatprep.subr.bf16.mxu0 %v1885
    %2113 = vmatpush1.bf16.msra.mxu0 %v1884
    %2114 = vmatprep.subr.bf16.mxu0 %v1889
    %2115 = vmatpush1.bf16.msra.mxu0 %v1888
    %2116 = vmatprep.mubr.bf16.mxu0 %v1437
    %2117 = vmatmul.mubr.bf16.gmra.mrb[0].mxu0 %v1436
    %v2118 = vpop.f32.mrb[0].mxu0
    %v2119 = vadd.f32 %v1398, %v2118
    %v2120 = vpop.f32.mrb[0].mxu0
    %v2121 = vadd.f32 %v1402, %v2120
    %v2122 = vpop.f32.mrb[0].mxu0
    %v2123 = vpop.f32.mrb[0].mxu0
    %2124 = vdwg.mxu0
    %2125 = vmatprep.subr.bf16.mxu0 %v1893
    %2126 = vmatpush1.bf16.msra.mxu0 %v1892
    %2127 = vmatprep.subr.bf16.mxu0 %v1897
    %2128 = vmatpush1.bf16.msra.mxu0 %v1896
    %2129 = vmatprep.subr.bf16.mxu0 %v1901
    %2130 = vmatpush1.bf16.msra.mxu0 %v1900
    %2131 = vmatprep.subr.bf16.mxu0 %v1905
    %2132 = vmatpush1.bf16.msra.mxu0 %v1904
    %2133 = vmatprep.subr.bf16.mxu0 %v1909
    %2134 = vmatpush1.bf16.msra.mxu0 %v1908
    %2135 = vmatprep.subr.bf16.mxu0 %v1913
    %2136 = vmatpush1.bf16.msra.mxu0 %v1912
    %2137 = vmatprep.subr.bf16.mxu0 %v1917
    %2138 = vmatpush1.bf16.msra.mxu0 %v1916
    %2139 = vmatprep.subr.bf16.mxu0 %v1921
    %2140 = vmatpush1.bf16.msra.mxu0 %v1920
    %2141 = vmatprep.subr.bf16.mxu0 %v1925
    %2142 = vmatpush1.bf16.msra.mxu0 %v1924
    %2143 = vmatprep.subr.bf16.mxu0 %v1929
    %2144 = vmatpush1.bf16.msra.mxu0 %v1928
    %2145 = vmatprep.subr.bf16.mxu0 %v1933
    %2146 = vmatpush1.bf16.msra.mxu0 %v1932
    %2147 = vmatprep.subr.bf16.mxu0 %v1937
    %2148 = vmatpush1.bf16.msra.mxu0 %v1936
    %2149 = vmatprep.subr.bf16.mxu0 %v1941
    %2150 = vmatpush1.bf16.msra.mxu0 %v1940
    %2151 = vmatprep.subr.bf16.mxu0 %v1945
    %2152 = vmatpush1.bf16.msra.mxu0 %v1944
    %2153 = vmatprep.subr.bf16.mxu0 %v1949
    %2154 = vmatpush1.bf16.msra.mxu0 %v1948
    %2155 = vmatprep.subr.bf16.mxu0 %v1953
    %2156 = vmatpush1.bf16.msra.mxu0 %v1952
    %2157 = vmatprep.mubr.bf16.mxu0 %v1439
    %2158 = vmatmul.mubr.bf16.gmra.mrb[0].mxu0 %v1438
    %v2159 = vpop.f32.mrb[0].mxu0
    %v2160 = vadd.f32 %v2119, %v2159
    %v2161 = vpop.f32.mrb[0].mxu0
    %v2162 = vadd.f32 %v2121, %v2161
    %v2163 = vpop.f32.mrb[0].mxu0
    %v2164 = vpop.f32.mrb[0].mxu0
    %2165 = vdwg.mxu0
    %2166 = vmatprep.subr.bf16.mxu0 %v1831
    %2167 = vmatpush1.bf16.msra.mxu0 %v1830
    %2168 = vmatprep.subr.bf16.mxu0 %v1835
    %2169 = vmatpush1.bf16.msra.mxu0 %v1834
    %2170 = vmatprep.subr.bf16.mxu0 %v1839
    %2171 = vmatpush1.bf16.msra.mxu0 %v1838
    %2172 = vmatprep.subr.bf16.mxu0 %v1843
    %2173 = vmatpush1.bf16.msra.mxu0 %v1842
    %2174 = vmatprep.subr.bf16.mxu0 %v1847
    %2175 = vmatpush1.bf16.msra.mxu0 %v1846
    %2176 = vmatprep.subr.bf16.mxu0 %v1851
    %2177 = vmatpush1.bf16.msra.mxu0 %v1850
    %2178 = vmatprep.subr.bf16.mxu0 %v1855
    %2179 = vmatpush1.bf16.msra.mxu0 %v1854
    %2180 = vmatprep.subr.bf16.mxu0 %v1859
    %2181 = vmatpush1.bf16.msra.mxu0 %v1858
    %2182 = vmatprep.subr.bf16.mxu0 %v1863
    %2183 = vmatpush1.bf16.msra.mxu0 %v1862
    %2184 = vmatprep.subr.bf16.mxu0 %v1867
    %2185 = vmatpush1.bf16.msra.mxu0 %v1866
    %2186 = vmatprep.subr.bf16.mxu0 %v1871
    %2187 = vmatpush1.bf16.msra.mxu0 %v1870
    %2188 = vmatprep.subr.bf16.mxu0 %v1875
    %2189 = vmatpush1.bf16.msra.mxu0 %v1874
    %2190 = vmatprep.subr.bf16.mxu0 %v1879
    %2191 = vmatpush1.bf16.msra.mxu0 %v1878
    %2192 = vmatprep.subr.bf16.mxu0 %v1883
    %2193 = vmatpush1.bf16.msra.mxu0 %v1882
    %2194 = vmatprep.subr.bf16.mxu0 %v1887
    %2195 = vmatpush1.bf16.msra.mxu0 %v1886
    %2196 = vmatprep.subr.bf16.mxu0 %v1891
    %2197 = vmatpush1.bf16.msra.mxu0 %v1890
    %2198 = vmatprep.mubr.bf16.mxu0 %v1437
    %2199 = vmatmul.mubr.bf16.gmra.mrb[0].mxu0 %v1436
    %v2200 = vpop.f32.mrb[0].mxu0
    %v2201 = vadd.f32 %v1406, %v2200
    %v2202 = vpop.f32.mrb[0].mxu0
    %v2203 = vadd.f32 %v1410, %v2202
    %v2204 = vpop.f32.mrb[0].mxu0
    %v2205 = vpop.f32.mrb[0].mxu0
    %2206 = vdwg.mxu0
    %2207 = vmatprep.subr.bf16.mxu0 %v1895
    %2208 = vmatpush1.bf16.msra.mxu0 %v1894
    %2209 = vmatprep.subr.bf16.mxu0 %v1899
    %2210 = vmatpush1.bf16.msra.mxu0 %v1898
    %2211 = vmatprep.subr.bf16.mxu0 %v1903
    %2212 = vmatpush1.bf16.msra.mxu0 %v1902
    %2213 = vmatprep.subr.bf16.mxu0 %v1907
    %2214 = vmatpush1.bf16.msra.mxu0 %v1906
    %2215 = vmatprep.subr.bf16.mxu0 %v1911
    %2216 = vmatpush1.bf16.msra.mxu0 %v1910
    %2217 = vmatprep.subr.bf16.mxu0 %v1915
    %2218 = vmatpush1.bf16.msra.mxu0 %v1914
    %2219 = vmatprep.subr.bf16.mxu0 %v1919
    %2220 = vmatpush1.bf16.msra.mxu0 %v1918
    %2221 = vmatprep.subr.bf16.mxu0 %v1923
    %2222 = vmatpush1.bf16.msra.mxu0 %v1922
    %2223 = vmatprep.subr.bf16.mxu0 %v1927
    %2224 = vmatpush1.bf16.msra.mxu0 %v1926
    %2225 = vmatprep.subr.bf16.mxu0 %v1931
    %2226 = vmatpush1.bf16.msra.mxu0 %v1930
    %2227 = vmatprep.subr.bf16.mxu0 %v1935
    %2228 = vmatpush1.bf16.msra.mxu0 %v1934
    %2229 = vmatprep.subr.bf16.mxu0 %v1939
    %2230 = vmatpush1.bf16.msra.mxu0 %v1938
    %2231 = vmatprep.subr.bf16.mxu0 %v1943
    %2232 = vmatpush1.bf16.msra.mxu0 %v1942
    %2233 = vmatprep.subr.bf16.mxu0 %v1947
    %2234 = vmatpush1.bf16.msra.mxu0 %v1946
    %2235 = vmatprep.subr.bf16.mxu0 %v1951
    %2236 = vmatpush1.bf16.msra.mxu0 %v1950
    %2237 = vmatprep.subr.bf16.mxu0 %v1955
    %2238 = vmatpush1.bf16.msra.mxu0 %v1954
    %2239 = vmatprep.mubr.bf16.mxu0 %v1439
    %2240 = vmatmul.mubr.bf16.gmra.mrb[0].mxu0 %v1438
    %v2241 = vpop.f32.mrb[0].mxu0
    %v2242 = vadd.f32 %v2201, %v2241
    %v2243 = vpop.f32.mrb[0].mxu0
    %v2244 = vadd.f32 %v2203, %v2243
    %v2245 = vpop.f32.mrb[0].mxu0
    %v2246 = vpop.f32.mrb[0].mxu0
    %2247 = vdwg.mxu0
    %v2248 = vsub.f32 0.0, %v2160
    %v2249 = vsub.f32 0.0, %v2162
    %v2250 = vsub.f32 0.0, %v2242
    %v2251 = vsub.f32 0.0, %v2244
    %v2252 = vmul.f32 %v2248, 1.442695
    %v2253 = vpow.pop %v2252
    %v2254 = vmul.f32 %v2249, 1.442695
    %v2255 = vpow.pop %v2254
    %v2256 = vmul.f32 %v2250, 1.442695
    %v2257 = vpow.pop %v2256
    %v2258 = vmul.f32 %v2251, 1.442695
    %v2259 = vpow.pop %v2258
    %v2260 = vadd.f32 %v2253, 1.0
    %v2261 = vadd.f32 %v2255, 1.0
    %v2262 = vadd.f32 %v2257, 1.0
    %v2263 = vadd.f32 %v2259, 1.0
    %v2264 = vrcp.pop %v2260
    %v2265 = vrcp.pop %v2261
    %v2266 = vrcp.pop %v2262
    %v2267 = vrcp.pop %v2263
    %v2268 = vmax.f32 %v2160, 0.0
    %v2269 = vmax.f32 %v2162, 0.0
    %v2270 = vmax.f32 %v2242, 0.0
    %v2271 = vmax.f32 %v2244, 0.0
    %v2272 = vmul.f32 %v2264, %v2268
    %v2273 = vmul.f32 %v2265, %v2269
    %v2274 = vmul.f32 %v2266, %v2270
    %v2275 = vmul.f32 %v2267, %v2271
    %v2276 = vsub.f32 1.0, %v2264
    %v2277 = vsub.f32 1.0, %v2265
    %v2278 = vsub.f32 1.0, %v2266
    %v2279 = vsub.f32 1.0, %v2267
    %v2288 = vsel %vm1431, %v1253, %v1249
    %v2289 = vsel %vm1431, %v1254, %v1250
    %v2290 = vsel %vm1431, %v1255, %v1251
    %v2291 = vsel %vm1431, %v1256, %v1252
    %v2296 = vmul.f32 %v2276, %v2288
    %v2297 = vmul.f32 %v2277, %v2289
    %v2298 = vmul.f32 %v2278, %v2290
    %v2299 = vmul.f32 %v2279, %v2291
    %v2300 = vadd.f32 %v2272, %v2296
    %v2301 = vadd.f32 %v2273, %v2297
    %v2302 = vadd.f32 %v2274, %v2298
    %v2303 = vadd.f32 %v2275, %v2299
    %v2304 = vpack.c.bf16 %v2300, %v2300
    %v2305 = vpack.c.bf16 %v2301, %v2301
    %v2306 = vpack.c.bf16 %v2302, %v2302
    %v2307 = vpack.c.bf16 %v2303, %v2303
    %v2308 = vld [vmem:[#allocation10] sm:$0xf]
    %v2309 = vld [vmem:[#allocation10 + $0x4] sm:$0xf]
    %v2310 = vld [vmem:[#allocation10 + $0x8] sm:$0xf]
    %v2311 = vld [vmem:[#allocation10 + $0xc] sm:$0xf]
    %v2312 = vld [vmem:[#allocation10 + $0x10] sm:$0xf]
    %v2313 = vld [vmem:[#allocation10 + $0x14] sm:$0xf]
    %v2314 = vld [vmem:[#allocation10 + $0x18] sm:$0xf]
    %v2315 = vld [vmem:[#allocation10 + $0x1c] sm:$0xf]
    %v2316 = vld [vmem:[#allocation10 + $0x20] sm:$0xf]
    %v2317 = vld [vmem:[#allocation10 + $0x24] sm:$0xf]
    %v2318 = vld [vmem:[#allocation10 + $0x28] sm:$0xf]
    %v2319 = vld [vmem:[#allocation10 + $0x2c] sm:$0xf]
    %v2320 = vld [vmem:[#allocation10 + $0x30] sm:$0xf]
    %v2321 = vld [vmem:[#allocation10 + $0x34] sm:$0xf]
    %v2322 = vld [vmem:[#allocation10 + $0x38] sm:$0xf]
    %v2323 = vld [vmem:[#allocation10 + $0x3c] sm:$0xf]
    %v2324 = vld [vmem:[#allocation10 + $0x40] sm:$0xf]
    %v2325 = vld [vmem:[#allocation10 + $0x44] sm:$0xf]
    %v2326 = vld [vmem:[#allocation10 + $0x48] sm:$0xf]
    %v2327 = vld [vmem:[#allocation10 + $0x4c] sm:$0xf]
    %v2328 = vld [vmem:[#allocation10 + $0x50] sm:$0xf]
    %v2329 = vld [vmem:[#allocation10 + $0x54] sm:$0xf]
    %v2330 = vld [vmem:[#allocation10 + $0x58] sm:$0xf]
    %v2331 = vld [vmem:[#allocation10 + $0x5c] sm:$0xf]
    %v2332 = vld [vmem:[#allocation10 + $0x60] sm:$0xf]
    %v2333 = vld [vmem:[#allocation10 + $0x64] sm:$0xf]
    %v2334 = vld [vmem:[#allocation10 + $0x68] sm:$0xf]
    %v2335 = vld [vmem:[#allocation10 + $0x6c] sm:$0xf]
    %v2336 = vld [vmem:[#allocation10 + $0x70] sm:$0xf]
    %v2337 = vld [vmem:[#allocation10 + $0x74] sm:$0xf]
    %v2338 = vld [vmem:[#allocation10 + $0x78] sm:$0xf]
    %v2339 = vld [vmem:[#allocation10 + $0x7c] sm:$0xf]
    %v2340 = vld [vmem:[#allocation10 + $0x80] sm:$0xf]
    %v2341 = vld [vmem:[#allocation10 + $0x84] sm:$0xf]
    %v2342 = vld [vmem:[#allocation10 + $0x88] sm:$0xf]
    %v2343 = vld [vmem:[#allocation10 + $0x8c] sm:$0xf]
    %v2344 = vld [vmem:[#allocation10 + $0x90] sm:$0xf]
    %v2345 = vld [vmem:[#allocation10 + $0x94] sm:$0xf]
    %v2346 = vld [vmem:[#allocation10 + $0x98] sm:$0xf]
    %v2347 = vld [vmem:[#allocation10 + $0x9c] sm:$0xf]
    %v2348 = vld [vmem:[#allocation10 + $0xa0] sm:$0xf]
    %v2349 = vld [vmem:[#allocation10 + $0xa4] sm:$0xf]
    %v2350 = vld [vmem:[#allocation10 + $0xa8] sm:$0xf]
    %v2351 = vld [vmem:[#allocation10 + $0xac] sm:$0xf]
    %v2352 = vld [vmem:[#allocation10 + $0xb0] sm:$0xf]
    %v2353 = vld [vmem:[#allocation10 + $0xb4] sm:$0xf]
    %v2354 = vld [vmem:[#allocation10 + $0xb8] sm:$0xf]
    %v2355 = vld [vmem:[#allocation10 + $0xbc] sm:$0xf]
    %v2356 = vld [vmem:[#allocation10 + $0xc0] sm:$0xf]
    %v2357 = vld [vmem:[#allocation10 + $0xc4] sm:$0xf]
    %v2358 = vld [vmem:[#allocation10 + $0xc8] sm:$0xf]
    %v2359 = vld [vmem:[#allocation10 + $0xcc] sm:$0xf]
    %v2360 = vld [vmem:[#allocation10 + $0xd0] sm:$0xf]
    %v2361 = vld [vmem:[#allocation10 + $0xd4] sm:$0xf]
    %v2362 = vld [vmem:[#allocation10 + $0xd8] sm:$0xf]
    %v2363 = vld [vmem:[#allocation10 + $0xdc] sm:$0xf]
    %v2364 = vld [vmem:[#allocation10 + $0xe0] sm:$0xf]
    %v2365 = vld [vmem:[#allocation10 + $0xe4] sm:$0xf]
    %v2366 = vld [vmem:[#allocation10 + $0xe8] sm:$0xf]
    %v2367 = vld [vmem:[#allocation10 + $0xec] sm:$0xf]
    %v2368 = vld [vmem:[#allocation10 + $0xf0] sm:$0xf]
    %v2369 = vld [vmem:[#allocation10 + $0xf4] sm:$0xf]
    %v2370 = vld [vmem:[#allocation10 + $0xf8] sm:$0xf]
    %v2371 = vld [vmem:[#allocation10 + $0xfc] sm:$0xf]
    %v2372 = vld [vmem:[%s7] sm:$0x1]
    %v2374 = vlaneseq
    %v2375 = vshrl.u32 %v2374, 7
    %v2376 = vsub.s32 0, %v2375
    %v2377 = vrot.slane %v2372, %v2376
    %v2443 = vunpack.c.l.b16 %v2308
    %v2444 = vunpack.c.l.b16 %v2309
    %v2445 = vunpack.c.l.b16 %v2310
    %v2446 = vunpack.c.l.b16 %v2311
    %v2447 = vunpack.c.l.b16 %v2312
    %v2448 = vunpack.c.l.b16 %v2313
    %v2449 = vunpack.c.l.b16 %v2314
    %v2450 = vunpack.c.l.b16 %v2315
    %v2451 = vunpack.c.l.b16 %v2316
    %v2452 = vunpack.c.l.b16 %v2317
    %v2453 = vunpack.c.l.b16 %v2318
    %v2454 = vunpack.c.l.b16 %v2319
    %v2455 = vunpack.c.l.b16 %v2320
    %v2456 = vunpack.c.l.b16 %v2321
    %v2457 = vunpack.c.l.b16 %v2322
    %v2458 = vunpack.c.l.b16 %v2323
    %v2459 = vunpack.c.l.b16 %v2324
    %v2460 = vunpack.c.l.b16 %v2325
    %v2461 = vunpack.c.l.b16 %v2326
    %v2462 = vunpack.c.l.b16 %v2327
    %v2463 = vunpack.c.l.b16 %v2328
    %v2464 = vunpack.c.l.b16 %v2329
    %v2465 = vunpack.c.l.b16 %v2330
    %v2466 = vunpack.c.l.b16 %v2331
    %v2467 = vunpack.c.l.b16 %v2332
    %v2468 = vunpack.c.l.b16 %v2333
    %v2469 = vunpack.c.l.b16 %v2334
    %v2470 = vunpack.c.l.b16 %v2335
    %v2471 = vunpack.c.l.b16 %v2336
    %v2472 = vunpack.c.l.b16 %v2337
    %v2473 = vunpack.c.l.b16 %v2338
    %v2474 = vunpack.c.l.b16 %v2339
    %v2475 = vunpack.c.l.b16 %v2340
    %v2476 = vunpack.c.l.b16 %v2341
    %v2477 = vunpack.c.l.b16 %v2342
    %v2478 = vunpack.c.l.b16 %v2343
    %v2479 = vunpack.c.l.b16 %v2344
    %v2480 = vunpack.c.l.b16 %v2345
    %v2481 = vunpack.c.l.b16 %v2346
    %v2482 = vunpack.c.l.b16 %v2347
    %v2483 = vunpack.c.l.b16 %v2348
    %v2484 = vunpack.c.l.b16 %v2349
    %v2485 = vunpack.c.l.b16 %v2350
    %v2486 = vunpack.c.l.b16 %v2351
    %v2487 = vunpack.c.l.b16 %v2352
    %v2488 = vunpack.c.l.b16 %v2353
    %v2489 = vunpack.c.l.b16 %v2354
    %v2490 = vunpack.c.l.b16 %v2355
    %v2491 = vunpack.c.l.b16 %v2356
    %v2492 = vunpack.c.l.b16 %v2357
    %v2493 = vunpack.c.l.b16 %v2358
    %v2494 = vunpack.c.l.b16 %v2359
    %v2495 = vunpack.c.l.b16 %v2360
    %v2496 = vunpack.c.l.b16 %v2361
    %v2497 = vunpack.c.l.b16 %v2362
    %v2498 = vunpack.c.l.b16 %v2363
    %v2499 = vunpack.c.l.b16 %v2364
    %v2500 = vunpack.c.l.b16 %v2365
    %v2501 = vunpack.c.l.b16 %v2366
    %v2502 = vunpack.c.l.b16 %v2367
    %v2503 = vunpack.c.l.b16 %v2368
    %v2504 = vunpack.c.l.b16 %v2369
    %v2505 = vunpack.c.l.b16 %v2370
    %v2506 = vunpack.c.l.b16 %v2371
    %v2507 = vpack.c.b16 %v2444, %v2443
    %v2508 = vpack.c.b16 %v2446, %v2445
    %v2509 = vpack.c.b16 %v2448, %v2447
    %v2510 = vpack.c.b16 %v2450, %v2449
    %v2511 = vpack.c.b16 %v2452, %v2451
    %v2512 = vpack.c.b16 %v2454, %v2453
    %v2513 = vpack.c.b16 %v2456, %v2455
    %v2514 = vpack.c.b16 %v2458, %v2457
    %v2515 = vpack.c.b16 %v2460, %v2459
    %v2516 = vpack.c.b16 %v2462, %v2461
    %v2517 = vpack.c.b16 %v2464, %v2463
    %v2518 = vpack.c.b16 %v2466, %v2465
    %v2519 = vpack.c.b16 %v2468, %v2467
    %v2520 = vpack.c.b16 %v2470, %v2469
    %v2521 = vpack.c.b16 %v2472, %v2471
    %v2522 = vpack.c.b16 %v2474, %v2473
    %v2523 = vpack.c.b16 %v2476, %v2475
    %v2524 = vpack.c.b16 %v2478, %v2477
    %v2525 = vpack.c.b16 %v2480, %v2479
    %v2526 = vpack.c.b16 %v2482, %v2481
    %v2527 = vpack.c.b16 %v2484, %v2483
    %v2528 = vpack.c.b16 %v2486, %v2485
    %v2529 = vpack.c.b16 %v2488, %v2487
    %v2530 = vpack.c.b16 %v2490, %v2489
    %v2531 = vpack.c.b16 %v2492, %v2491
    %v2532 = vpack.c.b16 %v2494, %v2493
    %v2533 = vpack.c.b16 %v2496, %v2495
    %v2534 = vpack.c.b16 %v2498, %v2497
    %v2535 = vpack.c.b16 %v2500, %v2499
    %v2536 = vpack.c.b16 %v2502, %v2501
    %v2537 = vpack.c.b16 %v2504, %v2503
    %v2538 = vpack.c.b16 %v2506, %v2505
    %2571 = vmatprep.subr.bf16.mxu0 0
    %2572 = vmatpush1.bf16.msra.mxu0 %v2507
    %2573 = vmatprep.subr.bf16.mxu0 0
    %2574 = vmatpush1.bf16.msra.mxu0 %v2508
    %2575 = vmatprep.subr.bf16.mxu0 0
    %2576 = vmatpush1.bf16.msra.mxu0 %v2509
    %2577 = vmatprep.subr.bf16.mxu0 0
    %2578 = vmatpush1.bf16.msra.mxu0 %v2510
    %2579 = vmatprep.subr.bf16.mxu0 0
    %2580 = vmatpush1.bf16.msra.mxu0 %v2511
    %2581 = vmatprep.subr.bf16.mxu0 0
    %2582 = vmatpush1.bf16.msra.mxu0 %v2512
    %2583 = vmatprep.subr.bf16.mxu0 0
    %2584 = vmatpush1.bf16.msra.mxu0 %v2513
    %2585 = vmatprep.subr.bf16.mxu0 0
    %2586 = vmatpush1.bf16.msra.mxu0 %v2514
    %2587 = vmatprep.subr.bf16.mxu0 0
    %2588 = vmatpush1.bf16.msra.mxu0 %v2515
    %2589 = vmatprep.subr.bf16.mxu0 0
    %2590 = vmatpush1.bf16.msra.mxu0 %v2516
    %2591 = vmatprep.subr.bf16.mxu0 0
    %2592 = vmatpush1.bf16.msra.mxu0 %v2517
    %2593 = vmatprep.subr.bf16.mxu0 0
    %2594 = vmatpush1.bf16.msra.mxu0 %v2518
    %2595 = vmatprep.subr.bf16.mxu0 0
    %2596 = vmatpush1.bf16.msra.mxu0 %v2519
    %2597 = vmatprep.subr.bf16.mxu0 0
    %2598 = vmatpush1.bf16.msra.mxu0 %v2520
    %2599 = vmatprep.subr.bf16.mxu0 0
    %2600 = vmatpush1.bf16.msra.mxu0 %v2521
    %2601 = vmatprep.subr.bf16.mxu0 0
    %2602 = vmatpush1.bf16.msra.mxu0 %v2522
    %2603 = vmatprep.mubr.bf16.mxu0 %v2305
    %2604 = vmatmul.mubr.bf16.gmra.mrb[0].mxu0 %v2304
    %v2605 = vpop.f32.mrb[0].mxu0
    %v2606 = vadd.f32 %v2377, %v2605
    %v2607 = vpop.f32.mrb[0].mxu0
    %v2608 = vpop.f32.mrb[0].mxu0
    %v2609 = vpop.f32.mrb[0].mxu0
    %2610 = vdwg.mxu0
    %2611 = vmatprep.subr.bf16.mxu0 0
    %2612 = vmatpush1.bf16.msra.mxu0 %v2523
    %2613 = vmatprep.subr.bf16.mxu0 0
    %2614 = vmatpush1.bf16.msra.mxu0 %v2524
    %2615 = vmatprep.subr.bf16.mxu0 0
    %2616 = vmatpush1.bf16.msra.mxu0 %v2525
    %2617 = vmatprep.subr.bf16.mxu0 0
    %2618 = vmatpush1.bf16.msra.mxu0 %v2526
    %2619 = vmatprep.subr.bf16.mxu0 0
    %2620 = vmatpush1.bf16.msra.mxu0 %v2527
    %2621 = vmatprep.subr.bf16.mxu0 0
    %2622 = vmatpush1.bf16.msra.mxu0 %v2528
    %2623 = vmatprep.subr.bf16.mxu0 0
    %2624 = vmatpush1.bf16.msra.mxu0 %v2529
    %2625 = vmatprep.subr.bf16.mxu0 0
    %2626 = vmatpush1.bf16.msra.mxu0 %v2530
    %2627 = vmatprep.subr.bf16.mxu0 0
    %2628 = vmatpush1.bf16.msra.mxu0 %v2531
    %2629 = vmatprep.subr.bf16.mxu0 0
    %2630 = vmatpush1.bf16.msra.mxu0 %v2532
    %2631 = vmatprep.subr.bf16.mxu0 0
    %2632 = vmatpush1.bf16.msra.mxu0 %v2533
    %2633 = vmatprep.subr.bf16.mxu0 0
    %2634 = vmatpush1.bf16.msra.mxu0 %v2534
    %2635 = vmatprep.subr.bf16.mxu0 0
    %2636 = vmatpush1.bf16.msra.mxu0 %v2535
    %2637 = vmatprep.subr.bf16.mxu0 0
    %2638 = vmatpush1.bf16.msra.mxu0 %v2536
    %2639 = vmatprep.subr.bf16.mxu0 0
    %2640 = vmatpush1.bf16.msra.mxu0 %v2537
    %2641 = vmatprep.subr.bf16.mxu0 0
    %2642 = vmatpush1.bf16.msra.mxu0 %v2538
    %2643 = vmatprep.mubr.bf16.mxu0 %v2307
    %2644 = vmatmul.mubr.bf16.gmra.mrb[0].mxu0 %v2306
    %v2645 = vpop.f32.mrb[0].mxu0
    %v2646 = vadd.f32 %v2606, %v2645
    %v2647 = vpop.f32.mrb[0].mxu0
    %v2648 = vpop.f32.mrb[0].mxu0
    %v2649 = vpop.f32.mrb[0].mxu0
    %2650 = vdwg.mxu0
    %vm2651 = vcmask 1041408
    %v2652 = vsel %vm2651, %v2646, -inf
    %2653 = vmax.xlane.f32.xlu0 %v2652
    %v2654 = vpop.xlane.xlu0 %2653
    %v2655 = vsub.f32 %v2646, %v2654
    %v2656 = vmul.f32 %v2655, 1.442695
    %v2657 = vpow.pop %v2656
    %v2658 = vsel %vm2651, %v2657, 0.0
    %2659 = vadd.xlane.f32.xlu0 %v2658
    %v2660 = vpop.xlane.xlu0 %2659
    %v2661 = vlog2.pop %v2660
    %v2662 = vmul.f32 %v2661, 0.6931472
    %v2663 = vsub.f32 %v2655, %v2662
    %2664 = vst [vmem:[#allocation11] sm:$0x3] %v2663
    // Predicated region
    $region54: #{tpu_custom_call.1} parent=1 // pred_check
      _
    $region55: #{tpu_custom_call.1} parent=1 // pred_check_branch
      %2666 = sbr.rel (0) target = $region57
    $region56: #{tpu_custom_call.1} parent=1 // pred_region
      %s2668 = ssub.s32 32, 32
      %2669 = vsyncadd [#allocation4], %s2668
      %s2671 = sshll.u32 [#allocation11], 4
      %s2672 = int_to_ptr.vmem [resolvable:$true] %s2671
      %2674 = dma.vmem_to_hbm [thread:$0]  %s2672, 32, %s8, [#allocation4]
    $region57: #{tpu_custom_call.1} parent=1 // pred_fallthru
      _
    // Predicated region
    $region58: #{tpu_custom_call.1} parent=1 // pred_check
      _
    $region59: #{tpu_custom_call.1} parent=1 // pred_check_branch
      %2676 = sbr.rel (0) target = $region61
    $region60: #{tpu_custom_call.1} parent=1 // pred_region
      %2677 = dma.done [#allocation4], 32
    $region61: #{tpu_custom_call.1} parent=1 // pred_fallthru
      _
    %2678 = vsyncpa [#allocation3], 1
    %2679 = vsyncpa [#allocation6], 1
    %2680 = vsyncpa [#allocation9], 1
    %2681 = vsyncpa [#allocation4], 1

// kernel: tpu_custom_call.1
$region0: #{tpu_custom_call.1}
  #allocation0 [shape = 'u32[]', space=smem, size = 0x4, offset = 0x4, fixed_abs, tag = 'smem constant byte address 0x4 - core index']
  #allocation1 [shape = 'u32[144,128]{1,0:T(1,128)}', space=vmem, size = 0x12000, scoped, tag = 'internal scratch']
  %s0 = inlined_call_operand.hbm [shape: bf16[2,32,32], index: 0, kind: input, shape index: {}]
  %s1 = inlined_call_operand.hbm [shape: bf16[5,32,512], index: 1, kind: input, shape index: {}]
  %s2 = inlined_call_operand.vmem [shape: f32[1,512], index: 2, kind: input, shape index: {}]
  %s3 = inlined_call_operand.hbm [shape: f32[16,512], index: 3, kind: input, shape index: {}]
  %s4 = inlined_call_operand.hbm [shape: bf16[512,512], index: 4, kind: input, shape index: {}]
  %s5 = inlined_call_operand.vmem [shape: f32[1,512], index: 5, kind: input, shape index: {}]
  %s6 = inlined_call_operand.hbm [shape: bf16[512,128], index: 6, kind: input, shape index: {}]
  %s7 = inlined_call_operand.vmem [shape: f32[1,128], index: 7, kind: input, shape index: {}]
  %s8 = inlined_call_operand.hbm [shape: f32[2,128], index: 8, kind: output, shape index: {}]
  %s9 = sld [smem:[#allocation0]]
  $region62: #{tpu_custom_call.1} parent=0
    _
  %s11 = ssub.s32 1, %s9
  %s12 = scalar_select 0, %s11, %s9
  $region1: #{tpu_custom_call.1} parent=0
    #allocation2 [shape = 'u8[16384]{0}', space=vmem, size = 0x4000, scoped, tag = 'input window, operand 0, single buffered']
    #allocation3 [shape = 's32[1]{0}', space=sflag, size = 0x4, scoped, tag = 'scoped memory for tpu_custom_call.1']
    #allocation4 [shape = 's32[1]{0}', space=sflag, size = 0x4, scoped, tag = 'scoped memory for tpu_custom_call.1']
    #allocation5 [shape = 'u8[163840]{0}', space=vmem, size = 0x28000, scoped, tag = 'input window, operand 1, single buffered']
    #allocation6 [shape = 's32[1]{0}', space=sflag, size = 0x4, scoped, tag = 'scoped memory for tpu_custom_call.1']
    #allocation7 [shape = 'u8[32768]{0}', space=vmem, size = 0x8000, scoped, tag = 'input window, operand 3, single buffered']
    #allocation8 [shape = 'u8[524288]{0}', space=vmem, size = 0x80000, scoped, tag = 'input window, operand 4, single buffered']
    #allocation9 [shape = 's32[1]{0}', space=sflag, size = 0x4, scoped, tag = 'scoped memory for tpu_custom_call.1']
    #allocation10 [shape = 'u8[131072]{0}', space=vmem, size = 0x20000, scoped, tag = 'input window, operand 6, single buffered']
    #allocation11 [shape = 'u8[1024]{0}', space=vmem, size = 0x400, scoped, tag = 'output window, operand 0, single buffered']
    %13 = vsyncpa [#allocation3], 0
    %14 = vsyncpa [#allocation6], 0
    %15 = vsyncpa [#allocation9], 0
    %16 = vsyncpa [#allocation4], 0
    // Predicated region
    $region2: #{tpu_custom_call.1} parent=1 // pred_check
      _
    $region3: #{tpu_custom_call.1} parent=1 // pred_check_branch
      %18 = sbr.rel (0) target = $region5
    $region4: #{tpu_custom_call.1} parent=1 // pred_region
      %s20 = ssub.s32 512, 512
      %21 = vsyncadd [#allocation3], %s20
      %s22 = sshll.u32 [#allocation2], 4
      %s23 = int_to_ptr.vmem [resolvable:$true] %s22
      %28 = dma.hbm_to_vmem [thread:$0]  %s0, 512, %s23, [#allocation3], 64, 64, 4
    $region5: #{tpu_custom_call.1} parent=1 // pred_fallthru
      _
    // Predicated region
    $region6: #{tpu_custom_call.1} parent=1 // pred_check
      _
    $region7: #{tpu_custom_call.1} parent=1 // pred_check_branch
      %30 = sbr.rel (0) target = $region9
    $region8: #{tpu_custom_call.1} parent=1 // pred_region
      %s32 = ssub.s32 5120, 5120
      %33 = vsyncadd [#allocation6], %s32
      %s34 = sshll.u32 [#allocation5], 4
      %s35 = int_to_ptr.vmem [resolvable:$true] %s34
      %40 = dma.hbm_to_vmem [thread:$0]  %s1, 5120, %s35, [#allocation6], 256, 256, 16
    $region9: #{tpu_custom_call.1} parent=1 // pred_fallthru
      _
    // Predicated region
    $region10: #{tpu_custom_call.1} parent=1 // pred_check
      _
    $region11: #{tpu_custom_call.1} parent=1 // pred_check_branch
      %42 = sbr.rel (0) target = $region13
    $region12: #{tpu_custom_call.1} parent=1 // pred_region
      _
    $region13: #{tpu_custom_call.1} parent=1 // pred_fallthru
      _
    // Predicated region
    $region14: #{tpu_custom_call.1} parent=1 // pred_check
      _
    $region15: #{tpu_custom_call.1} parent=1 // pred_check_branch
      %44 = sbr.rel (0) target = $region17
    $region16: #{tpu_custom_call.1} parent=1 // pred_region
      %s46 = ssub.s32 1024, 1024
      %47 = vsyncadd [#allocation6], %s46
      %s48 = sshll.u32 [#allocation7], 4
      %s49 = int_to_ptr.vmem [resolvable:$true] %s48
      %54 = dma.hbm_to_vmem [thread:$0]  %s3, 1024, %s49, [#allocation6], 512, 512, 32
    $region17: #{tpu_custom_call.1} parent=1 // pred_fallthru
      _
    // Predicated region
    $region18: #{tpu_custom_call.1} parent=1 // pred_check
      _
    $region19: #{tpu_custom_call.1} parent=1 // pred_check_branch
      %56 = sbr.rel (0) target = $region21
    $region20: #{tpu_custom_call.1} parent=1 // pred_region
      %s58 = ssub.s32 16384, 16384
      %59 = vsyncadd [#allocation9], %s58
      %s60 = sshll.u32 [#allocation8], 4
      %s61 = int_to_ptr.vmem [resolvable:$true] %s60
      %66 = dma.hbm_to_vmem [thread:$0]  %s4, 16384, %s61, [#allocation9], 256, 256, 16
    $region21: #{tpu_custom_call.1} parent=1 // pred_fallthru
      _
    // Predicated region
    $region22: #{tpu_custom_call.1} parent=1 // pred_check
      _
    $region23: #{tpu_custom_call.1} parent=1 // pred_check_branch
      %68 = sbr.rel (0) target = $region25
    $region24: #{tpu_custom_call.1} parent=1 // pred_region
      _
    $region25: #{tpu_custom_call.1} parent=1 // pred_fallthru
      _
    // Predicated region
    $region26: #{tpu_custom_call.1} parent=1 // pred_check
      _
    $region27: #{tpu_custom_call.1} parent=1 // pred_check_branch
      %70 = sbr.rel (0) target = $region29
    $region28: #{tpu_custom_call.1} parent=1 // pred_region
      %s72 = ssub.s32 4096, 4096
      %73 = vsyncadd [#allocation9], %s72
      %s74 = sshll.u32 [#allocation10], 4
      %s75 = int_to_ptr.vmem [resolvable:$true] %s74
      %80 = dma.hbm_to_vmem [thread:$0]  %s6, 4096, %s75, [#allocation9], 64, 64, 4
    $region29: #{tpu_custom_call.1} parent=1 // pred_fallthru
      _
    // Predicated region
    $region30: #{tpu_custom_call.1} parent=1 // pred_check
      _
    $region31: #{tpu_custom_call.1} parent=1 // pred_check_branch
      %82 = sbr.rel (0) target = $region33
    $region32: #{tpu_custom_call.1} parent=1 // pred_region
      _
    $region33: #{tpu_custom_call.1} parent=1 // pred_fallthru
      _
    // Predicated region
    $region34: #{tpu_custom_call.1} parent=1 // pred_check
      _
    $region35: #{tpu_custom_call.1} parent=1 // pred_check_branch
      %84 = sbr.rel (0) target = $region37
    $region36: #{tpu_custom_call.1} parent=1 // pred_region
      %85 = dma.done [#allocation3], 512
    $region37: #{tpu_custom_call.1} parent=1 // pred_fallthru
      _
    // Predicated region
    $region38: #{tpu_custom_call.1} parent=1 // pred_check
      _
    $region39: #{tpu_custom_call.1} parent=1 // pred_check_branch
      %87 = sbr.rel (0) target = $region41
    $region40: #{tpu_custom_call.1} parent=1 // pred_region
      %88 = dma.done [#allocation6], 5120
    $region41: #{tpu_custom_call.1} parent=1 // pred_fallthru
      _
    // Predicated region
    $region42: #{tpu_custom_call.1} parent=1 // pred_check
      _
    $region43: #{tpu_custom_call.1} parent=1 // pred_check_branch
      %90 = sbr.rel (0) target = $region45
    $region44: #{tpu_custom_call.1} parent=1 // pred_region
      %91 = dma.done [#allocation6], 1024
    $region45: #{tpu_custom_call.1} parent=1 // pred_fallthru
      _
    // Predicated region
    $region46: #{tpu_custom_call.1} parent=1 // pred_check
      _
    $region47: #{tpu_custom_call.1} parent=1 // pred_check_branch
      %93 = sbr.rel (0) target = $region49
    $region48: #{tpu_custom_call.1} parent=1 // pred_region
      %94 = dma.done [#allocation9], 16384
    $region49: #{tpu_custom_call.1} parent=1 // pred_fallthru
      _
    // Predicated region
    $region50: #{tpu_custom_call.1} parent=1 // pred_check
      _
    $region51: #{tpu_custom_call.1} parent=1 // pred_check_branch
      %96 = sbr.rel (0) target = $region53
    $region52: #{tpu_custom_call.1} parent=1 // pred_region
      %97 = dma.done [#allocation9], 4096
    $region53: #{tpu_custom_call.1} parent=1 // pred_fallthru
      _
    %v99 = vld [vmem:[#allocation2] sm:$0xf]
    %v100 = vld [vmem:[#allocation2 + $0x4] sm:$0xf]
    %v101 = vld [vmem:[#allocation2 + $0x8] sm:$0xf]
    %v102 = vld [vmem:[#allocation2 + $0x10] sm:$0xf]
    %v103 = vld [vmem:[#allocation2 + $0x14] sm:$0xf]
    %v104 = vld [vmem:[#allocation2 + $0x18] sm:$0xf]
    %v105 = vld [vmem:[#allocation5] sm:$0xff]
    %v106 = vld [vmem:[#allocation5 + $0x8] sm:$0xff]
    %v107 = vld [vmem:[#allocation5 + $0x10] sm:$0xff]
    %v108 = vld [vmem:[#allocation5 + $0x18] sm:$0xff]
    %v109 = vld [vmem:[#allocation5 + $0x20] sm:$0xff]
    %v110 = vld [vmem:[#allocation5 + $0x28] sm:$0xff]
    %v111 = vld [vmem:[#allocation5 + $0x30] sm:$0xff]
    %v112 = vld [vmem:[#allocation5 + $0x38] sm:$0xff]
    %vm113 = vsmask.f32 3328
    %vm114 = vsmask.f32 7440
    %vm115 = vmor %vm113, %vm114
    %v117 = vshrl.u32 %v99, 16
    %v119 = vrot.slane %v117, 4
    %v120 = vshll.u32 %v99, 16
    %v122 = vrot.slane %v120, 5
    %v123 = vor.u32 %v119, %v122
    %v124 = vrot.slane %v123, 4
    %v126 = vshll.u32 %v100, 16
    %v128 = vrot.slane %v126, 5
    %v129 = vsel %vm115, %v124, %v128
    %v130 = vshrl.u32 %v100, 16
    %v132 = vrot.slane %v130, 4
    %v133 = vor.u32 %v132, %v128
    %v134 = vrot.slane %v133, 4
    %v136 = vshll.u32 %v101, 16
    %v138 = vrot.slane %v136, 5
    %v139 = vsel %vm115, %v134, %v138
    %v141 = vshrl.u32 %v102, 16
    %v143 = vrot.slane %v141, 4
    %v144 = vshll.u32 %v102, 16
    %v146 = vrot.slane %v144, 5
    %v147 = vor.u32 %v143, %v146
    %v148 = vrot.slane %v147, 4
    %v150 = vshll.u32 %v103, 16
    %v152 = vrot.slane %v150, 5
    %v153 = vsel %vm115, %v148, %v152
    %v154 = vshrl.u32 %v103, 16
    %v156 = vrot.slane %v154, 4
    %v157 = vor.u32 %v156, %v152
    %v158 = vrot.slane %v157, 4
    %v160 = vshll.u32 %v104, 16
    %v162 = vrot.slane %v160, 5
    %v163 = vsel %vm115, %v158, %v162
    %s164 = scalar_lea.vmem [#allocation5], 64
    %v165 = vld [vmem:[%s164] sm:$0xff]
    %v166 = vld [vmem:[%s164 + $0x8] sm:$0xff]
    %v167 = vld [vmem:[%s164 + $0x10] sm:$0xff]
    %v168 = vld [vmem:[%s164 + $0x18] sm:$0xff]
    %v169 = vld [vmem:[%s164 + $0x20] sm:$0xff]
    %v170 = vld [vmem:[%s164 + $0x28] sm:$0xff]
    %v171 = vld [vmem:[%s164 + $0x30] sm:$0xff]
    %v172 = vld [vmem:[%s164 + $0x38] sm:$0xff]
    %v173 = vunpack.c.l.b16 %v129
    %v174 = vunpack.c.l.b16 %v139
    %v175 = vunpack.c.l.b16 %v153
    %v176 = vunpack.c.l.b16 %v163
    %v177 = vpack.c.b16 %v174, %v173
    %v178 = vpack.c.b16 %v176, %v175
    %v187 = vunpack.c.l.b16 %v165
    %v188 = vunpack.c.h.b16 %v165
    %v189 = vunpack.c.l.b16 %v166
    %v190 = vunpack.c.h.b16 %v166
    %v191 = vunpack.c.l.b16 %v167
    %v192 = vunpack.c.h.b16 %v167
    %v193 = vunpack.c.l.b16 %v168
    %v194 = vunpack.c.h.b16 %v168
    %v195 = vunpack.c.l.b16 %v169
    %v196 = vunpack.c.h.b16 %v169
    %v197 = vunpack.c.l.b16 %v170
    %v198 = vunpack.c.h.b16 %v170
    %v199 = vunpack.c.l.b16 %v171
    %v200 = vunpack.c.h.b16 %v171
    %v201 = vunpack.c.l.b16 %v172
    %v202 = vunpack.c.h.b16 %v172
    %v203 = vpack.c.b16 %v191, %v187
    %v204 = vpack.c.b16 %v192, %v188
    %v205 = vpack.c.b16 %v193, %v189
    %v206 = vpack.c.b16 %v194, %v190
    %v207 = vpack.c.b16 %v199, %v195
    %v208 = vpack.c.b16 %v200, %v196
    %v209 = vpack.c.b16 %v201, %v197
    %v210 = vpack.c.b16 %v202, %v198
    %vm219 = vcmask 261120
    %v221 = vsel %vm219, %v177, 0
    %v224 = vsel %vm219, %v178, 0
    %226 = vmatprep.subr.bf16.mxu0 %v204
    %227 = vmatpush1.bf16.msra.mxu0 %v203
    %228 = vmatprep.subr.bf16.mxu0 %v208
    %229 = vmatpush1.bf16.msra.mxu0 %v207
    %230 = vmatprep.subr.bf16.mxu0 0
    %231 = vmatpush1.bf16.msra.mxu0 0
    %232 = vmatprep.subr.bf16.mxu0 0
    %233 = vmatpush1.bf16.msra.mxu0 0
    %234 = vmatprep.subr.bf16.mxu0 0
    %235 = vmatpush1.bf16.msra.mxu0 0
    %236 = vmatprep.subr.bf16.mxu0 0
    %237 = vmatpush1.bf16.msra.mxu0 0
    %238 = vmatprep.subr.bf16.mxu0 0
    %239 = vmatpush1.bf16.msra.mxu0 0
    %240 = vmatprep.subr.bf16.mxu0 0
    %241 = vmatpush1.bf16.msra.mxu0 0
    %242 = vmatprep.subr.bf16.mxu0 0
    %243 = vmatpush1.bf16.msra.mxu0 0
    %244 = vmatprep.subr.bf16.mxu0 0
    %245 = vmatpush1.bf16.msra.mxu0 0
    %246 = vmatprep.subr.bf16.mxu0 0
    %247 = vmatpush1.bf16.msra.mxu0 0
    %248 = vmatprep.subr.bf16.mxu0 0
    %249 = vmatpush1.bf16.msra.mxu0 0
    %250 = vmatprep.subr.bf16.mxu0 0
    %251 = vmatpush1.bf16.msra.mxu0 0
    %252 = vmatprep.subr.bf16.mxu0 0
    %253 = vmatpush1.bf16.msra.mxu0 0
    %254 = vmatprep.subr.bf16.mxu0 0
    %255 = vmatpush1.bf16.msra.mxu0 0
    %256 = vmatprep.subr.bf16.mxu0 0
    %257 = vmatpush1.bf16.msra.mxu0 0
    %258 = vmatprep.mubr.bf16.mxu0 0
    %259 = vmatmul.mubr.bf16.gmra.mrb[0].mxu0 %v221
    %v260 = vpop.f32.mrb[0].mxu0
    %v261 = vadd.f32 0.0, %v260
    %v262 = vpop.f32.mrb[0].mxu0
    %v263 = vadd.f32 0.0, %v262
    %v264 = vpop.f32.mrb[0].mxu0
    %v265 = vadd.f32 0.0, %v264
    %v266 = vpop.f32.mrb[0].mxu0
    %v267 = vadd.f32 0.0, %v266
    %268 = vmatprep.mubr.bf16.mxu0 0
    %269 = vmatmul.mubr.bf16.gmra.mrb[0].mxu0 %v224
    %v270 = vpop.f32.mrb[0].mxu0
    %v271 = vadd.f32 0.0, %v270
    %v272 = vpop.f32.mrb[0].mxu0
    %v273 = vadd.f32 0.0, %v272
    %v274 = vpop.f32.mrb[0].mxu0
    %v275 = vadd.f32 0.0, %v274
    %v276 = vpop.f32.mrb[0].mxu0
    %v277 = vadd.f32 0.0, %v276
    %278 = vdwg.mxu0
    %279 = vmatprep.subr.bf16.mxu0 %v206
    %280 = vmatpush1.bf16.msra.mxu0 %v205
    %281 = vmatprep.subr.bf16.mxu0 %v210
    %282 = vmatpush1.bf16.msra.mxu0 %v209
    %283 = vmatprep.subr.bf16.mxu0 0
    %284 = vmatpush1.bf16.msra.mxu0 0
    %285 = vmatprep.subr.bf16.mxu0 0
    %286 = vmatpush1.bf16.msra.mxu0 0
    %287 = vmatprep.subr.bf16.mxu0 0
    %288 = vmatpush1.bf16.msra.mxu0 0
    %289 = vmatprep.subr.bf16.mxu0 0
    %290 = vmatpush1.bf16.msra.mxu0 0
    %291 = vmatprep.subr.bf16.mxu0 0
    %292 = vmatpush1.bf16.msra.mxu0 0
    %293 = vmatprep.subr.bf16.mxu0 0
    %294 = vmatpush1.bf16.msra.mxu0 0
    %295 = vmatprep.subr.bf16.mxu0 0
    %296 = vmatpush1.bf16.msra.mxu0 0
    %297 = vmatprep.subr.bf16.mxu0 0
    %298 = vmatpush1.bf16.msra.mxu0 0
    %299 = vmatprep.subr.bf16.mxu0 0
    %300 = vmatpush1.bf16.msra.mxu0 0
    %301 = vmatprep.subr.bf16.mxu0 0
    %302 = vmatpush1.bf16.msra.mxu0 0
    %303 = vmatprep.subr.bf16.mxu0 0
    %304 = vmatpush1.bf16.msra.mxu0 0
    %305 = vmatprep.subr.bf16.mxu0 0
    %306 = vmatpush1.bf16.msra.mxu0 0
    %307 = vmatprep.subr.bf16.mxu0 0
    %308 = vmatpush1.bf16.msra.mxu0 0
    %309 = vmatprep.subr.bf16.mxu0 0
    %310 = vmatpush1.bf16.msra.mxu0 0
    %311 = vmatprep.mubr.bf16.mxu0 0
    %312 = vmatmul.mubr.bf16.gmra.mrb[0].mxu0 %v221
    %v313 = vpop.f32.mrb[0].mxu0
    %v314 = vadd.f32 0.0, %v313
    %v315 = vpop.f32.mrb[0].mxu0
    %v316 = vadd.f32 0.0, %v315
    %v317 = vpop.f32.mrb[0].mxu0
    %v318 = vadd.f32 0.0, %v317
    %v319 = vpop.f32.mrb[0].mxu0
    %v320 = vadd.f32 0.0, %v319
    %321 = vmatprep.mubr.bf16.mxu0 0
    %322 = vmatmul.mubr.bf16.gmra.mrb[0].mxu0 %v224
    %v323 = vpop.f32.mrb[0].mxu0
    %v324 = vadd.f32 0.0, %v323
    %v325 = vpop.f32.mrb[0].mxu0
    %v326 = vadd.f32 0.0, %v325
    %v327 = vpop.f32.mrb[0].mxu0
    %v328 = vadd.f32 0.0, %v327
    %v329 = vpop.f32.mrb[0].mxu0
    %v330 = vadd.f32 0.0, %v329
    %331 = vdwg.mxu0
    %v336 = vunpack.c.l.b16 %v99
    %v337 = vunpack.c.l.b16 %v100
    %v338 = vunpack.c.l.b16 %v102
    %v339 = vunpack.c.l.b16 %v103
    %v340 = vpack.c.b16 %v337, %v336
    %v341 = vpack.c.b16 %v339, %v338
    %v350 = vunpack.c.l.b16 %v105
    %v351 = vunpack.c.h.b16 %v105
    %v352 = vunpack.c.l.b16 %v106
    %v353 = vunpack.c.h.b16 %v106
    %v354 = vunpack.c.l.b16 %v107
    %v355 = vunpack.c.h.b16 %v107
    %v356 = vunpack.c.l.b16 %v108
    %v357 = vunpack.c.h.b16 %v108
    %v358 = vunpack.c.l.b16 %v109
    %v359 = vunpack.c.h.b16 %v109
    %v360 = vunpack.c.l.b16 %v110
    %v361 = vunpack.c.h.b16 %v110
    %v362 = vunpack.c.l.b16 %v111
    %v363 = vunpack.c.h.b16 %v111
    %v364 = vunpack.c.l.b16 %v112
    %v365 = vunpack.c.h.b16 %v112
    %v366 = vpack.c.b16 %v354, %v350
    %v367 = vpack.c.b16 %v355, %v351
    %v368 = vpack.c.b16 %v356, %v352
    %v369 = vpack.c.b16 %v357, %v353
    %v370 = vpack.c.b16 %v362, %v358
    %v371 = vpack.c.b16 %v363, %v359
    %v372 = vpack.c.b16 %v364, %v360
    %v373 = vpack.c.b16 %v365, %v361
    %v383 = vsel %vm219, %v340, 0
    %v386 = vsel %vm219, %v341, 0
    %388 = vmatprep.subr.bf16.mxu0 %v367
    %389 = vmatpush1.bf16.msra.mxu0 %v366
    %390 = vmatprep.subr.bf16.mxu0 %v371
    %391 = vmatpush1.bf16.msra.mxu0 %v370
    %392 = vmatprep.subr.bf16.mxu0 0
    %393 = vmatpush1.bf16.msra.mxu0 0
    %394 = vmatprep.subr.bf16.mxu0 0
    %395 = vmatpush1.bf16.msra.mxu0 0
    %396 = vmatprep.subr.bf16.mxu0 0
    %397 = vmatpush1.bf16.msra.mxu0 0
    %398 = vmatprep.subr.bf16.mxu0 0
    %399 = vmatpush1.bf16.msra.mxu0 0
    %400 = vmatprep.subr.bf16.mxu0 0
    %401 = vmatpush1.bf16.msra.mxu0 0
    %402 = vmatprep.subr.bf16.mxu0 0
    %403 = vmatpush1.bf16.msra.mxu0 0
    %404 = vmatprep.subr.bf16.mxu0 0
    %405 = vmatpush1.bf16.msra.mxu0 0
    %406 = vmatprep.subr.bf16.mxu0 0
    %407 = vmatpush1.bf16.msra.mxu0 0
    %408 = vmatprep.subr.bf16.mxu0 0
    %409 = vmatpush1.bf16.msra.mxu0 0
    %410 = vmatprep.subr.bf16.mxu0 0
    %411 = vmatpush1.bf16.msra.mxu0 0
    %412 = vmatprep.subr.bf16.mxu0 0
    %413 = vmatpush1.bf16.msra.mxu0 0
    %414 = vmatprep.subr.bf16.mxu0 0
    %415 = vmatpush1.bf16.msra.mxu0 0
    %416 = vmatprep.subr.bf16.mxu0 0
    %417 = vmatpush1.bf16.msra.mxu0 0
    %418 = vmatprep.subr.bf16.mxu0 0
    %419 = vmatpush1.bf16.msra.mxu0 0
    %420 = vmatprep.mubr.bf16.mxu0 0
    %421 = vmatmul.mubr.bf16.gmra.mrb[0].mxu0 %v383
    %v422 = vpop.f32.mrb[0].mxu0
    %v423 = vadd.f32 %v261, %v422
    %v424 = vpop.f32.mrb[0].mxu0
    %v425 = vadd.f32 %v263, %v424
    %v426 = vpop.f32.mrb[0].mxu0
    %v427 = vadd.f32 %v265, %v426
    %v428 = vpop.f32.mrb[0].mxu0
    %v429 = vadd.f32 %v267, %v428
    %430 = vmatprep.mubr.bf16.mxu0 0
    %431 = vmatmul.mubr.bf16.gmra.mrb[0].mxu0 %v386
    %v432 = vpop.f32.mrb[0].mxu0
    %v433 = vadd.f32 %v271, %v432
    %v434 = vpop.f32.mrb[0].mxu0
    %v435 = vadd.f32 %v273, %v434
    %v436 = vpop.f32.mrb[0].mxu0
    %v437 = vadd.f32 %v275, %v436
    %v438 = vpop.f32.mrb[0].mxu0
    %v439 = vadd.f32 %v277, %v438
    %440 = vdwg.mxu0
    %441 = vmatprep.subr.bf16.mxu0 %v369
    %442 = vmatpush1.bf16.msra.mxu0 %v368
    %443 = vmatprep.subr.bf16.mxu0 %v373
    %444 = vmatpush1.bf16.msra.mxu0 %v372
    %445 = vmatprep.subr.bf16.mxu0 0
    %446 = vmatpush1.bf16.msra.mxu0 0
    %447 = vmatprep.subr.bf16.mxu0 0
    %448 = vmatpush1.bf16.msra.mxu0 0
    %449 = vmatprep.subr.bf16.mxu0 0
    %450 = vmatpush1.bf16.msra.mxu0 0
    %451 = vmatprep.subr.bf16.mxu0 0
    %452 = vmatpush1.bf16.msra.mxu0 0
    %453 = vmatprep.subr.bf16.mxu0 0
    %454 = vmatpush1.bf16.msra.mxu0 0
    %455 = vmatprep.subr.bf16.mxu0 0
    %456 = vmatpush1.bf16.msra.mxu0 0
    %457 = vmatprep.subr.bf16.mxu0 0
    %458 = vmatpush1.bf16.msra.mxu0 0
    %459 = vmatprep.subr.bf16.mxu0 0
    %460 = vmatpush1.bf16.msra.mxu0 0
    %461 = vmatprep.subr.bf16.mxu0 0
    %462 = vmatpush1.bf16.msra.mxu0 0
    %463 = vmatprep.subr.bf16.mxu0 0
    %464 = vmatpush1.bf16.msra.mxu0 0
    %465 = vmatprep.subr.bf16.mxu0 0
    %466 = vmatpush1.bf16.msra.mxu0 0
    %467 = vmatprep.subr.bf16.mxu0 0
    %468 = vmatpush1.bf16.msra.mxu0 0
    %469 = vmatprep.subr.bf16.mxu0 0
    %470 = vmatpush1.bf16.msra.mxu0 0
    %471 = vmatprep.subr.bf16.mxu0 0
    %472 = vmatpush1.bf16.msra.mxu0 0
    %473 = vmatprep.mubr.bf16.mxu0 0
    %474 = vmatmul.mubr.bf16.gmra.mrb[0].mxu0 %v383
    %v475 = vpop.f32.mrb[0].mxu0
    %v476 = vadd.f32 %v314, %v475
    %v477 = vpop.f32.mrb[0].mxu0
    %v478 = vadd.f32 %v316, %v477
    %v479 = vpop.f32.mrb[0].mxu0
    %v480 = vadd.f32 %v318, %v479
    %v481 = vpop.f32.mrb[0].mxu0
    %v482 = vadd.f32 %v320, %v481
    %483 = vmatprep.mubr.bf16.mxu0 0
    %484 = vmatmul.mubr.bf16.gmra.mrb[0].mxu0 %v386
    %v485 = vpop.f32.mrb[0].mxu0
    %v486 = vadd.f32 %v324, %v485
    %v487 = vpop.f32.mrb[0].mxu0
    %v488 = vadd.f32 %v326, %v487
    %v489 = vpop.f32.mrb[0].mxu0
    %v490 = vadd.f32 %v328, %v489
    %v491 = vpop.f32.mrb[0].mxu0
    %v492 = vadd.f32 %v330, %v491
    %493 = vdwg.mxu0
    %vm496 = vcmask 1042432
    %vm497 = vcmask 1046532
    %vm498 = vmor %vm496, %vm497
    %v499 = vrot.slane %v99, 5
    %v500 = vrot.slane %v499, 4
    %v501 = vrot.slane %v100, 5
    %v502 = vsel %vm498, %v500, %v501
    %v503 = vrot.slane %v501, 4
    %v504 = vrot.slane %v101, 5
    %v505 = vsel %vm498, %v503, %v504
    %v506 = vrot.slane %v102, 5
    %v507 = vrot.slane %v506, 4
    %v508 = vrot.slane %v103, 5
    %v509 = vsel %vm498, %v507, %v508
    %v510 = vrot.slane %v508, 4
    %v511 = vrot.slane %v104, 5
    %v512 = vsel %vm498, %v510, %v511
    %s513 = scalar_lea.vmem [#allocation5], 128
    %v514 = vld [vmem:[%s513] sm:$0xff]
    %v515 = vld [vmem:[%s513 + $0x8] sm:$0xff]
    %v516 = vld [vmem:[%s513 + $0x10] sm:$0xff]
    %v517 = vld [vmem:[%s513 + $0x18] sm:$0xff]
    %v518 = vld [vmem:[%s513 + $0x20] sm:$0xff]
    %v519 = vld [vmem:[%s513 + $0x28] sm:$0xff]
    %v520 = vld [vmem:[%s513 + $0x30] sm:$0xff]
    %v521 = vld [vmem:[%s513 + $0x38] sm:$0xff]
    %v522 = vunpack.c.l.b16 %v502
    %v523 = vunpack.c.l.b16 %v505
    %v524 = vunpack.c.l.b16 %v509
    %v525 = vunpack.c.l.b16 %v512
    %v526 = vpack.c.b16 %v523, %v522
    %v527 = vpack.c.b16 %v525, %v524
    %v536 = vunpack.c.l.b16 %v514
    %v537 = vunpack.c.h.b16 %v514
    %v538 = vunpack.c.l.b16 %v515
    %v539 = vunpack.c.h.b16 %v515
    %v540 = vunpack.c.l.b16 %v516
    %v541 = vunpack.c.h.b16 %v516
    %v542 = vunpack.c.l.b16 %v517
    %v543 = vunpack.c.h.b16 %v517
    %v544 = vunpack.c.l.b16 %v518
    %v545 = vunpack.c.h.b16 %v518
    %v546 = vunpack.c.l.b16 %v519
    %v547 = vunpack.c.h.b16 %v519
    %v548 = vunpack.c.l.b16 %v520
    %v549 = vunpack.c.h.b16 %v520
    %v550 = vunpack.c.l.b16 %v521
    %v551 = vunpack.c.h.b16 %v521
    %v552 = vpack.c.b16 %v540, %v536
    %v553 = vpack.c.b16 %v541, %v537
    %v554 = vpack.c.b16 %v542, %v538
    %v555 = vpack.c.b16 %v543, %v539
    %v556 = vpack.c.b16 %v548, %v544
    %v557 = vpack.c.b16 %v549, %v545
    %v558 = vpack.c.b16 %v550, %v546
    %v559 = vpack.c.b16 %v551, %v547
    %v569 = vsel %vm219, %v526, 0
    %v572 = vsel %vm219, %v527, 0
    %574 = vmatprep.subr.bf16.mxu0 %v553
    %575 = vmatpush1.bf16.msra.mxu0 %v552
    %576 = vmatprep.subr.bf16.mxu0 %v557
    %577 = vmatpush1.bf16.msra.mxu0 %v556
    %578 = vmatprep.subr.bf16.mxu0 0
    %579 = vmatpush1.bf16.msra.mxu0 0
    %580 = vmatprep.subr.bf16.mxu0 0
    %581 = vmatpush1.bf16.msra.mxu0 0
    %582 = vmatprep.subr.bf16.mxu0 0
    %583 = vmatpush1.bf16.msra.mxu0 0
    %584 = vmatprep.subr.bf16.mxu0 0
    %585 = vmatpush1.bf16.msra.mxu0 0
    %586 = vmatprep.subr.bf16.mxu0 0
    %587 = vmatpush1.bf16.msra.mxu0 0
    %588 = vmatprep.subr.bf16.mxu0 0
    %589 = vmatpush1.bf16.msra.mxu0 0
    %590 = vmatprep.subr.bf16.mxu0 0
    %591 = vmatpush1.bf16.msra.mxu0 0
    %592 = vmatprep.subr.bf16.mxu0 0
    %593 = vmatpush1.bf16.msra.mxu0 0
    %594 = vmatprep.subr.bf16.mxu0 0
    %595 = vmatpush1.bf16.msra.mxu0 0
    %596 = vmatprep.subr.bf16.mxu0 0
    %597 = vmatpush1.bf16.msra.mxu0 0
    %598 = vmatprep.subr.bf16.mxu0 0
    %599 = vmatpush1.bf16.msra.mxu0 0
    %600 = vmatprep.subr.bf16.mxu0 0
    %601 = vmatpush1.bf16.msra.mxu0 0
    %602 = vmatprep.subr.bf16.mxu0 0
    %603 = vmatpush1.bf16.msra.mxu0 0
    %604 = vmatprep.subr.bf16.mxu0 0
    %605 = vmatpush1.bf16.msra.mxu0 0
    %606 = vmatprep.mubr.bf16.mxu0 0
    %607 = vmatmul.mubr.bf16.gmra.mrb[0].mxu0 %v569
    %v608 = vpop.f32.mrb[0].mxu0
    %v609 = vadd.f32 0.0, %v608
    %v610 = vpop.f32.mrb[0].mxu0
    %v611 = vadd.f32 0.0, %v610
    %v612 = vpop.f32.mrb[0].mxu0
    %v613 = vadd.f32 0.0, %v612
    %v614 = vpop.f32.mrb[0].mxu0
    %v615 = vadd.f32 0.0, %v614
    %616 = vmatprep.mubr.bf16.mxu0 0
    %617 = vmatmul.mubr.bf16.gmra.mrb[0].mxu0 %v572
    %v618 = vpop.f32.mrb[0].mxu0
    %v619 = vadd.f32 0.0, %v618
    %v620 = vpop.f32.mrb[0].mxu0
    %v621 = vadd.f32 0.0, %v620
    %v622 = vpop.f32.mrb[0].mxu0
    %v623 = vadd.f32 0.0, %v622
    %v624 = vpop.f32.mrb[0].mxu0
    %v625 = vadd.f32 0.0, %v624
    %626 = vdwg.mxu0
    %627 = vmatprep.subr.bf16.mxu0 %v555
    %628 = vmatpush1.bf16.msra.mxu0 %v554
    %629 = vmatprep.subr.bf16.mxu0 %v559
    %630 = vmatpush1.bf16.msra.mxu0 %v558
    %631 = vmatprep.subr.bf16.mxu0 0
    %632 = vmatpush1.bf16.msra.mxu0 0
    %633 = vmatprep.subr.bf16.mxu0 0
    %634 = vmatpush1.bf16.msra.mxu0 0
    %635 = vmatprep.subr.bf16.mxu0 0
    %636 = vmatpush1.bf16.msra.mxu0 0
    %637 = vmatprep.subr.bf16.mxu0 0
    %638 = vmatpush1.bf16.msra.mxu0 0
    %639 = vmatprep.subr.bf16.mxu0 0
    %640 = vmatpush1.bf16.msra.mxu0 0
    %641 = vmatprep.subr.bf16.mxu0 0
    %642 = vmatpush1.bf16.msra.mxu0 0
    %643 = vmatprep.subr.bf16.mxu0 0
    %644 = vmatpush1.bf16.msra.mxu0 0
    %645 = vmatprep.subr.bf16.mxu0 0
    %646 = vmatpush1.bf16.msra.mxu0 0
    %647 = vmatprep.subr.bf16.mxu0 0
    %648 = vmatpush1.bf16.msra.mxu0 0
    %649 = vmatprep.subr.bf16.mxu0 0
    %650 = vmatpush1.bf16.msra.mxu0 0
    %651 = vmatprep.subr.bf16.mxu0 0
    %652 = vmatpush1.bf16.msra.mxu0 0
    %653 = vmatprep.subr.bf16.mxu0 0
    %654 = vmatpush1.bf16.msra.mxu0 0
    %655 = vmatprep.subr.bf16.mxu0 0
    %656 = vmatpush1.bf16.msra.mxu0 0
    %657 = vmatprep.subr.bf16.mxu0 0
    %658 = vmatpush1.bf16.msra.mxu0 0
    %659 = vmatprep.mubr.bf16.mxu0 0
    %660 = vmatmul.mubr.bf16.gmra.mrb[0].mxu0 %v569
    %v661 = vpop.f32.mrb[0].mxu0
    %v662 = vadd.f32 0.0, %v661
    %v663 = vpop.f32.mrb[0].mxu0
    %v664 = vadd.f32 0.0, %v663
    %v665 = vpop.f32.mrb[0].mxu0
    %v666 = vadd.f32 0.0, %v665
    %v667 = vpop.f32.mrb[0].mxu0
    %v668 = vadd.f32 0.0, %v667
    %669 = vmatprep.mubr.bf16.mxu0 0
    %670 = vmatmul.mubr.bf16.gmra.mrb[0].mxu0 %v572
    %v671 = vpop.f32.mrb[0].mxu0
    %v672 = vadd.f32 0.0, %v671
    %v673 = vpop.f32.mrb[0].mxu0
    %v674 = vadd.f32 0.0, %v673
    %v675 = vpop.f32.mrb[0].mxu0
    %v676 = vadd.f32 0.0, %v675
    %v677 = vpop.f32.mrb[0].mxu0
    %v678 = vadd.f32 0.0, %v677
    %679 = vdwg.mxu0
    %v680 = vadd.f32 %v423, %v609
    %v681 = vadd.f32 %v425, %v611
    %v682 = vadd.f32 %v476, %v662
    %v683 = vadd.f32 %v478, %v664
    %v684 = vadd.f32 %v427, %v613
    %v685 = vadd.f32 %v429, %v615
    %v686 = vadd.f32 %v480, %v666
    %v687 = vadd.f32 %v482, %v668
    %v688 = vadd.f32 %v433, %v619
    %v689 = vadd.f32 %v435, %v621
    %v690 = vadd.f32 %v486, %v672
    %v691 = vadd.f32 %v488, %v674
    %v692 = vadd.f32 %v437, %v623
    %v693 = vadd.f32 %v439, %v625
    %v694 = vadd.f32 %v490, %v676
    %v695 = vadd.f32 %v492, %v678
    %vm696 = vsmask.f32 2304
    %vm697 = vsmask.f32 6416
    %vm698 = vmor %vm696, %vm697
    %v699 = vrot.slane %v117, 5
    %v700 = vrot.slane %v120, 6
    %v701 = vor.u32 %v699, %v700
    %v702 = vrot.slane %v701, 4
    %v703 = vrot.slane %v130, 5
    %v704 = vrot.slane %v126, 6
    %v705 = vor.u32 %v703, %v704
    %v706 = vsel %vm698, %v702, %v705
    %v707 = vrot.slane %v705, 4
    %v708 = vshrl.u32 %v101, 16
    %v710 = vrot.slane %v708, 5
    %v711 = vrot.slane %v136, 6
    %v712 = vor.u32 %v710, %v711
    %v713 = vsel %vm698, %v707, %v712
    %v714 = vrot.slane %v141, 5
    %v715 = vrot.slane %v144, 6
    %v716 = vor.u32 %v714, %v715
    %v717 = vrot.slane %v716, 4
    %v718 = vrot.slane %v154, 5
    %v719 = vrot.slane %v150, 6
    %v720 = vor.u32 %v718, %v719
    %v721 = vsel %vm698, %v717, %v720
    %v722 = vrot.slane %v720, 4
    %v723 = vshrl.u32 %v104, 16
    %v725 = vrot.slane %v723, 5
    %v726 = vrot.slane %v160, 6
    %v727 = vor.u32 %v725, %v726
    %v728 = vsel %vm698, %v722, %v727
    %s729 = scalar_lea.vmem [#allocation5], 192
    %v730 = vld [vmem:[%s729] sm:$0xff]
    %v731 = vld [vmem:[%s729 + $0x8] sm:$0xff]
    %v732 = vld [vmem:[%s729 + $0x10] sm:$0xff]
    %v733 = vld [vmem:[%s729 + $0x18] sm:$0xff]
    %v734 = vld [vmem:[%s729 + $0x20] sm:$0xff]
    %v735 = vld [vmem:[%s729 + $0x28] sm:$0xff]
    %v736 = vld [vmem:[%s729 + $0x30] sm:$0xff]
    %v737 = vld [vmem:[%s729 + $0x38] sm:$0xff]
    %v738 = vunpack.c.l.b16 %v706
    %v739 = vunpack.c.l.b16 %v713
    %v740 = vunpack.c.l.b16 %v721
    %v741 = vunpack.c.l.b16 %v728
    %v742 = vpack.c.b16 %v739, %v738
    %v743 = vpack.c.b16 %v741, %v740
    %v752 = vunpack.c.l.b16 %v730
    %v753 = vunpack.c.h.b16 %v730
    %v754 = vunpack.c.l.b16 %v731
    %v755 = vunpack.c.h.b16 %v731
    %v756 = vunpack.c.l.b16 %v732
    %v757 = vunpack.c.h.b16 %v732
    %v758 = vunpack.c.l.b16 %v733
    %v759 = vunpack.c.h.b16 %v733
    %v760 = vunpack.c.l.b16 %v734
    %v761 = vunpack.c.h.b16 %v734
    %v762 = vunpack.c.l.b16 %v735
    %v763 = vunpack.c.h.b16 %v735
    %v764 = vunpack.c.l.b16 %v736
    %v765 = vunpack.c.h.b16 %v736
    %v766 = vunpack.c.l.b16 %v737
    %v767 = vunpack.c.h.b16 %v737
    %v768 = vpack.c.b16 %v756, %v752
    %v769 = vpack.c.b16 %v757, %v753
    %v770 = vpack.c.b16 %v758, %v754
    %v771 = vpack.c.b16 %v759, %v755
    %v772 = vpack.c.b16 %v764, %v760
    %v773 = vpack.c.b16 %v765, %v761
    %v774 = vpack.c.b16 %v766, %v762
    %v775 = vpack.c.b16 %v767, %v763
    %v785 = vsel %vm219, %v742, 0
    %v788 = vsel %vm219, %v743, 0
    %790 = vmatprep.subr.bf16.mxu0 %v769
    %791 = vmatpush1.bf16.msra.mxu0 %v768
    %792 = vmatprep.subr.bf16.mxu0 %v773
    %793 = vmatpush1.bf16.msra.mxu0 %v772
    %794 = vmatprep.subr.bf16.mxu0 0
    %795 = vmatpush1.bf16.msra.mxu0 0
    %796 = vmatprep.subr.bf16.mxu0 0
    %797 = vmatpush1.bf16.msra.mxu0 0
    %798 = vmatprep.subr.bf16.mxu0 0
    %799 = vmatpush1.bf16.msra.mxu0 0
    %800 = vmatprep.subr.bf16.mxu0 0
    %801 = vmatpush1.bf16.msra.mxu0 0
    %802 = vmatprep.subr.bf16.mxu0 0
    %803 = vmatpush1.bf16.msra.mxu0 0
    %804 = vmatprep.subr.bf16.mxu0 0
    %805 = vmatpush1.bf16.msra.mxu0 0
    %806 = vmatprep.subr.bf16.mxu0 0
    %807 = vmatpush1.bf16.msra.mxu0 0
    %808 = vmatprep.subr.bf16.mxu0 0
    %809 = vmatpush1.bf16.msra.mxu0 0
    %810 = vmatprep.subr.bf16.mxu0 0
    %811 = vmatpush1.bf16.msra.mxu0 0
    %812 = vmatprep.subr.bf16.mxu0 0
    %813 = vmatpush1.bf16.msra.mxu0 0
    %814 = vmatprep.subr.bf16.mxu0 0
    %815 = vmatpush1.bf16.msra.mxu0 0
    %816 = vmatprep.subr.bf16.mxu0 0
    %817 = vmatpush1.bf16.msra.mxu0 0
    %818 = vmatprep.subr.bf16.mxu0 0
    %819 = vmatpush1.bf16.msra.mxu0 0
    %820 = vmatprep.subr.bf16.mxu0 0
    %821 = vmatpush1.bf16.msra.mxu0 0
    %822 = vmatprep.mubr.bf16.mxu0 0
    %823 = vmatmul.mubr.bf16.gmra.mrb[0].mxu0 %v785
    %v824 = vpop.f32.mrb[0].mxu0
    %v825 = vadd.f32 0.0, %v824
    %v826 = vpop.f32.mrb[0].mxu0
    %v827 = vadd.f32 0.0, %v826
    %v828 = vpop.f32.mrb[0].mxu0
    %v829 = vadd.f32 0.0, %v828
    %v830 = vpop.f32.mrb[0].mxu0
    %v831 = vadd.f32 0.0, %v830
    %832 = vmatprep.mubr.bf16.mxu0 0
    %833 = vmatmul.mubr.bf16.gmra.mrb[0].mxu0 %v788
    %v834 = vpop.f32.mrb[0].mxu0
    %v835 = vadd.f32 0.0, %v834
    %v836 = vpop.f32.mrb[0].mxu0
    %v837 = vadd.f32 0.0, %v836
    %v838 = vpop.f32.mrb[0].mxu0
    %v839 = vadd.f32 0.0, %v838
    %v840 = vpop.f32.mrb[0].mxu0
    %v841 = vadd.f32 0.0, %v840
    %842 = vdwg.mxu0
    %843 = vmatprep.subr.bf16.mxu0 %v771
    %844 = vmatpush1.bf16.msra.mxu0 %v770
    %845 = vmatprep.subr.bf16.mxu0 %v775
    %846 = vmatpush1.bf16.msra.mxu0 %v774
    %847 = vmatprep.subr.bf16.mxu0 0
    %848 = vmatpush1.bf16.msra.mxu0 0
    %849 = vmatprep.subr.bf16.mxu0 0
    %850 = vmatpush1.bf16.msra.mxu0 0
    %851 = vmatprep.subr.bf16.mxu0 0
    %852 = vmatpush1.bf16.msra.mxu0 0
    %853 = vmatprep.subr.bf16.mxu0 0
    %854 = vmatpush1.bf16.msra.mxu0 0
    %855 = vmatprep.subr.bf16.mxu0 0
    %856 = vmatpush1.bf16.msra.mxu0 0
    %857 = vmatprep.subr.bf16.mxu0 0
    %858 = vmatpush1.bf16.msra.mxu0 0
    %859 = vmatprep.subr.bf16.mxu0 0
    %860 = vmatpush1.bf16.msra.mxu0 0
    %861 = vmatprep.subr.bf16.mxu0 0
    %862 = vmatpush1.bf16.msra.mxu0 0
    %863 = vmatprep.subr.bf16.mxu0 0
    %864 = vmatpush1.bf16.msra.mxu0 0
    %865 = vmatprep.subr.bf16.mxu0 0
    %866 = vmatpush1.bf16.msra.mxu0 0
    %867 = vmatprep.subr.bf16.mxu0 0
    %868 = vmatpush1.bf16.msra.mxu0 0
    %869 = vmatprep.subr.bf16.mxu0 0
    %870 = vmatpush1.bf16.msra.mxu0 0
    %871 = vmatprep.subr.bf16.mxu0 0
    %872 = vmatpush1.bf16.msra.mxu0 0
    %873 = vmatprep.subr.bf16.mxu0 0
    %874 = vmatpush1.bf16.msra.mxu0 0
    %875 = vmatprep.mubr.bf16.mxu0 0
    %876 = vmatmul.mubr.bf16.gmra.mrb[0].mxu0 %v785
    %v877 = vpop.f32.mrb[0].mxu0
    %v878 = vadd.f32 0.0, %v877
    %v879 = vpop.f32.mrb[0].mxu0
    %v880 = vadd.f32 0.0, %v879
    %v881 = vpop.f32.mrb[0].mxu0
    %v882 = vadd.f32 0.0, %v881
    %v883 = vpop.f32.mrb[0].mxu0
    %v884 = vadd.f32 0.0, %v883
    %885 = vmatprep.mubr.bf16.mxu0 0
    %886 = vmatmul.mubr.bf16.gmra.mrb[0].mxu0 %v788
    %v887 = vpop.f32.mrb[0].mxu0
    %v888 = vadd.f32 0.0, %v887
    %v889 = vpop.f32.mrb[0].mxu0
    %v890 = vadd.f32 0.0, %v889
    %v891 = vpop.f32.mrb[0].mxu0
    %v892 = vadd.f32 0.0, %v891
    %v893 = vpop.f32.mrb[0].mxu0
    %v894 = vadd.f32 0.0, %v893
    %895 = vdwg.mxu0
    %v896 = vadd.f32 %v680, %v825
    %v897 = vadd.f32 %v681, %v827
    %v898 = vadd.f32 %v682, %v878
    %v899 = vadd.f32 %v683, %v880
    %v900 = vadd.f32 %v684, %v829
    %v901 = vadd.f32 %v685, %v831
    %v902 = vadd.f32 %v686, %v882
    %v903 = vadd.f32 %v687, %v884
    %v904 = vadd.f32 %v688, %v835
    %v905 = vadd.f32 %v689, %v837
    %v906 = vadd.f32 %v690, %v888
    %v907 = vadd.f32 %v691, %v890
    %v908 = vadd.f32 %v692, %v839
    %v909 = vadd.f32 %v693, %v841
    %v910 = vadd.f32 %v694, %v892
    %v911 = vadd.f32 %v695, %v894
    %vm912 = vcmask 1041408
    %vm913 = vcmask 1045508
    %vm914 = vmor %vm912, %vm913
    %v915 = vrot.slane %v99, 6
    %v916 = vrot.slane %v915, 4
    %v917 = vrot.slane %v100, 6
    %v918 = vsel %vm914, %v916, %v917
    %v919 = vrot.slane %v917, 4
    %v920 = vrot.slane %v101, 6
    %v921 = vsel %vm914, %v919, %v920
    %v922 = vrot.slane %v102, 6
    %v923 = vrot.slane %v922, 4
    %v924 = vrot.slane %v103, 6
    %v925 = vsel %vm914, %v923, %v924
    %v926 = vrot.slane %v924, 4
    %v927 = vrot.slane %v104, 6
    %v928 = vsel %vm914, %v926, %v927
    %s929 = scalar_lea.vmem [#allocation5], 256
    %v930 = vld [vmem:[%s929] sm:$0xff]
    %v931 = vld [vmem:[%s929 + $0x8] sm:$0xff]
    %v932 = vld [vmem:[%s929 + $0x10] sm:$0xff]
    %v933 = vld [vmem:[%s929 + $0x18] sm:$0xff]
    %v934 = vld [vmem:[%s929 + $0x20] sm:$0xff]
    %v935 = vld [vmem:[%s929 + $0x28] sm:$0xff]
    %v936 = vld [vmem:[%s929 + $0x30] sm:$0xff]
    %v937 = vld [vmem:[%s929 + $0x38] sm:$0xff]
    %v938 = vunpack.c.l.b16 %v918
    %v939 = vunpack.c.l.b16 %v921
    %v940 = vunpack.c.l.b16 %v925
    %v941 = vunpack.c.l.b16 %v928
    %v942 = vpack.c.b16 %v939, %v938
    %v943 = vpack.c.b16 %v941, %v940
    %v952 = vunpack.c.l.b16 %v930
    %v953 = vunpack.c.h.b16 %v930
    %v954 = vunpack.c.l.b16 %v931
    %v955 = vunpack.c.h.b16 %v931
    %v956 = vunpack.c.l.b16 %v932
    %v957 = vunpack.c.h.b16 %v932
    %v958 = vunpack.c.l.b16 %v933
    %v959 = vunpack.c.h.b16 %v933
    %v960 = vunpack.c.l.b16 %v934
    %v961 = vunpack.c.h.b16 %v934
    %v962 = vunpack.c.l.b16 %v935
    %v963 = vunpack.c.h.b16 %v935
    %v964 = vunpack.c.l.b16 %v936
    %v965 = vunpack.c.h.b16 %v936
    %v966 = vunpack.c.l.b16 %v937
    %v967 = vunpack.c.h.b16 %v937
    %v968 = vpack.c.b16 %v956, %v952
    %v969 = vpack.c.b16 %v957, %v953
    %v970 = vpack.c.b16 %v958, %v954
    %v971 = vpack.c.b16 %v959, %v955
    %v972 = vpack.c.b16 %v964, %v960
    %v973 = vpack.c.b16 %v965, %v961
    %v974 = vpack.c.b16 %v966, %v962
    %v975 = vpack.c.b16 %v967, %v963
    %v985 = vsel %vm219, %v942, 0
    %v988 = vsel %vm219, %v943, 0
    %990 = vmatprep.subr.bf16.mxu0 %v969
    %991 = vmatpush1.bf16.msra.mxu0 %v968
    %992 = vmatprep.subr.bf16.mxu0 %v973
    %993 = vmatpush1.bf16.msra.mxu0 %v972
    %994 = vmatprep.subr.bf16.mxu0 0
    %995 = vmatpush1.bf16.msra.mxu0 0
    %996 = vmatprep.subr.bf16.mxu0 0
    %997 = vmatpush1.bf16.msra.mxu0 0
    %998 = vmatprep.subr.bf16.mxu0 0
    %999 = vmatpush1.bf16.msra.mxu0 0
    %1000 = vmatprep.subr.bf16.mxu0 0
    %1001 = vmatpush1.bf16.msra.mxu0 0
    %1002 = vmatprep.subr.bf16.mxu0 0
    %1003 = vmatpush1.bf16.msra.mxu0 0
    %1004 = vmatprep.subr.bf16.mxu0 0
    %1005 = vmatpush1.bf16.msra.mxu0 0
    %1006 = vmatprep.subr.bf16.mxu0 0
    %1007 = vmatpush1.bf16.msra.mxu0 0
    %1008 = vmatprep.subr.bf16.mxu0 0
    %1009 = vmatpush1.bf16.msra.mxu0 0
    %1010 = vmatprep.subr.bf16.mxu0 0
    %1011 = vmatpush1.bf16.msra.mxu0 0
    %1012 = vmatprep.subr.bf16.mxu0 0
    %1013 = vmatpush1.bf16.msra.mxu0 0
    %1014 = vmatprep.subr.bf16.mxu0 0
    %1015 = vmatpush1.bf16.msra.mxu0 0
    %1016 = vmatprep.subr.bf16.mxu0 0
    %1017 = vmatpush1.bf16.msra.mxu0 0
    %1018 = vmatprep.subr.bf16.mxu0 0
    %1019 = vmatpush1.bf16.msra.mxu0 0
    %1020 = vmatprep.subr.bf16.mxu0 0
    %1021 = vmatpush1.bf16.msra.mxu0 0
    %1022 = vmatprep.mubr.bf16.mxu0 0
    %1023 = vmatmul.mubr.bf16.gmra.mrb[0].mxu0 %v985
    %v1024 = vpop.f32.mrb[0].mxu0
    %v1025 = vadd.f32 0.0, %v1024
    %v1026 = vpop.f32.mrb[0].mxu0
    %v1027 = vadd.f32 0.0, %v1026
    %v1028 = vpop.f32.mrb[0].mxu0
    %v1029 = vadd.f32 0.0, %v1028
    %v1030 = vpop.f32.mrb[0].mxu0
    %v1031 = vadd.f32 0.0, %v1030
    %1032 = vmatprep.mubr.bf16.mxu0 0
    %1033 = vmatmul.mubr.bf16.gmra.mrb[0].mxu0 %v988
    %v1034 = vpop.f32.mrb[0].mxu0
    %v1035 = vadd.f32 0.0, %v1034
    %v1036 = vpop.f32.mrb[0].mxu0
    %v1037 = vadd.f32 0.0, %v1036
    %v1038 = vpop.f32.mrb[0].mxu0
    %v1039 = vadd.f32 0.0, %v1038
    %v1040 = vpop.f32.mrb[0].mxu0
    %v1041 = vadd.f32 0.0, %v1040
    %1042 = vdwg.mxu0
    %1043 = vmatprep.subr.bf16.mxu0 %v971
    %1044 = vmatpush1.bf16.msra.mxu0 %v970
    %1045 = vmatprep.subr.bf16.mxu0 %v975
    %1046 = vmatpush1.bf16.msra.mxu0 %v974
    %1047 = vmatprep.subr.bf16.mxu0 0
    %1048 = vmatpush1.bf16.msra.mxu0 0
    %1049 = vmatprep.subr.bf16.mxu0 0
    %1050 = vmatpush1.bf16.msra.mxu0 0
    %1051 = vmatprep.subr.bf16.mxu0 0
    %1052 = vmatpush1.bf16.msra.mxu0 0
    %1053 = vmatprep.subr.bf16.mxu0 0
    %1054 = vmatpush1.bf16.msra.mxu0 0
    %1055 = vmatprep.subr.bf16.mxu0 0
    %1056 = vmatpush1.bf16.msra.mxu0 0
    %1057 = vmatprep.subr.bf16.mxu0 0
    %1058 = vmatpush1.bf16.msra.mxu0 0
    %1059 = vmatprep.subr.bf16.mxu0 0
    %1060 = vmatpush1.bf16.msra.mxu0 0
    %1061 = vmatprep.subr.bf16.mxu0 0
    %1062 = vmatpush1.bf16.msra.mxu0 0
    %1063 = vmatprep.subr.bf16.mxu0 0
    %1064 = vmatpush1.bf16.msra.mxu0 0
    %1065 = vmatprep.subr.bf16.mxu0 0
    %1066 = vmatpush1.bf16.msra.mxu0 0
    %1067 = vmatprep.subr.bf16.mxu0 0
    %1068 = vmatpush1.bf16.msra.mxu0 0
    %1069 = vmatprep.subr.bf16.mxu0 0
    %1070 = vmatpush1.bf16.msra.mxu0 0
    %1071 = vmatprep.subr.bf16.mxu0 0
    %1072 = vmatpush1.bf16.msra.mxu0 0
    %1073 = vmatprep.subr.bf16.mxu0 0
    %1074 = vmatpush1.bf16.msra.mxu0 0
    %1075 = vmatprep.mubr.bf16.mxu0 0
    %1076 = vmatmul.mubr.bf16.gmra.mrb[0].mxu0 %v985
    %v1077 = vpop.f32.mrb[0].mxu0
    %v1078 = vadd.f32 0.0, %v1077
    %v1079 = vpop.f32.mrb[0].mxu0
    %v1080 = vadd.f32 0.0, %v1079
    %v1081 = vpop.f32.mrb[0].mxu0
    %v1082 = vadd.f32 0.0, %v1081
    %v1083 = vpop.f32.mrb[0].mxu0
    %v1084 = vadd.f32 0.0, %v1083
    %1085 = vmatprep.mubr.bf16.mxu0 0
    %1086 = vmatmul.mubr.bf16.gmra.mrb[0].mxu0 %v988
    %v1087 = vpop.f32.mrb[0].mxu0
    %v1088 = vadd.f32 0.0, %v1087
    %v1089 = vpop.f32.mrb[0].mxu0
    %v1090 = vadd.f32 0.0, %v1089
    %v1091 = vpop.f32.mrb[0].mxu0
    %v1092 = vadd.f32 0.0, %v1091
    %v1093 = vpop.f32.mrb[0].mxu0
    %v1094 = vadd.f32 0.0, %v1093
    %1095 = vdwg.mxu0
    %v1096 = vadd.f32 %v896, %v1025
    %v1097 = vadd.f32 %v897, %v1027
    %v1098 = vadd.f32 %v898, %v1078
    %v1099 = vadd.f32 %v899, %v1080
    %v1100 = vadd.f32 %v900, %v1029
    %v1101 = vadd.f32 %v901, %v1031
    %v1102 = vadd.f32 %v902, %v1082
    %v1103 = vadd.f32 %v903, %v1084
    %v1104 = vadd.f32 %v904, %v1035
    %v1105 = vadd.f32 %v905, %v1037
    %v1106 = vadd.f32 %v906, %v1088
    %v1107 = vadd.f32 %v907, %v1090
    %v1108 = vadd.f32 %v908, %v1039
    %v1109 = vadd.f32 %v909, %v1041
    %v1110 = vadd.f32 %v910, %v1092
    %v1111 = vadd.f32 %v911, %v1094
    %v1112 = vld [vmem:[%s2] sm:$0xf]
    %v1114 = vlaneseq
    %v1115 = vshrl.u32 %v1114, 7
    %v1116 = vsub.s32 0, %v1115
    %v1117 = vrot.slane %v1112, %v1116
    %v1118 = vlaneseq
    %v1119 = vshrl.u32 %v1118, 7
    %v1120 = vsub.s32 1, %v1119
    %v1121 = vrot.slane %v1112, %v1120
    %v1122 = vlaneseq
    %v1123 = vshrl.u32 %v1122, 7
    %v1124 = vsub.s32 2, %v1123
    %v1125 = vrot.slane %v1112, %v1124
    %v1126 = vlaneseq
    %v1127 = vshrl.u32 %v1126, 7
    %v1128 = vsub.s32 3, %v1127
    %v1129 = vrot.slane %v1112, %v1128
    %v1134 = vadd.f32 %v1096, %v1117
    %v1135 = vadd.f32 %v1097, %v1121
    %v1136 = vadd.f32 %v1098, %v1125
    %v1137 = vadd.f32 %v1099, %v1129
    %v1138 = vadd.f32 %v1100, %v1117
    %v1139 = vadd.f32 %v1101, %v1121
    %v1140 = vadd.f32 %v1102, %v1125
    %v1141 = vadd.f32 %v1103, %v1129
    %v1142 = vadd.f32 %v1104, %v1117
    %v1143 = vadd.f32 %v1105, %v1121
    %v1144 = vadd.f32 %v1106, %v1125
    %v1145 = vadd.f32 %v1107, %v1129
    %v1146 = vadd.f32 %v1108, %v1117
    %v1147 = vadd.f32 %v1109, %v1121
    %v1148 = vadd.f32 %v1110, %v1125
    %v1149 = vadd.f32 %v1111, %v1129
    %v1150 = vmax.f32 %v1134, 0.0
    %v1151 = vmax.f32 %v1135, 0.0
    %v1152 = vmax.f32 %v1136, 0.0
    %v1153 = vmax.f32 %v1137, 0.0
    %v1154 = vmax.f32 %v1138, 0.0
    %v1155 = vmax.f32 %v1139, 0.0
    %v1156 = vmax.f32 %v1140, 0.0
    %v1157 = vmax.f32 %v1141, 0.0
    %v1158 = vmax.f32 %v1142, 0.0
    %v1159 = vmax.f32 %v1143, 0.0
    %v1160 = vmax.f32 %v1144, 0.0
    %v1161 = vmax.f32 %v1145, 0.0
    %v1162 = vmax.f32 %v1146, 0.0
    %v1163 = vmax.f32 %v1147, 0.0
    %v1164 = vmax.f32 %v1148, 0.0
    %v1165 = vmax.f32 %v1149, 0.0
    %s1166 = smul.u32 0, 4
    %s1167 = smul.addr %s1166, 8
    %s1168 = scalar_lea.vmem [#allocation7], %s1167
    %v1169 = vld [vmem:[%s1168] sm:$0xff]
    %v1170 = vld [vmem:[%s1168 + $0x8] sm:$0xff]
    %v1171 = vld [vmem:[%s1168 + $0x10] sm:$0xff]
    %v1172 = vld [vmem:[%s1168 + $0x18] sm:$0xff]
    %v1173 = vld [vmem:[%s1168 + $0x20] sm:$0xff]
    %v1174 = vld [vmem:[%s1168 + $0x28] sm:$0xff]
    %v1175 = vld [vmem:[%s1168 + $0x30] sm:$0xff]
    %v1176 = vld [vmem:[%s1168 + $0x38] sm:$0xff]
    %v1177 = vmul.f32 %v1150, %v1169
    %v1178 = vmul.f32 %v1151, %v1170
    %v1179 = vmul.f32 %v1152, %v1171
    %v1180 = vmul.f32 %v1153, %v1172
    %v1181 = vmul.f32 %v1154, %v1173
    %v1182 = vmul.f32 %v1155, %v1174
    %v1183 = vmul.f32 %v1156, %v1175
    %v1184 = vmul.f32 %v1157, %v1176
    %v1185 = vmul.f32 %v1158, %v1169
    %v1186 = vmul.f32 %v1159, %v1170
    %v1187 = vmul.f32 %v1160, %v1171
    %v1188 = vmul.f32 %v1161, %v1172
    %v1189 = vmul.f32 %v1162, %v1173
    %v1190 = vmul.f32 %v1163, %v1174
    %v1191 = vmul.f32 %v1164, %v1175
    %v1192 = vmul.f32 %v1165, %v1176
    %v1193 = vmax.f32 %v1177, %v1181
    %v1194 = vrot.slane %v1193, 4
    %v1195 = vmax.f32 %v1193, %v1194
    %v1196 = vrot.slane %v1195, 2
    %v1197 = vmax.f32 %v1195, %v1196
    %v1198 = vrot.slane %v1197, 1
    %v1199 = vmax.f32 %v1197, %v1198
    %v1200 = vmax.f32 %v1178, %v1182
    %v1201 = vrot.slane %v1200, 4
    %v1202 = vmax.f32 %v1200, %v1201
    %v1203 = vrot.slane %v1202, 2
    %v1204 = vmax.f32 %v1202, %v1203
    %v1205 = vrot.slane %v1204, 1
    %v1206 = vmax.f32 %v1204, %v1205
    %v1207 = vmax.f32 %v1179, %v1183
    %v1208 = vrot.slane %v1207, 4
    %v1209 = vmax.f32 %v1207, %v1208
    %v1210 = vrot.slane %v1209, 2
    %v1211 = vmax.f32 %v1209, %v1210
    %v1212 = vrot.slane %v1211, 1
    %v1213 = vmax.f32 %v1211, %v1212
    %v1214 = vmax.f32 %v1180, %v1184
    %v1215 = vrot.slane %v1214, 4
    %v1216 = vmax.f32 %v1214, %v1215
    %v1217 = vrot.slane %v1216, 2
    %v1218 = vmax.f32 %v1216, %v1217
    %v1219 = vrot.slane %v1218, 1
    %v1220 = vmax.f32 %v1218, %v1219
    %v1221 = vmax.f32 %v1185, %v1189
    %v1222 = vrot.slane %v1221, 4
    %v1223 = vmax.f32 %v1221, %v1222
    %v1224 = vrot.slane %v1223, 2
    %v1225 = vmax.f32 %v1223, %v1224
    %v1226 = vrot.slane %v1225, 1
    %v1227 = vmax.f32 %v1225, %v1226
    %v1228 = vmax.f32 %v1186, %v1190
    %v1229 = vrot.slane %v1228, 4
    %v1230 = vmax.f32 %v1228, %v1229
    %v1231 = vrot.slane %v1230, 2
    %v1232 = vmax.f32 %v1230, %v1231
    %v1233 = vrot.slane %v1232, 1
    %v1234 = vmax.f32 %v1232, %v1233
    %v1235 = vmax.f32 %v1187, %v1191
    %v1236 = vrot.slane %v1235, 4
    %v1237 = vmax.f32 %v1235, %v1236
    %v1238 = vrot.slane %v1237, 2
    %v1239 = vmax.f32 %v1237, %v1238
    %v1240 = vrot.slane %v1239, 1
    %v1241 = vmax.f32 %v1239, %v1240
    %v1242 = vmax.f32 %v1188, %v1192
    %v1243 = vrot.slane %v1242, 4
    %v1244 = vmax.f32 %v1242, %v1243
    %v1245 = vrot.slane %v1244, 2
    %v1246 = vmax.f32 %v1244, %v1245
    %v1247 = vrot.slane %v1246, 1
    %v1248 = vmax.f32 %v1246, %v1247
    %v1249 = vmax.f32 %v1199, 0.0
    %v1250 = vmax.f32 %v1206, 0.0
    %v1251 = vmax.f32 %v1213, 0.0
    %v1252 = vmax.f32 %v1220, 0.0
    %v1253 = vmax.f32 %v1227, 0.0
    %v1254 = vmax.f32 %v1234, 0.0
    %v1255 = vmax.f32 %v1241, 0.0
    %v1256 = vmax.f32 %v1248, 0.0
    %v1257 = vpack.c.bf16 %v1249, %v1249
    %v1258 = vpack.c.bf16 %v1250, %v1250
    %v1259 = vpack.c.bf16 %v1251, %v1251
    %v1260 = vpack.c.bf16 %v1252, %v1252
    %v1261 = vpack.c.bf16 %v1253, %v1253
    %v1262 = vpack.c.bf16 %v1254, %v1254
    %v1263 = vpack.c.bf16 %v1255, %v1255
    %v1264 = vpack.c.bf16 %v1256, %v1256
    %v1265 = vld [vmem:[#allocation8] sm:$0xff]
    %v1266 = vld [vmem:[#allocation8 + $0x8] sm:$0xff]
    %v1267 = vld [vmem:[#allocation8 + $0x10] sm:$0xff]
    %v1268 = vld [vmem:[#allocation8 + $0x18] sm:$0xff]
    %v1269 = vld [vmem:[#allocation8 + $0x20] sm:$0xff]
    %v1270 = vld [vmem:[#allocation8 + $0x28] sm:$0xff]
    %v1271 = vld [vmem:[#allocation8 + $0x30] sm:$0xff]
    %v1272 = vld [vmem:[#allocation8 + $0x38] sm:$0xff]
    %v1273 = vld [vmem:[#allocation8 + $0x40] sm:$0xff]
    %v1274 = vld [vmem:[#allocation8 + $0x48] sm:$0xff]
    %v1275 = vld [vmem:[#allocation8 + $0x50] sm:$0xff]
    %v1276 = vld [vmem:[#allocation8 + $0x58] sm:$0xff]
    %v1277 = vld [vmem:[#allocation8 + $0x60] sm:$0xff]
    %v1278 = vld [vmem:[#allocation8 + $0x68] sm:$0xff]
    %v1279 = vld [vmem:[#allocation8 + $0x70] sm:$0xff]
    %v1280 = vld [vmem:[#allocation8 + $0x78] sm:$0xff]
    %v1281 = vld [vmem:[#allocation8 + $0x80] sm:$0xff]
    %v1282 = vld [vmem:[#allocation8 + $0x88] sm:$0xff]
    %v1283 = vld [vmem:[#allocation8 + $0x90] sm:$0xff]
    %v1284 = vld [vmem:[#allocation8 + $0x98] sm:$0xff]
    %v1285 = vld [vmem:[#allocation8 + $0xa0] sm:$0xff]
    %v1286 = vld [vmem:[#allocation8 + $0xa8] sm:$0xff]
    %v1287 = vld [vmem:[#allocation8 + $0xb0] sm:$0xff]
    %v1288 = vld [vmem:[#allocation8 + $0xb8] sm:$0xff]
    %v1289 = vld [vmem:[#allocation8 + $0xc0] sm:$0xff]
    %v1290 = vld [vmem:[#allocation8 + $0xc8] sm:$0xff]
    %v1291 = vld [vmem:[#allocation8 + $0xd0] sm:$0xff]
    %v1292 = vld [vmem:[#allocation8 + $0xd8] sm:$0xff]
    %v1293 = vld [vmem:[#allocation8 + $0xe0] sm:$0xff]
    %v1294 = vld [vmem:[#allocation8 + $0xe8] sm:$0xff]
    %v1295 = vld [vmem:[#allocation8 + $0xf0] sm:$0xff]
    %v1296 = vld [vmem:[#allocation8 + $0xf8] sm:$0xff]
    %v1297 = vld [vmem:[#allocation8 + $0x100] sm:$0xff]
    %v1298 = vld [vmem:[#allocation8 + $0x108] sm:$0xff]
    %v1299 = vld [vmem:[#allocation8 + $0x110] sm:$0xff]
    %v1300 = vld [vmem:[#allocation8 + $0x118] sm:$0xff]
    %v1301 = vld [vmem:[#allocation8 + $0x120] sm:$0xff]
    %v1302 = vld [vmem:[#allocation8 + $0x128] sm:$0xff]
    %v1303 = vld [vmem:[#allocation8 + $0x130] sm:$0xff]
    %v1304 = vld [vmem:[#allocation8 + $0x138] sm:$0xff]
    %v1305 = vld [vmem:[#allocation8 + $0x140] sm:$0xff]
    %v1306 = vld [vmem:[#allocation8 + $0x148] sm:$0xff]
    %v1307 = vld [vmem:[#allocation8 + $0x150] sm:$0xff]
    %v1308 = vld [vmem:[#allocation8 + $0x158] sm:$0xff]
    %v1309 = vld [vmem:[#allocation8 + $0x160] sm:$0xff]
    %v1310 = vld [vmem:[#allocation8 + $0x168] sm:$0xff]
    %v1311 = vld [vmem:[#allocation8 + $0x170] sm:$0xff]
    %v1312 = vld [vmem:[#allocation8 + $0x178] sm:$0xff]
    %v1313 = vld [vmem:[#allocation8 + $0x180] sm:$0xff]
    %v1314 = vld [vmem:[#allocation8 + $0x188] sm:$0xff]
    %v1315 = vld [vmem:[#allocation8 + $0x190] sm:$0xff]
    %v1316 = vld [vmem:[#allocation8 + $0x198] sm:$0xff]
    %v1317 = vld [vmem:[#allocation8 + $0x1a0] sm:$0xff]
    %v1318 = vld [vmem:[#allocation8 + $0x1a8] sm:$0xff]
    %v1319 = vld [vmem:[#allocation8 + $0x1b0] sm:$0xff]
    %v1320 = vld [vmem:[#allocation8 + $0x1b8] sm:$0xff]
    %v1321 = vld [vmem:[#allocation8 + $0x1c0] sm:$0xff]
    %v1322 = vld [vmem:[#allocation8 + $0x1c8] sm:$0xff]
    %v1323 = vld [vmem:[#allocation8 + $0x1d0] sm:$0xff]
    %v1324 = vld [vmem:[#allocation8 + $0x1d8] sm:$0xff]
    %v1325 = vld [vmem:[#allocation8 + $0x1e0] sm:$0xff]
    %v1326 = vld [vmem:[#allocation8 + $0x1e8] sm:$0xff]
    %v1327 = vld [vmem:[#allocation8 + $0x1f0] sm:$0xff]
    %v1328 = vld [vmem:[#allocation8 + $0x1f8] sm:$0xff]
    %v1329 = vld [vmem:[#allocation8 + $0x200] sm:$0xff]
    %v1330 = vld [vmem:[#allocation8 + $0x208] sm:$0xff]
    %v1331 = vld [vmem:[#allocation8 + $0x210] sm:$0xff]
    %v1332 = vld [vmem:[#allocation8 + $0x218] sm:$0xff]
    %v1333 = vld [vmem:[#allocation8 + $0x220] sm:$0xff]
    %v1334 = vld [vmem:[#allocation8 + $0x228] sm:$0xff]
    %v1335 = vld [vmem:[#allocation8 + $0x230] sm:$0xff]
    %v1336 = vld [vmem:[#allocation8 + $0x238] sm:$0xff]
    %v1337 = vld [vmem:[#allocation8 + $0x240] sm:$0xff]
    %v1338 = vld [vmem:[#allocation8 + $0x248] sm:$0xff]
    %v1339 = vld [vmem:[#allocation8 + $0x250] sm:$0xff]
    %v1340 = vld [vmem:[#allocation8 + $0x258] sm:$0xff]
    %v1341 = vld [vmem:[#allocation8 + $0x260] sm:$0xff]
    %v1342 = vld [vmem:[#allocation8 + $0x268] sm:$0xff]
    %v1343 = vld [vmem:[#allocation8 + $0x270] sm:$0xff]
    %v1344 = vld [vmem:[#allocation8 + $0x278] sm:$0xff]
    %v1345 = vld [vmem:[#allocation8 + $0x280] sm:$0xff]
    %v1346 = vld [vmem:[#allocation8 + $0x288] sm:$0xff]
    %v1347 = vld [vmem:[#allocation8 + $0x290] sm:$0xff]
    %v1348 = vld [vmem:[#allocation8 + $0x298] sm:$0xff]
    %v1349 = vld [vmem:[#allocation8 + $0x2a0] sm:$0xff]
    %v1350 = vld [vmem:[#allocation8 + $0x2a8] sm:$0xff]
    %v1351 = vld [vmem:[#allocation8 + $0x2b0] sm:$0xff]
    %v1352 = vld [vmem:[#allocation8 + $0x2b8] sm:$0xff]
    %v1353 = vld [vmem:[#allocation8 + $0x2c0] sm:$0xff]
    %v1354 = vld [vmem:[#allocation8 + $0x2c8] sm:$0xff]
    %v1355 = vld [vmem:[#allocation8 + $0x2d0] sm:$0xff]
    %v1356 = vld [vmem:[#allocation8 + $0x2d8] sm:$0xff]
    %v1357 = vld [vmem:[#allocation8 + $0x2e0] sm:$0xff]
    %v1358 = vld [vmem:[#allocation8 + $0x2e8] sm:$0xff]
    %v1359 = vld [vmem:[#allocation8 + $0x2f0] sm:$0xff]
    %v1360 = vld [vmem:[#allocation8 + $0x2f8] sm:$0xff]
    %v1361 = vld [vmem:[#allocation8 + $0x300] sm:$0xff]
    %v1362 = vld [vmem:[#allocation8 + $0x308] sm:$0xff]
    %v1363 = vld [vmem:[#allocation8 + $0x310] sm:$0xff]
    %v1364 = vld [vmem:[#allocation8 + $0x318] sm:$0xff]
    %v1365 = vld [vmem:[#allocation8 + $0x320] sm:$0xff]
    %v1366 = vld [vmem:[#allocation8 + $0x328] sm:$0xff]
    %v1367 = vld [vmem:[#allocation8 + $0x330] sm:$0xff]
    %v1368 = vld [vmem:[#allocation8 + $0x338] sm:$0xff]
    %v1369 = vld [vmem:[#allocation8 + $0x340] sm:$0xff]
    %v1370 = vld [vmem:[#allocation8 + $0x348] sm:$0xff]
    %v1371 = vld [vmem:[#allocation8 + $0x350] sm:$0xff]
    %v1372 = vld [vmem:[#allocation8 + $0x358] sm:$0xff]
    %v1373 = vld [vmem:[#allocation8 + $0x360] sm:$0xff]
    %v1374 = vld [vmem:[#allocation8 + $0x368] sm:$0xff]
    %v1375 = vld [vmem:[#allocation8 + $0x370] sm:$0xff]
    %v1376 = vld [vmem:[#allocation8 + $0x378] sm:$0xff]
    %v1377 = vld [vmem:[#allocation8 + $0x380] sm:$0xff]
    %v1378 = vld [vmem:[#allocation8 + $0x388] sm:$0xff]
    %v1379 = vld [vmem:[#allocation8 + $0x390] sm:$0xff]
    %v1380 = vld [vmem:[#allocation8 + $0x398] sm:$0xff]
    %v1381 = vld [vmem:[#allocation8 + $0x3a0] sm:$0xff]
    %v1382 = vld [vmem:[#allocation8 + $0x3a8] sm:$0xff]
    %v1383 = vld [vmem:[#allocation8 + $0x3b0] sm:$0xff]
    %v1384 = vld [vmem:[#allocation8 + $0x3b8] sm:$0xff]
    %v1385 = vld [vmem:[#allocation8 + $0x3c0] sm:$0xff]
    %v1386 = vld [vmem:[#allocation8 + $0x3c8] sm:$0xff]
    %v1387 = vld [vmem:[#allocation8 + $0x3d0] sm:$0xff]
    %v1388 = vld [vmem:[#allocation8 + $0x3d8] sm:$0xff]
    %v1389 = vld [vmem:[#allocation8 + $0x3e0] sm:$0xff]
    %v1390 = vld [vmem:[#allocation8 + $0x3e8] sm:$0xff]
    %v1391 = vld [vmem:[#allocation8 + $0x3f0] sm:$0xff]
    %v1392 = vld [vmem:[#allocation8 + $0x3f8] sm:$0xff]
    %v1393 = vld [vmem:[%s5] sm:$0xf]
    %v1395 = vlaneseq
    %v1396 = vshrl.u32 %v1395, 7
    %v1397 = vsub.s32 0, %v1396
    %v1398 = vrot.slane %v1393, %v1397
    %v1399 = vlaneseq
    %v1400 = vshrl.u32 %v1399, 7
    %v1401 = vsub.s32 1, %v1400
    %v1402 = vrot.slane %v1393, %v1401
    %v1403 = vlaneseq
    %v1404 = vshrl.u32 %v1403, 7
    %v1405 = vsub.s32 2, %v1404
    %v1406 = vrot.slane %v1393, %v1405
    %v1407 = vlaneseq
    %v1408 = vshrl.u32 %v1407, 7
    %v1409 = vsub.s32 3, %v1408
    %v1410 = vrot.slane %v1393, %v1409
    %v1423 = vunpack.c.l.b16 %v1257
    %v1424 = vunpack.c.l.b16 %v1258
    %v1425 = vunpack.c.l.b16 %v1259
    %v1426 = vunpack.c.l.b16 %v1260
    %v1427 = vunpack.c.l.b16 %v1261
    %v1428 = vunpack.c.l.b16 %v1262
    %v1429 = vunpack.c.l.b16 %v1263
    %v1430 = vunpack.c.l.b16 %v1264
    %vm1431 = vcmask 1041409
    %v1432 = vsel %vm1431, %v1427, %v1423
    %v1433 = vsel %vm1431, %v1428, %v1424
    %v1434 = vsel %vm1431, %v1429, %v1425
    %v1435 = vsel %vm1431, %v1430, %v1426
    %v1436 = vpack.c.b16 %v1432, %v1432
    %v1437 = vpack.c.b16 %v1433, %v1433
    %v1438 = vpack.c.b16 %v1434, %v1434
    %v1439 = vpack.c.b16 %v1435, %v1435
    %v1572 = vunpack.c.l.b16 %v1265
    %v1573 = vunpack.c.h.b16 %v1265
    %v1574 = vunpack.c.l.b16 %v1266
    %v1575 = vunpack.c.h.b16 %v1266
    %v1576 = vunpack.c.l.b16 %v1267
    %v1577 = vunpack.c.h.b16 %v1267
    %v1578 = vunpack.c.l.b16 %v1268
    %v1579 = vunpack.c.h.b16 %v1268
    %v1580 = vunpack.c.l.b16 %v1269
    %v1581 = vunpack.c.h.b16 %v1269
    %v1582 = vunpack.c.l.b16 %v1270
    %v1583 = vunpack.c.h.b16 %v1270
    %v1584 = vunpack.c.l.b16 %v1271
    %v1585 = vunpack.c.h.b16 %v1271
    %v1586 = vunpack.c.l.b16 %v1272
    %v1587 = vunpack.c.h.b16 %v1272
    %v1588 = vunpack.c.l.b16 %v1273
    %v1589 = vunpack.c.h.b16 %v1273
    %v1590 = vunpack.c.l.b16 %v1274
    %v1591 = vunpack.c.h.b16 %v1274
    %v1592 = vunpack.c.l.b16 %v1275
    %v1593 = vunpack.c.h.b16 %v1275
    %v1594 = vunpack.c.l.b16 %v1276
    %v1595 = vunpack.c.h.b16 %v1276
    %v1596 = vunpack.c.l.b16 %v1277
    %v1597 = vunpack.c.h.b16 %v1277
    %v1598 = vunpack.c.l.b16 %v1278
    %v1599 = vunpack.c.h.b16 %v1278
    %v1600 = vunpack.c.l.b16 %v1279
    %v1601 = vunpack.c.h.b16 %v1279
    %v1602 = vunpack.c.l.b16 %v1280
    %v1603 = vunpack.c.h.b16 %v1280
    %v1604 = vunpack.c.l.b16 %v1281
    %v1605 = vunpack.c.h.b16 %v1281
    %v1606 = vunpack.c.l.b16 %v1282
    %v1607 = vunpack.c.h.b16 %v1282
    %v1608 = vunpack.c.l.b16 %v1283
    %v1609 = vunpack.c.h.b16 %v1283
    %v1610 = vunpack.c.l.b16 %v1284
    %v1611 = vunpack.c.h.b16 %v1284
    %v1612 = vunpack.c.l.b16 %v1285
    %v1613 = vunpack.c.h.b16 %v1285
    %v1614 = vunpack.c.l.b16 %v1286
    %v1615 = vunpack.c.h.b16 %v1286
    %v1616 = vunpack.c.l.b16 %v1287
    %v1617 = vunpack.c.h.b16 %v1287
    %v1618 = vunpack.c.l.b16 %v1288
    %v1619 = vunpack.c.h.b16 %v1288
    %v1620 = vunpack.c.l.b16 %v1289
    %v1621 = vunpack.c.h.b16 %v1289
    %v1622 = vunpack.c.l.b16 %v1290
    %v1623 = vunpack.c.h.b16 %v1290
    %v1624 = vunpack.c.l.b16 %v1291
    %v1625 = vunpack.c.h.b16 %v1291
    %v1626 = vunpack.c.l.b16 %v1292
    %v1627 = vunpack.c.h.b16 %v1292
    %v1628 = vunpack.c.l.b16 %v1293
    %v1629 = vunpack.c.h.b16 %v1293
    %v1630 = vunpack.c.l.b16 %v1294
    %v1631 = vunpack.c.h.b16 %v1294
    %v1632 = vunpack.c.l.b16 %v1295
    %v1633 = vunpack.c.h.b16 %v1295
    %v1634 = vunpack.c.l.b16 %v1296
    %v1635 = vunpack.c.h.b16 %v1296
    %v1636 = vunpack.c.l.b16 %v1297
    %v1637 = vunpack.c.h.b16 %v1297
    %v1638 = vunpack.c.l.b16 %v1298
    %v1639 = vunpack.c.h.b16 %v1298
    %v1640 = vunpack.c.l.b16 %v1299
    %v1641 = vunpack.c.h.b16 %v1299
    %v1642 = vunpack.c.l.b16 %v1300
    %v1643 = vunpack.c.h.b16 %v1300
    %v1644 = vunpack.c.l.b16 %v1301
    %v1645 = vunpack.c.h.b16 %v1301
    %v1646 = vunpack.c.l.b16 %v1302
    %v1647 = vunpack.c.h.b16 %v1302
    %v1648 = vunpack.c.l.b16 %v1303
    %v1649 = vunpack.c.h.b16 %v1303
    %v1650 = vunpack.c.l.b16 %v1304
    %v1651 = vunpack.c.h.b16 %v1304
    %v1652 = vunpack.c.l.b16 %v1305
    %v1653 = vunpack.c.h.b16 %v1305
    %v1654 = vunpack.c.l.b16 %v1306
    %v1655 = vunpack.c.h.b16 %v1306
    %v1656 = vunpack.c.l.b16 %v1307
    %v1657 = vunpack.c.h.b16 %v1307
    %v1658 = vunpack.c.l.b16 %v1308
    %v1659 = vunpack.c.h.b16 %v1308
    %v1660 = vunpack.c.l.b16 %v1309
    %v1661 = vunpack.c.h.b16 %v1309
    %v1662 = vunpack.c.l.b16 %v1310
    %v1663 = vunpack.c.h.b16 %v1310
    %v1664 = vunpack.c.l.b16 %v1311
    %v1665 = vunpack.c.h.b16 %v1311
    %v1666 = vunpack.c.l.b16 %v1312
    %v1667 = vunpack.c.h.b16 %v1312
    %v1668 = vunpack.c.l.b16 %v1313
    %v1669 = vunpack.c.h.b16 %v1313
    %v1670 = vunpack.c.l.b16 %v1314
    %v1671 = vunpack.c.h.b16 %v1314
    %v1672 = vunpack.c.l.b16 %v1315
    %v1673 = vunpack.c.h.b16 %v1315
    %v1674 = vunpack.c.l.b16 %v1316
    %v1675 = vunpack.c.h.b16 %v1316
    %v1676 = vunpack.c.l.b16 %v1317
    %v1677 = vunpack.c.h.b16 %v1317
    %v1678 = vunpack.c.l.b16 %v1318
    %v1679 = vunpack.c.h.b16 %v1318
    %v1680 = vunpack.c.l.b16 %v1319
    %v1681 = vunpack.c.h.b16 %v1319
    %v1682 = vunpack.c.l.b16 %v1320
    %v1683 = vunpack.c.h.b16 %v1320
    %v1684 = vunpack.c.l.b16 %v1321
    %v1685 = vunpack.c.h.b16 %v1321
    %v1686 = vunpack.c.l.b16 %v1322
    %v1687 = vunpack.c.h.b16 %v1322
    %v1688 = vunpack.c.l.b16 %v1323
    %v1689 = vunpack.c.h.b16 %v1323
    %v1690 = vunpack.c.l.b16 %v1324
    %v1691 = vunpack.c.h.b16 %v1324
    %v1692 = vunpack.c.l.b16 %v1325
    %v1693 = vunpack.c.h.b16 %v1325
    %v1694 = vunpack.c.l.b16 %v1326
    %v1695 = vunpack.c.h.b16 %v1326
    %v1696 = vunpack.c.l.b16 %v1327
    %v1697 = vunpack.c.h.b16 %v1327
    %v1698 = vunpack.c.l.b16 %v1328
    %v1699 = vunpack.c.h.b16 %v1328
    %v1700 = vunpack.c.l.b16 %v1329
    %v1701 = vunpack.c.h.b16 %v1329
    %v1702 = vunpack.c.l.b16 %v1330
    %v1703 = vunpack.c.h.b16 %v1330
    %v1704 = vunpack.c.l.b16 %v1331
    %v1705 = vunpack.c.h.b16 %v1331
    %v1706 = vunpack.c.l.b16 %v1332
    %v1707 = vunpack.c.h.b16 %v1332
    %v1708 = vunpack.c.l.b16 %v1333
    %v1709 = vunpack.c.h.b16 %v1333
    %v1710 = vunpack.c.l.b16 %v1334
    %v1711 = vunpack.c.h.b16 %v1334
    %v1712 = vunpack.c.l.b16 %v1335
    %v1713 = vunpack.c.h.b16 %v1335
    %v1714 = vunpack.c.l.b16 %v1336
    %v1715 = vunpack.c.h.b16 %v1336
    %v1716 = vunpack.c.l.b16 %v1337
    %v1717 = vunpack.c.h.b16 %v1337
    %v1718 = vunpack.c.l.b16 %v1338
    %v1719 = vunpack.c.h.b16 %v1338
    %v1720 = vunpack.c.l.b16 %v1339
    %v1721 = vunpack.c.h.b16 %v1339
    %v1722 = vunpack.c.l.b16 %v1340
    %v1723 = vunpack.c.h.b16 %v1340
    %v1724 = vunpack.c.l.b16 %v1341
    %v1725 = vunpack.c.h.b16 %v1341
    %v1726 = vunpack.c.l.b16 %v1342
    %v1727 = vunpack.c.h.b16 %v1342
    %v1728 = vunpack.c.l.b16 %v1343
    %v1729 = vunpack.c.h.b16 %v1343
    %v1730 = vunpack.c.l.b16 %v1344
    %v1731 = vunpack.c.h.b16 %v1344
    %v1732 = vunpack.c.l.b16 %v1345
    %v1733 = vunpack.c.h.b16 %v1345
    %v1734 = vunpack.c.l.b16 %v1346
    %v1735 = vunpack.c.h.b16 %v1346
    %v1736 = vunpack.c.l.b16 %v1347
    %v1737 = vunpack.c.h.b16 %v1347
    %v1738 = vunpack.c.l.b16 %v1348
    %v1739 = vunpack.c.h.b16 %v1348
    %v1740 = vunpack.c.l.b16 %v1349
    %v1741 = vunpack.c.h.b16 %v1349
    %v1742 = vunpack.c.l.b16 %v1350
    %v1743 = vunpack.c.h.b16 %v1350
    %v1744 = vunpack.c.l.b16 %v1351
    %v1745 = vunpack.c.h.b16 %v1351
    %v1746 = vunpack.c.l.b16 %v1352
    %v1747 = vunpack.c.h.b16 %v1352
    %v1748 = vunpack.c.l.b16 %v1353
    %v1749 = vunpack.c.h.b16 %v1353
    %v1750 = vunpack.c.l.b16 %v1354
    %v1751 = vunpack.c.h.b16 %v1354
    %v1752 = vunpack.c.l.b16 %v1355
    %v1753 = vunpack.c.h.b16 %v1355
    %v1754 = vunpack.c.l.b16 %v1356
    %v1755 = vunpack.c.h.b16 %v1356
    %v1756 = vunpack.c.l.b16 %v1357
    %v1757 = vunpack.c.h.b16 %v1357
    %v1758 = vunpack.c.l.b16 %v1358
    %v1759 = vunpack.c.h.b16 %v1358
    %v1760 = vunpack.c.l.b16 %v1359
    %v1761 = vunpack.c.h.b16 %v1359
    %v1762 = vunpack.c.l.b16 %v1360
    %v1763 = vunpack.c.h.b16 %v1360
    %v1764 = vunpack.c.l.b16 %v1361
    %v1765 = vunpack.c.h.b16 %v1361
    %v1766 = vunpack.c.l.b16 %v1362
    %v1767 = vunpack.c.h.b16 %v1362
    %v1768 = vunpack.c.l.b16 %v1363
    %v1769 = vunpack.c.h.b16 %v1363
    %v1770 = vunpack.c.l.b16 %v1364
    %v1771 = vunpack.c.h.b16 %v1364
    %v1772 = vunpack.c.l.b16 %v1365
    %v1773 = vunpack.c.h.b16 %v1365
    %v1774 = vunpack.c.l.b16 %v1366
    %v1775 = vunpack.c.h.b16 %v1366
    %v1776 = vunpack.c.l.b16 %v1367
    %v1777 = vunpack.c.h.b16 %v1367
    %v1778 = vunpack.c.l.b16 %v1368
    %v1779 = vunpack.c.h.b16 %v1368
    %v1780 = vunpack.c.l.b16 %v1369
    %v1781 = vunpack.c.h.b16 %v1369
    %v1782 = vunpack.c.l.b16 %v1370
    %v1783 = vunpack.c.h.b16 %v1370
    %v1784 = vunpack.c.l.b16 %v1371
    %v1785 = vunpack.c.h.b16 %v1371
    %v1786 = vunpack.c.l.b16 %v1372
    %v1787 = vunpack.c.h.b16 %v1372
    %v1788 = vunpack.c.l.b16 %v1373
    %v1789 = vunpack.c.h.b16 %v1373
    %v1790 = vunpack.c.l.b16 %v1374
    %v1791 = vunpack.c.h.b16 %v1374
    %v1792 = vunpack.c.l.b16 %v1375
    %v1793 = vunpack.c.h.b16 %v1375
    %v1794 = vunpack.c.l.b16 %v1376
    %v1795 = vunpack.c.h.b16 %v1376
    %v1796 = vunpack.c.l.b16 %v1377
    %v1797 = vunpack.c.h.b16 %v1377
    %v1798 = vunpack.c.l.b16 %v1378
    %v1799 = vunpack.c.h.b16 %v1378
    %v1800 = vunpack.c.l.b16 %v1379
    %v1801 = vunpack.c.h.b16 %v1379
    %v1802 = vunpack.c.l.b16 %v1380
    %v1803 = vunpack.c.h.b16 %v1380
    %v1804 = vunpack.c.l.b16 %v1381
    %v1805 = vunpack.c.h.b16 %v1381
    %v1806 = vunpack.c.l.b16 %v1382
    %v1807 = vunpack.c.h.b16 %v1382
    %v1808 = vunpack.c.l.b16 %v1383
    %v1809 = vunpack.c.h.b16 %v1383
    %v1810 = vunpack.c.l.b16 %v1384
    %v1811 = vunpack.c.h.b16 %v1384
    %v1812 = vunpack.c.l.b16 %v1385
    %v1813 = vunpack.c.h.b16 %v1385
    %v1814 = vunpack.c.l.b16 %v1386
    %v1815 = vunpack.c.h.b16 %v1386
    %v1816 = vunpack.c.l.b16 %v1387
    %v1817 = vunpack.c.h.b16 %v1387
    %v1818 = vunpack.c.l.b16 %v1388
    %v1819 = vunpack.c.h.b16 %v1388
    %v1820 = vunpack.c.l.b16 %v1389
    %v1821 = vunpack.c.h.b16 %v1389
    %v1822 = vunpack.c.l.b16 %v1390
    %v1823 = vunpack.c.h.b16 %v1390
    %v1824 = vunpack.c.l.b16 %v1391
    %v1825 = vunpack.c.h.b16 %v1391
    %v1826 = vunpack.c.l.b16 %v1392
    %v1827 = vunpack.c.h.b16 %v1392
    %v1828 = vpack.c.b16 %v1576, %v1572
    %v1829 = vpack.c.b16 %v1577, %v1573
    %v1830 = vpack.c.b16 %v1578, %v1574
    %v1831 = vpack.c.b16 %v1579, %v1575
    %v1832 = vpack.c.b16 %v1584, %v1580
    %v1833 = vpack.c.b16 %v1585, %v1581
    %v1834 = vpack.c.b16 %v1586, %v1582
    %v1835 = vpack.c.b16 %v1587, %v1583
    %v1836 = vpack.c.b16 %v1592, %v1588
    %v1837 = vpack.c.b16 %v1593, %v1589
    %v1838 = vpack.c.b16 %v1594, %v1590
    %v1839 = vpack.c.b16 %v1595, %v1591
    %v1840 = vpack.c.b16 %v1600, %v1596
    %v1841 = vpack.c.b16 %v1601, %v1597
    %v1842 = vpack.c.b16 %v1602, %v1598
    %v1843 = vpack.c.b16 %v1603, %v1599
    %v1844 = vpack.c.b16 %v1608, %v1604
    %v1845 = vpack.c.b16 %v1609, %v1605
    %v1846 = vpack.c.b16 %v1610, %v1606
    %v1847 = vpack.c.b16 %v1611, %v1607
    %v1848 = vpack.c.b16 %v1616, %v1612
    %v1849 = vpack.c.b16 %v1617, %v1613
    %v1850 = vpack.c.b16 %v1618, %v1614
    %v1851 = vpack.c.b16 %v1619, %v1615
    %v1852 = vpack.c.b16 %v1624, %v1620
    %v1853 = vpack.c.b16 %v1625, %v1621
    %v1854 = vpack.c.b16 %v1626, %v1622
    %v1855 = vpack.c.b16 %v1627, %v1623
    %v1856 = vpack.c.b16 %v1632, %v1628
    %v1857 = vpack.c.b16 %v1633, %v1629
    %v1858 = vpack.c.b16 %v1634, %v1630
    %v1859 = vpack.c.b16 %v1635, %v1631
    %v1860 = vpack.c.b16 %v1640, %v1636
    %v1861 = vpack.c.b16 %v1641, %v1637
    %v1862 = vpack.c.b16 %v1642, %v1638
    %v1863 = vpack.c.b16 %v1643, %v1639
    %v1864 = vpack.c.b16 %v1648, %v1644
    %v1865 = vpack.c.b16 %v1649, %v1645
    %v1866 = vpack.c.b16 %v1650, %v1646
    %v1867 = vpack.c.b16 %v1651, %v1647
    %v1868 = vpack.c.b16 %v1656, %v1652
    %v1869 = vpack.c.b16 %v1657, %v1653
    %v1870 = vpack.c.b16 %v1658, %v1654
    %v1871 = vpack.c.b16 %v1659, %v1655
    %v1872 = vpack.c.b16 %v1664, %v1660
    %v1873 = vpack.c.b16 %v1665, %v1661
    %v1874 = vpack.c.b16 %v1666, %v1662
    %v1875 = vpack.c.b16 %v1667, %v1663
    %v1876 = vpack.c.b16 %v1672, %v1668
    %v1877 = vpack.c.b16 %v1673, %v1669
    %v1878 = vpack.c.b16 %v1674, %v1670
    %v1879 = vpack.c.b16 %v1675, %v1671
    %v1880 = vpack.c.b16 %v1680, %v1676
    %v1881 = vpack.c.b16 %v1681, %v1677
    %v1882 = vpack.c.b16 %v1682, %v1678
    %v1883 = vpack.c.b16 %v1683, %v1679
    %v1884 = vpack.c.b16 %v1688, %v1684
    %v1885 = vpack.c.b16 %v1689, %v1685
    %v1886 = vpack.c.b16 %v1690, %v1686
    %v1887 = vpack.c.b16 %v1691, %v1687
    %v1888 = vpack.c.b16 %v1696, %v1692
    %v1889 = vpack.c.b16 %v1697, %v1693
    %v1890 = vpack.c.b16 %v1698, %v1694
    %v1891 = vpack.c.b16 %v1699, %v1695
    %v1892 = vpack.c.b16 %v1704, %v1700
    %v1893 = vpack.c.b16 %v1705, %v1701
    %v1894 = vpack.c.b16 %v1706, %v1702
    %v1895 = vpack.c.b16 %v1707, %v1703
    %v1896 = vpack.c.b16 %v1712, %v1708
    %v1897 = vpack.c.b16 %v1713, %v1709
    %v1898 = vpack.c.b16 %v1714, %v1710
    %v1899 = vpack.c.b16 %v1715, %v1711
    %v1900 = vpack.c.b16 %v1720, %v1716
    %v1901 = vpack.c.b16 %v1721, %v1717
    %v1902 = vpack.c.b16 %v1722, %v1718
    %v1903 = vpack.c.b16 %v1723, %v1719
    %v1904 = vpack.c.b16 %v1728, %v1724
    %v1905 = vpack.c.b16 %v1729, %v1725
    %v1906 = vpack.c.b16 %v1730, %v1726
    %v1907 = vpack.c.b16 %v1731, %v1727
    %v1908 = vpack.c.b16 %v1736, %v1732
    %v1909 = vpack.c.b16 %v1737, %v1733
    %v1910 = vpack.c.b16 %v1738, %v1734
    %v1911 = vpack.c.b16 %v1739, %v1735
    %v1912 = vpack.c.b16 %v1744, %v1740
    %v1913 = vpack.c.b16 %v1745, %v1741
    %v1914 = vpack.c.b16 %v1746, %v1742
    %v1915 = vpack.c.b16 %v1747, %v1743
    %v1916 = vpack.c.b16 %v1752, %v1748
    %v1917 = vpack.c.b16 %v1753, %v1749
    %v1918 = vpack.c.b16 %v1754, %v1750
    %v1919 = vpack.c.b16 %v1755, %v1751
    %v1920 = vpack.c.b16 %v1760, %v1756
    %v1921 = vpack.c.b16 %v1761, %v1757
    %v1922 = vpack.c.b16 %v1762, %v1758
    %v1923 = vpack.c.b16 %v1763, %v1759
    %v1924 = vpack.c.b16 %v1768, %v1764
    %v1925 = vpack.c.b16 %v1769, %v1765
    %v1926 = vpack.c.b16 %v1770, %v1766
    %v1927 = vpack.c.b16 %v1771, %v1767
    %v1928 = vpack.c.b16 %v1776, %v1772
    %v1929 = vpack.c.b16 %v1777, %v1773
    %v1930 = vpack.c.b16 %v1778, %v1774
    %v1931 = vpack.c.b16 %v1779, %v1775
    %v1932 = vpack.c.b16 %v1784, %v1780
    %v1933 = vpack.c.b16 %v1785, %v1781
    %v1934 = vpack.c.b16 %v1786, %v1782
    %v1935 = vpack.c.b16 %v1787, %v1783
    %v1936 = vpack.c.b16 %v1792, %v1788
    %v1937 = vpack.c.b16 %v1793, %v1789
    %v1938 = vpack.c.b16 %v1794, %v1790
    %v1939 = vpack.c.b16 %v1795, %v1791
    %v1940 = vpack.c.b16 %v1800, %v1796
    %v1941 = vpack.c.b16 %v1801, %v1797
    %v1942 = vpack.c.b16 %v1802, %v1798
    %v1943 = vpack.c.b16 %v1803, %v1799
    %v1944 = vpack.c.b16 %v1808, %v1804
    %v1945 = vpack.c.b16 %v1809, %v1805
    %v1946 = vpack.c.b16 %v1810, %v1806
    %v1947 = vpack.c.b16 %v1811, %v1807
    %v1948 = vpack.c.b16 %v1816, %v1812
    %v1949 = vpack.c.b16 %v1817, %v1813
    %v1950 = vpack.c.b16 %v1818, %v1814
    %v1951 = vpack.c.b16 %v1819, %v1815
    %v1952 = vpack.c.b16 %v1824, %v1820
    %v1953 = vpack.c.b16 %v1825, %v1821
    %v1954 = vpack.c.b16 %v1826, %v1822
    %v1955 = vpack.c.b16 %v1827, %v1823
    %2084 = vmatprep.subr.bf16.mxu0 %v1829
    %2085 = vmatpush1.bf16.msra.mxu0 %v1828
    %2086 = vmatprep.subr.bf16.mxu0 %v1833
    %2087 = vmatpush1.bf16.msra.mxu0 %v1832
    %2088 = vmatprep.subr.bf16.mxu0 %v1837
    %2089 = vmatpush1.bf16.msra.mxu0 %v1836
    %2090 = vmatprep.subr.bf16.mxu0 %v1841
    %2091 = vmatpush1.bf16.msra.mxu0 %v1840
    %2092 = vmatprep.subr.bf16.mxu0 %v1845
    %2093 = vmatpush1.bf16.msra.mxu0 %v1844
    %2094 = vmatprep.subr.bf16.mxu0 %v1849
    %2095 = vmatpush1.bf16.msra.mxu0 %v1848
    %2096 = vmatprep.subr.bf16.mxu0 %v1853
    %2097 = vmatpush1.bf16.msra.mxu0 %v1852
    %2098 = vmatprep.subr.bf16.mxu0 %v1857
    %2099 = vmatpush1.bf16.msra.mxu0 %v1856
    %2100 = vmatprep.subr.bf16.mxu0 %v1861
    %2101 = vmatpush1.bf16.msra.mxu0 %v1860
    %2102 = vmatprep.subr.bf16.mxu0 %v1865
    %2103 = vmatpush1.bf16.msra.mxu0 %v1864
    %2104 = vmatprep.subr.bf16.mxu0 %v1869
    %2105 = vmatpush1.bf16.msra.mxu0 %v1868
    %2106 = vmatprep.subr.bf16.mxu0 %v1873
    %2107 = vmatpush1.bf16.msra.mxu0 %v1872
    %2108 = vmatprep.subr.bf16.mxu0 %v1877
    %2109 = vmatpush1.bf16.msra.mxu0 %v1876
    %2110 = vmatprep.subr.bf16.mxu0 %v1881
    %2111 = vmatpush1.bf16.msra.mxu0 %v1880
    %2112 = vmatprep.subr.bf16.mxu0 %v1885
    %2113 = vmatpush1.bf16.msra.mxu0 %v1884
    %2114 = vmatprep.subr.bf16.mxu0 %v1889
    %2115 = vmatpush1.bf16.msra.mxu0 %v1888
    %2116 = vmatprep.mubr.bf16.mxu0 %v1437
    %2117 = vmatmul.mubr.bf16.gmra.mrb[0].mxu0 %v1436
    %v2118 = vpop.f32.mrb[0].mxu0
    %v2119 = vadd.f32 %v1398, %v2118
    %v2120 = vpop.f32.mrb[0].mxu0
    %v2121 = vadd.f32 %v1402, %v2120
    %v2122 = vpop.f32.mrb[0].mxu0
    %v2123 = vpop.f32.mrb[0].mxu0
    %2124 = vdwg.mxu0
    %2125 = vmatprep.subr.bf16.mxu0 %v1893
    %2126 = vmatpush1.bf16.msra.mxu0 %v1892
    %2127 = vmatprep.subr.bf16.mxu0 %v1897
    %2128 = vmatpush1.bf16.msra.mxu0 %v1896
    %2129 = vmatprep.subr.bf16.mxu0 %v1901
    %2130 = vmatpush1.bf16.msra.mxu0 %v1900
    %2131 = vmatprep.subr.bf16.mxu0 %v1905
    %2132 = vmatpush1.bf16.msra.mxu0 %v1904
    %2133 = vmatprep.subr.bf16.mxu0 %v1909
    %2134 = vmatpush1.bf16.msra.mxu0 %v1908
    %2135 = vmatprep.subr.bf16.mxu0 %v1913
    %2136 = vmatpush1.bf16.msra.mxu0 %v1912
    %2137 = vmatprep.subr.bf16.mxu0 %v1917
    %2138 = vmatpush1.bf16.msra.mxu0 %v1916
    %2139 = vmatprep.subr.bf16.mxu0 %v1921
    %2140 = vmatpush1.bf16.msra.mxu0 %v1920
    %2141 = vmatprep.subr.bf16.mxu0 %v1925
    %2142 = vmatpush1.bf16.msra.mxu0 %v1924
    %2143 = vmatprep.subr.bf16.mxu0 %v1929
    %2144 = vmatpush1.bf16.msra.mxu0 %v1928
    %2145 = vmatprep.subr.bf16.mxu0 %v1933
    %2146 = vmatpush1.bf16.msra.mxu0 %v1932
    %2147 = vmatprep.subr.bf16.mxu0 %v1937
    %2148 = vmatpush1.bf16.msra.mxu0 %v1936
    %2149 = vmatprep.subr.bf16.mxu0 %v1941
    %2150 = vmatpush1.bf16.msra.mxu0 %v1940
    %2151 = vmatprep.subr.bf16.mxu0 %v1945
    %2152 = vmatpush1.bf16.msra.mxu0 %v1944
    %2153 = vmatprep.subr.bf16.mxu0 %v1949
    %2154 = vmatpush1.bf16.msra.mxu0 %v1948
    %2155 = vmatprep.subr.bf16.mxu0 %v1953
    %2156 = vmatpush1.bf16.msra.mxu0 %v1952
    %2157 = vmatprep.mubr.bf16.mxu0 %v1439
    %2158 = vmatmul.mubr.bf16.gmra.mrb[0].mxu0 %v1438
    %v2159 = vpop.f32.mrb[0].mxu0
    %v2160 = vadd.f32 %v2119, %v2159
    %v2161 = vpop.f32.mrb[0].mxu0
    %v2162 = vadd.f32 %v2121, %v2161
    %v2163 = vpop.f32.mrb[0].mxu0
    %v2164 = vpop.f32.mrb[0].mxu0
    %2165 = vdwg.mxu0
    %2166 = vmatprep.subr.bf16.mxu0 %v1831
    %2167 = vmatpush1.bf16.msra.mxu0 %v1830
    %2168 = vmatprep.subr.bf16.mxu0 %v1835
    %2169 = vmatpush1.bf16.msra.mxu0 %v1834
    %2170 = vmatprep.subr.bf16.mxu0 %v1839
    %2171 = vmatpush1.bf16.msra.mxu0 %v1838
    %2172 = vmatprep.subr.bf16.mxu0 %v1843
    %2173 = vmatpush1.bf16.msra.mxu0 %v1842
    %2174 = vmatprep.subr.bf16.mxu0 %v1847
    %2175 = vmatpush1.bf16.msra.mxu0 %v1846
    %2176 = vmatprep.subr.bf16.mxu0 %v1851
    %2177 = vmatpush1.bf16.msra.mxu0 %v1850
    %2178 = vmatprep.subr.bf16.mxu0 %v1855
    %2179 = vmatpush1.bf16.msra.mxu0 %v1854
    %2180 = vmatprep.subr.bf16.mxu0 %v1859
    %2181 = vmatpush1.bf16.msra.mxu0 %v1858
    %2182 = vmatprep.subr.bf16.mxu0 %v1863
    %2183 = vmatpush1.bf16.msra.mxu0 %v1862
    %2184 = vmatprep.subr.bf16.mxu0 %v1867
    %2185 = vmatpush1.bf16.msra.mxu0 %v1866
    %2186 = vmatprep.subr.bf16.mxu0 %v1871
    %2187 = vmatpush1.bf16.msra.mxu0 %v1870
    %2188 = vmatprep.subr.bf16.mxu0 %v1875
    %2189 = vmatpush1.bf16.msra.mxu0 %v1874
    %2190 = vmatprep.subr.bf16.mxu0 %v1879
    %2191 = vmatpush1.bf16.msra.mxu0 %v1878
    %2192 = vmatprep.subr.bf16.mxu0 %v1883
    %2193 = vmatpush1.bf16.msra.mxu0 %v1882
    %2194 = vmatprep.subr.bf16.mxu0 %v1887
    %2195 = vmatpush1.bf16.msra.mxu0 %v1886
    %2196 = vmatprep.subr.bf16.mxu0 %v1891
    %2197 = vmatpush1.bf16.msra.mxu0 %v1890
    %2198 = vmatprep.mubr.bf16.mxu0 %v1437
    %2199 = vmatmul.mubr.bf16.gmra.mrb[0].mxu0 %v1436
    %v2200 = vpop.f32.mrb[0].mxu0
    %v2201 = vadd.f32 %v1406, %v2200
    %v2202 = vpop.f32.mrb[0].mxu0
    %v2203 = vadd.f32 %v1410, %v2202
    %v2204 = vpop.f32.mrb[0].mxu0
    %v2205 = vpop.f32.mrb[0].mxu0
    %2206 = vdwg.mxu0
    %2207 = vmatprep.subr.bf16.mxu0 %v1895
    %2208 = vmatpush1.bf16.msra.mxu0 %v1894
    %2209 = vmatprep.subr.bf16.mxu0 %v1899
    %2210 = vmatpush1.bf16.msra.mxu0 %v1898
    %2211 = vmatprep.subr.bf16.mxu0 %v1903
    %2212 = vmatpush1.bf16.msra.mxu0 %v1902
    %2213 = vmatprep.subr.bf16.mxu0 %v1907
    %2214 = vmatpush1.bf16.msra.mxu0 %v1906
    %2215 = vmatprep.subr.bf16.mxu0 %v1911
    %2216 = vmatpush1.bf16.msra.mxu0 %v1910
    %2217 = vmatprep.subr.bf16.mxu0 %v1915
    %2218 = vmatpush1.bf16.msra.mxu0 %v1914
    %2219 = vmatprep.subr.bf16.mxu0 %v1919
    %2220 = vmatpush1.bf16.msra.mxu0 %v1918
    %2221 = vmatprep.subr.bf16.mxu0 %v1923
    %2222 = vmatpush1.bf16.msra.mxu0 %v1922
    %2223 = vmatprep.subr.bf16.mxu0 %v1927
    %2224 = vmatpush1.bf16.msra.mxu0 %v1926
    %2225 = vmatprep.subr.bf16.mxu0 %v1931
    %2226 = vmatpush1.bf16.msra.mxu0 %v1930
    %2227 = vmatprep.subr.bf16.mxu0 %v1935
    %2228 = vmatpush1.bf16.msra.mxu0 %v1934
    %2229 = vmatprep.subr.bf16.mxu0 %v1939
    %2230 = vmatpush1.bf16.msra.mxu0 %v1938
    %2231 = vmatprep.subr.bf16.mxu0 %v1943
    %2232 = vmatpush1.bf16.msra.mxu0 %v1942
    %2233 = vmatprep.subr.bf16.mxu0 %v1947
    %2234 = vmatpush1.bf16.msra.mxu0 %v1946
    %2235 = vmatprep.subr.bf16.mxu0 %v1951
    %2236 = vmatpush1.bf16.msra.mxu0 %v1950
    %2237 = vmatprep.subr.bf16.mxu0 %v1955
    %2238 = vmatpush1.bf16.msra.mxu0 %v1954
    %2239 = vmatprep.mubr.bf16.mxu0 %v1439
    %2240 = vmatmul.mubr.bf16.gmra.mrb[0].mxu0 %v1438
    %v2241 = vpop.f32.mrb[0].mxu0
    %v2242 = vadd.f32 %v2201, %v2241
    %v2243 = vpop.f32.mrb[0].mxu0
    %v2244 = vadd.f32 %v2203, %v2243
    %v2245 = vpop.f32.mrb[0].mxu0
    %v2246 = vpop.f32.mrb[0].mxu0
    %2247 = vdwg.mxu0
    %v2248 = vsub.f32 0.0, %v2160
    %v2249 = vsub.f32 0.0, %v2162
    %v2250 = vsub.f32 0.0, %v2242
    %v2251 = vsub.f32 0.0, %v2244
    %v2252 = vmul.f32 %v2248, 1.442695
    %v2253 = vpow.pop %v2252
    %v2254 = vmul.f32 %v2249, 1.442695
    %v2255 = vpow.pop %v2254
    %v2256 = vmul.f32 %v2250, 1.442695
    %v2257 = vpow.pop %v2256
    %v2258 = vmul.f32 %v2251, 1.442695
    %v2259 = vpow.pop %v2258
    %v2260 = vadd.f32 %v2253, 1.0
    %v2261 = vadd.f32 %v2255, 1.0
    %v2262 = vadd.f32 %v2257, 1.0
    %v2263 = vadd.f32 %v2259, 1.0
    %v2264 = vrcp.pop %v2260
    %v2265 = vrcp.pop %v2261
    %v2266 = vrcp.pop %v2262
    %v2267 = vrcp.pop %v2263
    %v2268 = vmax.f32 %v2160, 0.0
    %v2269 = vmax.f32 %v2162, 0.0
    %v2270 = vmax.f32 %v2242, 0.0
    %v2271 = vmax.f32 %v2244, 0.0
    %v2272 = vmul.f32 %v2264, %v2268
    %v2273 = vmul.f32 %v2265, %v2269
    %v2274 = vmul.f32 %v2266, %v2270
    %v2275 = vmul.f32 %v2267, %v2271
    %v2276 = vsub.f32 1.0, %v2264
    %v2277 = vsub.f32 1.0, %v2265
    %v2278 = vsub.f32 1.0, %v2266
    %v2279 = vsub.f32 1.0, %v2267
    %v2288 = vsel %vm1431, %v1253, %v1249
    %v2289 = vsel %vm1431, %v1254, %v1250
    %v2290 = vsel %vm1431, %v1255, %v1251
    %v2291 = vsel %vm1431, %v1256, %v1252
    %v2296 = vmul.f32 %v2276, %v2288
    %v2297 = vmul.f32 %v2277, %v2289
    %v2298 = vmul.f32 %v2278, %v2290
    %v2299 = vmul.f32 %v2279, %v2291
    %v2300 = vadd.f32 %v2272, %v2296
    %v2301 = vadd.f32 %v2273, %v2297
    %v2302 = vadd.f32 %v2274, %v2298
    %v2303 = vadd.f32 %v2275, %v2299
    %v2304 = vpack.c.bf16 %v2300, %v2300
    %v2305 = vpack.c.bf16 %v2301, %v2301
    %v2306 = vpack.c.bf16 %v2302, %v2302
    %v2307 = vpack.c.bf16 %v2303, %v2303
    %v2308 = vld [vmem:[#allocation10] sm:$0xf]
    %v2309 = vld [vmem:[#allocation10 + $0x4] sm:$0xf]
    %v2310 = vld [vmem:[#allocation10 + $0x8] sm:$0xf]
    %v2311 = vld [vmem:[#allocation10 + $0xc] sm:$0xf]
    %v2312 = vld [vmem:[#allocation10 + $0x10] sm:$0xf]
    %v2313 = vld [vmem:[#allocation10 + $0x14] sm:$0xf]
    %v2314 = vld [vmem:[#allocation10 + $0x18] sm:$0xf]
    %v2315 = vld [vmem:[#allocation10 + $0x1c] sm:$0xf]
    %v2316 = vld [vmem:[#allocation10 + $0x20] sm:$0xf]
    %v2317 = vld [vmem:[#allocation10 + $0x24] sm:$0xf]
    %v2318 = vld [vmem:[#allocation10 + $0x28] sm:$0xf]
    %v2319 = vld [vmem:[#allocation10 + $0x2c] sm:$0xf]
    %v2320 = vld [vmem:[#allocation10 + $0x30] sm:$0xf]
    %v2321 = vld [vmem:[#allocation10 + $0x34] sm:$0xf]
    %v2322 = vld [vmem:[#allocation10 + $0x38] sm:$0xf]
    %v2323 = vld [vmem:[#allocation10 + $0x3c] sm:$0xf]
    %v2324 = vld [vmem:[#allocation10 + $0x40] sm:$0xf]
    %v2325 = vld [vmem:[#allocation10 + $0x44] sm:$0xf]
    %v2326 = vld [vmem:[#allocation10 + $0x48] sm:$0xf]
    %v2327 = vld [vmem:[#allocation10 + $0x4c] sm:$0xf]
    %v2328 = vld [vmem:[#allocation10 + $0x50] sm:$0xf]
    %v2329 = vld [vmem:[#allocation10 + $0x54] sm:$0xf]
    %v2330 = vld [vmem:[#allocation10 + $0x58] sm:$0xf]
    %v2331 = vld [vmem:[#allocation10 + $0x5c] sm:$0xf]
    %v2332 = vld [vmem:[#allocation10 + $0x60] sm:$0xf]
    %v2333 = vld [vmem:[#allocation10 + $0x64] sm:$0xf]
    %v2334 = vld [vmem:[#allocation10 + $0x68] sm:$0xf]
    %v2335 = vld [vmem:[#allocation10 + $0x6c] sm:$0xf]
    %v2336 = vld [vmem:[#allocation10 + $0x70] sm:$0xf]
    %v2337 = vld [vmem:[#allocation10 + $0x74] sm:$0xf]
    %v2338 = vld [vmem:[#allocation10 + $0x78] sm:$0xf]
    %v2339 = vld [vmem:[#allocation10 + $0x7c] sm:$0xf]
    %v2340 = vld [vmem:[#allocation10 + $0x80] sm:$0xf]
    %v2341 = vld [vmem:[#allocation10 + $0x84] sm:$0xf]
    %v2342 = vld [vmem:[#allocation10 + $0x88] sm:$0xf]
    %v2343 = vld [vmem:[#allocation10 + $0x8c] sm:$0xf]
    %v2344 = vld [vmem:[#allocation10 + $0x90] sm:$0xf]
    %v2345 = vld [vmem:[#allocation10 + $0x94] sm:$0xf]
    %v2346 = vld [vmem:[#allocation10 + $0x98] sm:$0xf]
    %v2347 = vld [vmem:[#allocation10 + $0x9c] sm:$0xf]
    %v2348 = vld [vmem:[#allocation10 + $0xa0] sm:$0xf]
    %v2349 = vld [vmem:[#allocation10 + $0xa4] sm:$0xf]
    %v2350 = vld [vmem:[#allocation10 + $0xa8] sm:$0xf]
    %v2351 = vld [vmem:[#allocation10 + $0xac] sm:$0xf]
    %v2352 = vld [vmem:[#allocation10 + $0xb0] sm:$0xf]
    %v2353 = vld [vmem:[#allocation10 + $0xb4] sm:$0xf]
    %v2354 = vld [vmem:[#allocation10 + $0xb8] sm:$0xf]
    %v2355 = vld [vmem:[#allocation10 + $0xbc] sm:$0xf]
    %v2356 = vld [vmem:[#allocation10 + $0xc0] sm:$0xf]
    %v2357 = vld [vmem:[#allocation10 + $0xc4] sm:$0xf]
    %v2358 = vld [vmem:[#allocation10 + $0xc8] sm:$0xf]
    %v2359 = vld [vmem:[#allocation10 + $0xcc] sm:$0xf]
    %v2360 = vld [vmem:[#allocation10 + $0xd0] sm:$0xf]
    %v2361 = vld [vmem:[#allocation10 + $0xd4] sm:$0xf]
    %v2362 = vld [vmem:[#allocation10 + $0xd8] sm:$0xf]
    %v2363 = vld [vmem:[#allocation10 + $0xdc] sm:$0xf]
    %v2364 = vld [vmem:[#allocation10 + $0xe0] sm:$0xf]
    %v2365 = vld [vmem:[#allocation10 + $0xe4] sm:$0xf]
    %v2366 = vld [vmem:[#allocation10 + $0xe8] sm:$0xf]
    %v2367 = vld [vmem:[#allocation10 + $0xec] sm:$0xf]
    %v2368 = vld [vmem:[#allocation10 + $0xf0] sm:$0xf]
    %v2369 = vld [vmem:[#allocation10 + $0xf4] sm:$0xf]
    %v2370 = vld [vmem:[#allocation10 + $0xf8] sm:$0xf]
    %v2371 = vld [vmem:[#allocation10 + $0xfc] sm:$0xf]
    %v2372 = vld [vmem:[%s7] sm:$0x1]
    %v2374 = vlaneseq
    %v2375 = vshrl.u32 %v2374, 7
    %v2376 = vsub.s32 0, %v2375
    %v2377 = vrot.slane %v2372, %v2376
    %v2443 = vunpack.c.l.b16 %v2308
    %v2444 = vunpack.c.l.b16 %v2309
    %v2445 = vunpack.c.l.b16 %v2310
    %v2446 = vunpack.c.l.b16 %v2311
    %v2447 = vunpack.c.l.b16 %v2312
    %v2448 = vunpack.c.l.b16 %v2313
    %v2449 = vunpack.c.l.b16 %v2314
    %v2450 = vunpack.c.l.b16 %v2315
    %v2451 = vunpack.c.l.b16 %v2316
    %v2452 = vunpack.c.l.b16 %v2317
    %v2453 = vunpack.c.l.b16 %v2318
    %v2454 = vunpack.c.l.b16 %v2319
    %v2455 = vunpack.c.l.b16 %v2320
    %v2456 = vunpack.c.l.b16 %v2321
    %v2457 = vunpack.c.l.b16 %v2322
    %v2458 = vunpack.c.l.b16 %v2323
    %v2459 = vunpack.c.l.b16 %v2324
    %v2460 = vunpack.c.l.b16 %v2325
    %v2461 = vunpack.c.l.b16 %v2326
    %v2462 = vunpack.c.l.b16 %v2327
    %v2463 = vunpack.c.l.b16 %v2328
    %v2464 = vunpack.c.l.b16 %v2329
    %v2465 = vunpack.c.l.b16 %v2330
    %v2466 = vunpack.c.l.b16 %v2331
    %v2467 = vunpack.c.l.b16 %v2332
    %v2468 = vunpack.c.l.b16 %v2333
    %v2469 = vunpack.c.l.b16 %v2334
    %v2470 = vunpack.c.l.b16 %v2335
    %v2471 = vunpack.c.l.b16 %v2336
    %v2472 = vunpack.c.l.b16 %v2337
    %v2473 = vunpack.c.l.b16 %v2338
    %v2474 = vunpack.c.l.b16 %v2339
    %v2475 = vunpack.c.l.b16 %v2340
    %v2476 = vunpack.c.l.b16 %v2341
    %v2477 = vunpack.c.l.b16 %v2342
    %v2478 = vunpack.c.l.b16 %v2343
    %v2479 = vunpack.c.l.b16 %v2344
    %v2480 = vunpack.c.l.b16 %v2345
    %v2481 = vunpack.c.l.b16 %v2346
    %v2482 = vunpack.c.l.b16 %v2347
    %v2483 = vunpack.c.l.b16 %v2348
    %v2484 = vunpack.c.l.b16 %v2349
    %v2485 = vunpack.c.l.b16 %v2350
    %v2486 = vunpack.c.l.b16 %v2351
    %v2487 = vunpack.c.l.b16 %v2352
    %v2488 = vunpack.c.l.b16 %v2353
    %v2489 = vunpack.c.l.b16 %v2354
    %v2490 = vunpack.c.l.b16 %v2355
    %v2491 = vunpack.c.l.b16 %v2356
    %v2492 = vunpack.c.l.b16 %v2357
    %v2493 = vunpack.c.l.b16 %v2358
    %v2494 = vunpack.c.l.b16 %v2359
    %v2495 = vunpack.c.l.b16 %v2360
    %v2496 = vunpack.c.l.b16 %v2361
    %v2497 = vunpack.c.l.b16 %v2362
    %v2498 = vunpack.c.l.b16 %v2363
    %v2499 = vunpack.c.l.b16 %v2364
    %v2500 = vunpack.c.l.b16 %v2365
    %v2501 = vunpack.c.l.b16 %v2366
    %v2502 = vunpack.c.l.b16 %v2367
    %v2503 = vunpack.c.l.b16 %v2368
    %v2504 = vunpack.c.l.b16 %v2369
    %v2505 = vunpack.c.l.b16 %v2370
    %v2506 = vunpack.c.l.b16 %v2371
    %v2507 = vpack.c.b16 %v2444, %v2443
    %v2508 = vpack.c.b16 %v2446, %v2445
    %v2509 = vpack.c.b16 %v2448, %v2447
    %v2510 = vpack.c.b16 %v2450, %v2449
    %v2511 = vpack.c.b16 %v2452, %v2451
    %v2512 = vpack.c.b16 %v2454, %v2453
    %v2513 = vpack.c.b16 %v2456, %v2455
    %v2514 = vpack.c.b16 %v2458, %v2457
    %v2515 = vpack.c.b16 %v2460, %v2459
    %v2516 = vpack.c.b16 %v2462, %v2461
    %v2517 = vpack.c.b16 %v2464, %v2463
    %v2518 = vpack.c.b16 %v2466, %v2465
    %v2519 = vpack.c.b16 %v2468, %v2467
    %v2520 = vpack.c.b16 %v2470, %v2469
    %v2521 = vpack.c.b16 %v2472, %v2471
    %v2522 = vpack.c.b16 %v2474, %v2473
    %v2523 = vpack.c.b16 %v2476, %v2475
    %v2524 = vpack.c.b16 %v2478, %v2477
    %v2525 = vpack.c.b16 %v2480, %v2479
    %v2526 = vpack.c.b16 %v2482, %v2481
    %v2527 = vpack.c.b16 %v2484, %v2483
    %v2528 = vpack.c.b16 %v2486, %v2485
    %v2529 = vpack.c.b16 %v2488, %v2487
    %v2530 = vpack.c.b16 %v2490, %v2489
    %v2531 = vpack.c.b16 %v2492, %v2491
    %v2532 = vpack.c.b16 %v2494, %v2493
    %v2533 = vpack.c.b16 %v2496, %v2495
    %v2534 = vpack.c.b16 %v2498, %v2497
    %v2535 = vpack.c.b16 %v2500, %v2499
    %v2536 = vpack.c.b16 %v2502, %v2501
    %v2537 = vpack.c.b16 %v2504, %v2503
    %v2538 = vpack.c.b16 %v2506, %v2505
    %2571 = vmatprep.subr.bf16.mxu0 0
    %2572 = vmatpush1.bf16.msra.mxu0 %v2507
    %2573 = vmatprep.subr.bf16.mxu0 0
    %2574 = vmatpush1.bf16.msra.mxu0 %v2508
    %2575 = vmatprep.subr.bf16.mxu0 0
    %2576 = vmatpush1.bf16.msra.mxu0 %v2509
    %2577 = vmatprep.subr.bf16.mxu0 0
    %2578 = vmatpush1.bf16.msra.mxu0 %v2510
    %2579 = vmatprep.subr.bf16.mxu0 0
    %2580 = vmatpush1.bf16.msra.mxu0 %v2511
    %2581 = vmatprep.subr.bf16.mxu0 0
    %2582 = vmatpush1.bf16.msra.mxu0 %v2512
    %2583 = vmatprep.subr.bf16.mxu0 0
    %2584 = vmatpush1.bf16.msra.mxu0 %v2513
    %2585 = vmatprep.subr.bf16.mxu0 0
    %2586 = vmatpush1.bf16.msra.mxu0 %v2514
    %2587 = vmatprep.subr.bf16.mxu0 0
    %2588 = vmatpush1.bf16.msra.mxu0 %v2515
    %2589 = vmatprep.subr.bf16.mxu0 0
    %2590 = vmatpush1.bf16.msra.mxu0 %v2516
    %2591 = vmatprep.subr.bf16.mxu0 0
    %2592 = vmatpush1.bf16.msra.mxu0 %v2517
    %2593 = vmatprep.subr.bf16.mxu0 0
    %2594 = vmatpush1.bf16.msra.mxu0 %v2518
    %2595 = vmatprep.subr.bf16.mxu0 0
    %2596 = vmatpush1.bf16.msra.mxu0 %v2519
    %2597 = vmatprep.subr.bf16.mxu0 0
    %2598 = vmatpush1.bf16.msra.mxu0 %v2520
    %2599 = vmatprep.subr.bf16.mxu0 0
    %2600 = vmatpush1.bf16.msra.mxu0 %v2521
    %2601 = vmatprep.subr.bf16.mxu0 0
    %2602 = vmatpush1.bf16.msra.mxu0 %v2522
    %2603 = vmatprep.mubr.bf16.mxu0 %v2305
    %2604 = vmatmul.mubr.bf16.gmra.mrb[0].mxu0 %v2304
    %v2605 = vpop.f32.mrb[0].mxu0
    %v2606 = vadd.f32 %v2377, %v2605
    %v2607 = vpop.f32.mrb[0].mxu0
    %v2608 = vpop.f32.mrb[0].mxu0
    %v2609 = vpop.f32.mrb[0].mxu0
    %2610 = vdwg.mxu0
    %2611 = vmatprep.subr.bf16.mxu0 0
    %2612 = vmatpush1.bf16.msra.mxu0 %v2523
    %2613 = vmatprep.subr.bf16.mxu0 0
    %2614 = vmatpush1.bf16.msra.mxu0 %v2524
    %2615 = vmatprep.subr.bf16.mxu0 0
    %2616 = vmatpush1.bf16.msra.mxu0 %v2525
    %2617 = vmatprep.subr.bf16.mxu0 0
    %2618 = vmatpush1.bf16.msra.mxu0 %v2526
    %2619 = vmatprep.subr.bf16.mxu0 0
    %2620 = vmatpush1.bf16.msra.mxu0 %v2527
    %2621 = vmatprep.subr.bf16.mxu0 0
    %2622 = vmatpush1.bf16.msra.mxu0 %v2528
    %2623 = vmatprep.subr.bf16.mxu0 0
    %2624 = vmatpush1.bf16.msra.mxu0 %v2529
    %2625 = vmatprep.subr.bf16.mxu0 0
    %2626 = vmatpush1.bf16.msra.mxu0 %v2530
    %2627 = vmatprep.subr.bf16.mxu0 0
    %2628 = vmatpush1.bf16.msra.mxu0 %v2531
    %2629 = vmatprep.subr.bf16.mxu0 0
    %2630 = vmatpush1.bf16.msra.mxu0 %v2532
    %2631 = vmatprep.subr.bf16.mxu0 0
    %2632 = vmatpush1.bf16.msra.mxu0 %v2533
    %2633 = vmatprep.subr.bf16.mxu0 0
    %2634 = vmatpush1.bf16.msra.mxu0 %v2534
    %2635 = vmatprep.subr.bf16.mxu0 0
    %2636 = vmatpush1.bf16.msra.mxu0 %v2535
    %2637 = vmatprep.subr.bf16.mxu0 0
    %2638 = vmatpush1.bf16.msra.mxu0 %v2536
    %2639 = vmatprep.subr.bf16.mxu0 0
    %2640 = vmatpush1.bf16.msra.mxu0 %v2537
    %2641 = vmatprep.subr.bf16.mxu0 0
    %2642 = vmatpush1.bf16.msra.mxu0 %v2538
    %2643 = vmatprep.mubr.bf16.mxu0 %v2307
    %2644 = vmatmul.mubr.bf16.gmra.mrb[0].mxu0 %v2306
    %v2645 = vpop.f32.mrb[0].mxu0
    %v2646 = vadd.f32 %v2606, %v2645
    %v2647 = vpop.f32.mrb[0].mxu0
    %v2648 = vpop.f32.mrb[0].mxu0
    %v2649 = vpop.f32.mrb[0].mxu0
    %2650 = vdwg.mxu0
    %vm2651 = vcmask 1041408
    %v2652 = vsel %vm2651, %v2646, -inf
    %2653 = vmax.xlane.f32.xlu0 %v2652
    %v2654 = vpop.xlane.xlu0 %2653
    %v2655 = vsub.f32 %v2646, %v2654
    %v2656 = vmul.f32 %v2655, 1.442695
    %v2657 = vpow.pop %v2656
    %v2658 = vsel %vm2651, %v2657, 0.0
    %2659 = vadd.xlane.f32.xlu0 %v2658
    %v2660 = vpop.xlane.xlu0 %2659
    %v2661 = vlog2.pop %v2660
    %v2662 = vmul.f32 %v2661, 0.6931472
    %v2663 = vsub.f32 %v2655, %v2662
    %2664 = vst [vmem:[#allocation11] sm:$0x3] %v2663
    // Predicated region
    $region54: #{tpu_custom_call.1} parent=1 // pred_check
      _
    $region55: #{tpu_custom_call.1} parent=1 // pred_check_branch
      %2666 = sbr.rel (0) target = $region57
    $region56: #{tpu_custom_call.1} parent=1 // pred_region
      %s2668 = ssub.s32 32, 32
      %2669 = vsyncadd [#allocation4], %s2668
      %s2671 = sshll.u32 [#allocation11], 4
      %s2672 = int_to_ptr.vmem [resolvable:$true] %s2671
      %2674 = dma.vmem_to_hbm [thread:$0]  %s2672, 32, %s8, [#allocation4]
    $region57: #{tpu_custom_call.1} parent=1 // pred_fallthru
      _
    // Predicated region
    $region58: #{tpu_custom_call.1} parent=1 // pred_check
      _
    $region59: #{tpu_custom_call.1} parent=1 // pred_check_branch
      %2676 = sbr.rel (0) target = $region61
    $region60: #{tpu_custom_call.1} parent=1 // pred_region
      %2677 = dma.done [#allocation4], 32
    $region61: #{tpu_custom_call.1} parent=1 // pred_fallthru
      _
    %2678 = vsyncpa [#allocation3], 1
    %2679 = vsyncpa [#allocation6], 1
    %2680 = vsyncpa [#allocation9], 1
    %2681 = vsyncpa [#allocation4], 1

</llo_original>
